<compile_context>
chip_gen: v7x
topology: tpu7x:2x2x1
jax: 0.10.0
libtpu: 0.0.40
codegen_flags: <defaults>
</compile_context>

<pallas_src>
import functools

import jax
import jax.numpy as jnp
from jax import lax
from jax.experimental import pallas as pl
from jax.experimental.pallas import tpu as pltpu


# ----------------------------------------------------------------------------
# Pallas kernels
# ----------------------------------------------------------------------------

def conv_pool_kernel(p00_ref, p01_ref, p10_ref, p11_ref, w_ref, b_ref, o_ref):
    """Fused 5x5 conv (as matmul, BN folded into w) + bias + ReLU + 2x2 maxpool.

    p{dh}{dw}_ref: (B*Ho*Wo, 25*Cin) patch matrix for pool tap (dh, dw).
    Bias is tap-independent and max/(+bias)/ReLU commute, so we take the max of
    the four raw matmul results first, then add the folded bias and ReLU.
    """
    w = w_ref[...]
    y00 = jnp.dot(p00_ref[...], w, preferred_element_type=jnp.float32)
    y01 = jnp.dot(p01_ref[...], w, preferred_element_type=jnp.float32)
    y10 = jnp.dot(p10_ref[...], w, preferred_element_type=jnp.float32)
    y11 = jnp.dot(p11_ref[...], w, preferred_element_type=jnp.float32)
    y = jnp.maximum(jnp.maximum(y00, y01), jnp.maximum(y10, y11))
    o_ref[...] = jnp.maximum(y + b_ref[...], 0.0).astype(o_ref.dtype)


def lstm_head_kernel(*refs, seq_len, batch, hidden, num_layers):
    """All LSTM layers + all T steps + CNN fc + fused 2-layer MLP head.

    refs layout (inputs): x (T*B, F);  per layer: w_ih, w_hh, bias(1,4H);
    flat_cnn (B, 32*r*r), cnn_fc_w (row-permuted to NHWC order), cnn_fc_b,
    mlp_w1a, mlp_w1b, mlp_b1, mlp_w2, mlp_b2;  output: (B, 1).
    """
    H = hidden
    x_ref = refs[0]
    lyr = refs[1:1 + 3 * num_layers]
    (flat_ref, fcw_ref, fcb_ref, w1a_ref, w1b_ref,
     bm1_ref, w2_ref, b2_ref, o_ref) = refs[1 + 3 * num_layers:]

    def cell(gates, c_prev):
        # PyTorch gate order: i, f, g, o
        i_g = jax.nn.sigmoid(gates[:, 0 * H:1 * H])
        f_g = jax.nn.sigmoid(gates[:, 1 * H:2 * H])
        g_g = jnp.tanh(gates[:, 2 * H:3 * H])
        o_g = jax.nn.sigmoid(gates[:, 3 * H:4 * H])
        c_new = f_g * c_prev + i_g * g_g
        return o_g * jnp.tanh(c_new), c_new

    # Layer-0 input projection batched over all timesteps: (T*B, F) @ (F, 4H).
    xg_all = (jnp.dot(x_ref[...], lyr[0][...],
                      preferred_element_type=jnp.float32) + lyr[2][...])
    wih = [lyr[3 * l][...] if l > 0 else None for l in range(num_layers)]
    whh = [lyr[3 * l + 1][...] for l in range(num_layers)]
    bias = [lyr[3 * l + 2][...] for l in range(num_layers)]

    h = [jnp.zeros((batch, H), jnp.float32) for _ in range(num_layers)]
    c = [jnp.zeros((batch, H), jnp.float32) for _ in range(num_layers)]

    for t in range(seq_len):                      # T is small & static: unroll
        g = xg_all[t * batch:(t + 1) * batch, :] + jnp.dot(
            h[0], whh[0], preferred_element_type=jnp.float32)
        h[0], c[0] = cell(g, c[0])
        for l in range(1, num_layers):
            g = (jnp.dot(h[l - 1], wih[l], preferred_element_type=jnp.float32)
                 + jnp.dot(h[l], whh[l], preferred_element_type=jnp.float32)
                 + bias[l])
            h[l], c[l] = cell(g, c[l])

    # CNN fc on last-frame features, then fused MLP head
    # (concat(cnn_feat, last_h) @ W1 realized as split-weight sum).
    cnn_feat = (jnp.dot(flat_ref[...], fcw_ref[...],
                        preferred_element_type=jnp.float32) + fcb_ref[...])
    hid = jnp.maximum(
        jnp.dot(cnn_feat, w1a_ref[...], preferred_element_type=jnp.float32)
        + jnp.dot(h[num_layers - 1], w1b_ref[...],
                  preferred_element_type=jnp.float32)
        + bm1_ref[...], 0.0)
    out = jnp.dot(hid, w2_ref[...], preferred_element_type=jnp.float32) + b2_ref[...]
    o_ref[...] = out.astype(o_ref.dtype)


# ----------------------------------------------------------------------------
# JAX glue (last-frame-only CNN, per-tap im2col, weight packing)
# ----------------------------------------------------------------------------

_VMEM_LIMIT = 32 * 1024 * 1024


def conv_stage(x_nhwc, w_mat, bias):
    """5x5 'same' conv (BN folded into w_mat/bias) + ReLU + 2x2 maxpool.

    x_nhwc: (B, H, W, Cin) -> (B, H//2, W//2, Cout).
    """
    B, H, W, Cin = x_nhwc.shape
    Ho, Wo = H // 2, W // 2
    K = 25 * Cin
    cout = w_mat.shape[1]
    xp = jnp.pad(x_nhwc, ((0, 0), (2, 2), (2, 2), (0, 0)))

    # One patch matrix per 2x2 pool tap (dh, dw); rows ordered (b, ho, wo),
    # patch flatten order (kh, kw, cin) -- matches conv_weight_to_matrix.
    taps = []
    for dh in range(2):
        for dw in range(2):
            cols = []
            for kh in range(5):
                for kw in range(5):
                    cols.append(xp[:, dh + kh: dh + kh + 2 * Ho: 2,
                                   dw + kw: dw + kw + 2 * Wo: 2, :])
            pt = jnp.stack(cols, axis=3)            # (B, Ho, Wo, 25, Cin)
            taps.append(pt.reshape(B * Ho * Wo, K))

    out = pl.pallas_call(
        conv_pool_kernel,
        out_shape=jax.ShapeDtypeStruct((B * Ho * Wo, cout), jnp.float32),
        compiler_params=pltpu.CompilerParams(vmem_limit_bytes=_VMEM_LIMIT),
    )(taps[0], taps[1], taps[2], taps[3],
      w_mat.astype(jnp.float32), bias.reshape(1, cout).astype(jnp.float32))
    return out.reshape(B, Ho, Wo, cout)


def conv_weight_to_matrix(w):
    """PyTorch (C_out, C_in, 5, 5) -> (25*C_in, C_out) matching patch order."""
    c_in = w.shape[1]
    return jnp.transpose(w, (2, 3, 1, 0)).reshape(25 * c_in, w.shape[0])


def simple_cnn_flat_nhwc(p, x_nchw):
    """SimpleCNN conv stages on (N, 1, H, W); returns NHWC-order flatten.

    The cnn fc weight rows are permuted correspondingly (see forward), which
    avoids transposing activations back to NCHW order.
    """
    x = jnp.transpose(x_nchw, (0, 2, 3, 1))             # NCHW -> NHWC
    y = conv_stage(x, p["conv1_wm"], p["conv1_bias"])   # (N, H/2, W/2, 16)
    y = conv_stage(y, p["conv2_wm"], p["conv2_bias"])   # (N, H/4, W/4, 32)
    return y.reshape(x.shape[0], -1)                    # (N, (H/4)*(W/4)*32)


def cnnlstm_v3_forward(p, image_sequence, additional_features_sequence,
                       *, hidden_size, num_layers):
    B, T, C, H, W = image_sequence.shape
    cnn_output_size = p["cnn_fc_w"].shape[1]

    # Only cnn_features[:, -1, :] is consumed by the head -> CNN on last frame.
    flat_cnn = simple_cnn_flat_nhwc(p, image_sequence[:, -1])   # (B, r*r*32)

    # Permute cnn fc weight rows from NCHW-flatten order (PyTorch x.view) to
    # NHWC-flatten order so flat_cnn @ fc_w_nhwc == flat_nchw @ fc_w.
    flat_dim = p["cnn_fc_w"].shape[0]
    c2 = 32
    rr = flat_dim // c2
    fc_w_nhwc = p["cnn_fc_w"].reshape(c2, rr, cnn_output_size).transpose(
        1, 0, 2).reshape(flat_dim, cnn_output_size)

    # LSTM (all layers, all T) + CNN fc + MLP head fused in one kernel.
    x_tb = jnp.transpose(additional_features_sequence, (1, 0, 2)).reshape(
        T * B, additional_features_sequence.shape[-1])          # (T*B, F), t-major
    w1a = p["mlp_w1"][:cnn_output_size, :]
    w1b = p["mlp_w1"][cnn_output_size:, :]
    args = [x_tb]
    for l in range(num_layers):
        args += [p[f"lstm_wih_{l}"], p[f"lstm_whh_{l}"],
                 p[f"lstm_b_{l}"].reshape(1, 4 * hidden_size)]
    args += [flat_cnn, fc_w_nhwc, p["cnn_fc_b"].reshape(1, -1),
             w1a, w1b, p["mlp_b1"].reshape(1, -1),
             p["mlp_w2"], p["mlp_b2"].reshape(1, 1)]

    out = pl.pallas_call(
        functools.partial(lstm_head_kernel, seq_len=T, batch=B,
                          hidden=hidden_size, num_layers=num_layers),
        out_shape=jax.ShapeDtypeStruct((B, 1), jnp.float32),
        compiler_params=pltpu.CompilerParams(vmem_limit_bytes=_VMEM_LIMIT),
    )(*args)
    return out[:, 0]                                            # squeeze(1)


# ----------------------------------------------------------------------------
# Pure-JAX reference (for correctness validation only)
# ----------------------------------------------------------------------------

def reference_forward(p, image_sequence, feats, *, hidden_size, num_layers):
    B, T, C, H, W = image_sequence.shape
    hp = lax.Precision.HIGHEST

    def conv_stage_ref(x_nhwc, w_mat, bias):
        cin = x_nhwc.shape[-1]
        cout = w_mat.shape[1]
        w_hwio = w_mat.reshape(5, 5, cin, cout)
        y = lax.conv_general_dilated(
            x_nhwc, w_hwio, (1, 1), "SAME",
            dimension_numbers=("NHWC", "HWIO", "NHWC"), precision=hp) + bias
        y = jnp.maximum(y, 0.0)
        return lax.reduce_window(y, -jnp.inf, lax.max,
                                 (1, 2, 2, 1), (1, 2, 2, 1), "VALID")

    x = jnp.transpose(image_sequence[:, -1], (0, 2, 3, 1))
    y = conv_stage_ref(x, p["conv1_wm"], p["conv1_bias"])
    y = conv_stage_ref(y, p["conv2_wm"], p["conv2_bias"])
    flat = jnp.transpose(y, (0, 3, 1, 2)).reshape(B, -1)        # NCHW flatten
    cnn_feat = jnp.dot(flat, p["cnn_fc_w"], precision=hp) + p["cnn_fc_b"]

    Hh = hidden_size
    h = [jnp.zeros((B, Hh), jnp.float32) for _ in range(num_layers)]
    c = [jnp.zeros((B, Hh), jnp.float32) for _ in range(num_layers)]
    for t in range(T):
        inp = feats[:, t]
        for l in range(num_layers):
            g = (jnp.dot(inp, p[f"lstm_wih_{l}"], precision=hp)
                 + jnp.dot(h[l], p[f"lstm_whh_{l}"], precision=hp)
                 + p[f"lstm_b_{l}"])
            i_g = jax.nn.sigmoid(g[:, :Hh])
            f_g = jax.nn.sigmoid(g[:, Hh:2 * Hh])
            g_g = jnp.tanh(g[:, 2 * Hh:3 * Hh])
            o_g = jax.nn.sigmoid(g[:, 3 * Hh:])
            c[l] = f_g * c[l] + i_g * g_g
            h[l] = o_g * jnp.tanh(c[l])
            inp = h[l]

    comb = jnp.concatenate([cnn_feat, h[-1]], axis=1)
    hid = jnp.maximum(jnp.dot(comb, p["mlp_w1"], precision=hp) + p["mlp_b1"], 0.0)
    return (jnp.dot(hid, p["mlp_w2"], precision=hp) + p["mlp_b2"])[:, 0]


# ----------------------------------------------------------------------------
# Deterministic parameter initialization (shapes follow the PyTorch module)
# ----------------------------------------------------------------------------

def init_params(key, cnn_output_size, hidden_size, num_layers, num_features,
                image_size):
    reduced = image_size // 4
    eps = 1e-5
    keys = list(jax.random.split(key, 32))
    ki = iter(keys)

    def nrm(shape, scale=0.05):
        return scale * jax.random.normal(next(ki), shape, dtype=jnp.float32)

    p = {}

    # conv1 / bn1 (BN scale folded into the weight matrix columns)
    conv1_w = nrm((16, 1, 5, 5))
    conv1_b = nrm((16,))
    g1 = 1.0 + nrm((16,))
    beta1 = nrm((16,))
    mean1 = nrm((16,))
    var1 = 1.0 + 0.1 * jnp.abs(nrm((16,)))
    s1 = g1 / jnp.sqrt(var1 + eps)
    p["conv1_wm"] = conv_weight_to_matrix(conv1_w) * s1[None, :]
    p["conv1_bias"] = (conv1_b - mean1) * s1 + beta1

    # conv2 / bn2
    conv2_w = nrm((32, 16, 5, 5))
    conv2_b = nrm((32,))
    g2 = 1.0 + nrm((32,))
    beta2 = nrm((32,))
    mean2 = nrm((32,))
    var2 = 1.0 + 0.1 * jnp.abs(nrm((32,)))
    s2 = g2 / jnp.sqrt(var2 + eps)
    p["conv2_wm"] = conv_weight_to_matrix(conv2_w) * s2[None, :]
    p["conv2_bias"] = (conv2_b - mean2) * s2 + beta2

    # cnn fc (PyTorch NCHW-flatten row order; permuted in the forward wrapper)
    p["cnn_fc_w"] = nrm((32 * reduced * reduced, cnn_output_size))
    p["cnn_fc_b"] = nrm((cnn_output_size,))

    # LSTM layers (weights stored as (in, 4H), gate order i,f,g,o;
    # bias = b_ih + b_hh pre-summed)
    for l in range(num_layers):
        in_dim = num_features if l == 0 else hidden_size
        p[f"lstm_wih_{l}"] = nrm((in_dim, 4 * hidden_size))
        p[f"lstm_whh_{l}"] = nrm((hidden_size, 4 * hidden_size))
        p[f"lstm_b_{l}"] = nrm((4 * hidden_size,))

    # final MLP
    comb = cnn_output_size + hidden_size
    mid = comb // 2
    p["mlp_w1"] = nrm((comb, mid))
    p["mlp_b1"] = nrm((mid,))
    p["mlp_w2"] = nrm((mid, 1))
    p["mlp_b2"] = nrm((1,))
    return p


# ----------------------------------------------------------------------------
# Main
# ----------------------------------------------------------------------------

if __name__ == "__main__":
    B, T = 2, 4
    C, IMAGE_SIZE = 1, 16
    CNN_OUT, HIDDEN, NUM_LAYERS, NUM_FEATURES = 32, 32, 2, 8

    key = jax.random.PRNGKey(0)
    k_img, k_feat, k_param = jax.random.split(key, 3)

    image_sequence = jax.random.normal(
        k_img, (B, T, C, IMAGE_SIZE, IMAGE_SIZE), dtype=jnp.float32)
    additional_features = jax.random.normal(
        k_feat, (B, T, NUM_FEATURES), dtype=jnp.float32)

    params = init_params(k_param, CNN_OUT, HIDDEN, NUM_LAYERS, NUM_FEATURES,
                         IMAGE_SIZE)

    forward = jax.jit(functools.partial(cnnlstm_v3_forward,
                                        hidden_size=HIDDEN,
                                        num_layers=NUM_LAYERS))
    out = forward(params, image_sequence, additional_features)
    out = jax.block_until_ready(out)
    assert out.shape == (B,)

    ref = reference_forward(params, image_sequence, additional_features,
                            hidden_size=HIDDEN, num_layers=NUM_LAYERS)
    ref = jax.block_until_ready(ref)
    max_err = float(jnp.max(jnp.abs(out - ref)))
    assert max_err < 2e-2, f"kernel/reference mismatch: max_err={max_err}"

    print("KERNEL_OK")
</pallas_src>

<mosaic_0001>
module attributes {stable_mosaic.version = 11 : i64} {
  func.func @conv_pool_kernel(%arg0: memref<128x25xf32, #tpu.memory_space<vmem>>, %arg1: memref<128x25xf32, #tpu.memory_space<vmem>>, %arg2: memref<128x25xf32, #tpu.memory_space<vmem>>, %arg3: memref<128x25xf32, #tpu.memory_space<vmem>>, %arg4: memref<25x16xf32, #tpu.memory_space<vmem>>, %arg5: memref<1x16xf32, #tpu.memory_space<vmem>>, %arg6: memref<128x16xf32, #tpu.memory_space<vmem>>) attributes {dimension_semantics = [], scalar_prefetch = 0 : i64, scratch_operands = 0 : i64, tpu.core_type = #tpu.core_type<tc>} {
    %c0 = arith.constant 0 : index
    %c0_0 = arith.constant 0 : index
    %0 = vector.load %arg4[%c0, %c0_0] : memref<25x16xf32, #tpu.memory_space<vmem>>, vector<25x16xf32>
    %c0_1 = arith.constant 0 : index
    %c0_2 = arith.constant 0 : index
    %1 = vector.load %arg0[%c0_1, %c0_2] : memref<128x25xf32, #tpu.memory_space<vmem>>, vector<128x25xf32>
    %cst = arith.constant dense<0.000000e+00> : vector<128x16xf32>
    %2 = tpu.matmul %1, %0, %cst {dimension_numbers = #tpu.dot_dimension_numbers<[1], [0], [0], [1], [0, 0, 1, 1], [], []>} : vector<128x25xf32>, vector<25x16xf32>, vector<128x16xf32> -> vector<128x16xf32>
    %c0_3 = arith.constant 0 : index
    %c0_4 = arith.constant 0 : index
    %3 = vector.load %arg1[%c0_3, %c0_4] : memref<128x25xf32, #tpu.memory_space<vmem>>, vector<128x25xf32>
    %cst_5 = arith.constant dense<0.000000e+00> : vector<128x16xf32>
    %4 = tpu.matmul %3, %0, %cst_5 {dimension_numbers = #tpu.dot_dimension_numbers<[1], [0], [0], [1], [0, 0, 1, 1], [], []>} : vector<128x25xf32>, vector<25x16xf32>, vector<128x16xf32> -> vector<128x16xf32>
    %c0_6 = arith.constant 0 : index
    %c0_7 = arith.constant 0 : index
    %5 = vector.load %arg2[%c0_6, %c0_7] : memref<128x25xf32, #tpu.memory_space<vmem>>, vector<128x25xf32>
    %cst_8 = arith.constant dense<0.000000e+00> : vector<128x16xf32>
    %6 = tpu.matmul %5, %0, %cst_8 {dimension_numbers = #tpu.dot_dimension_numbers<[1], [0], [0], [1], [0, 0, 1, 1], [], []>} : vector<128x25xf32>, vector<25x16xf32>, vector<128x16xf32> -> vector<128x16xf32>
    %c0_9 = arith.constant 0 : index
    %c0_10 = arith.constant 0 : index
    %7 = vector.load %arg3[%c0_9, %c0_10] : memref<128x25xf32, #tpu.memory_space<vmem>>, vector<128x25xf32>
    %cst_11 = arith.constant dense<0.000000e+00> : vector<128x16xf32>
    %8 = tpu.matmul %7, %0, %cst_11 {dimension_numbers = #tpu.dot_dimension_numbers<[1], [0], [0], [1], [0, 0, 1, 1], [], []>} : vector<128x25xf32>, vector<25x16xf32>, vector<128x16xf32> -> vector<128x16xf32>
    %9 = arith.maximumf %2, %4 : vector<128x16xf32>
    %10 = arith.maximumf %6, %8 : vector<128x16xf32>
    %11 = arith.maximumf %9, %10 : vector<128x16xf32>
    %c0_12 = arith.constant 0 : index
    %c0_13 = arith.constant 0 : index
    %12 = vector.load %arg5[%c0_12, %c0_13] : memref<1x16xf32, #tpu.memory_space<vmem>>, vector<1x16xf32>
    %13 = vector.broadcast %12 : vector<1x16xf32> to vector<128x16xf32>
    %14 = arith.addf %11, %13 : vector<128x16xf32>
    %cst_14 = arith.constant 0.000000e+00 : f32
    %15 = vector.broadcast %cst_14 : f32 to vector<128x16xf32>
    %16 = arith.maximumf %14, %15 : vector<128x16xf32>
    %c0_15 = arith.constant 0 : index
    %c0_16 = arith.constant 0 : index
    %17 = vector.load %arg6[%c0_15, %c0_16] : memref<128x16xf32, #tpu.memory_space<vmem>>, vector<128x16xf32>
    tpu.vector_store %arg6[%c0_15, %c0_16], %16 {strides = array<i32>} : memref<128x16xf32, #tpu.memory_space<vmem>>, vector<128x16xf32>,
    return
  }
}

module attributes {stable_mosaic.version = 11 : i64} {
  func.func @conv_pool_kernel(%arg0: memref<32x400xf32, #tpu.memory_space<vmem>>, %arg1: memref<32x400xf32, #tpu.memory_space<vmem>>, %arg2: memref<32x400xf32, #tpu.memory_space<vmem>>, %arg3: memref<32x400xf32, #tpu.memory_space<vmem>>, %arg4: memref<400x32xf32, #tpu.memory_space<vmem>>, %arg5: memref<1x32xf32, #tpu.memory_space<vmem>>, %arg6: memref<32x32xf32, #tpu.memory_space<vmem>>) attributes {dimension_semantics = [], scalar_prefetch = 0 : i64, scratch_operands = 0 : i64, tpu.core_type = #tpu.core_type<tc>} {
    %c0 = arith.constant 0 : index
    %c0_0 = arith.constant 0 : index
    %0 = vector.load %arg4[%c0, %c0_0] : memref<400x32xf32, #tpu.memory_space<vmem>>, vector<400x32xf32>
    %c0_1 = arith.constant 0 : index
    %c0_2 = arith.constant 0 : index
    %1 = vector.load %arg0[%c0_1, %c0_2] : memref<32x400xf32, #tpu.memory_space<vmem>>, vector<32x400xf32>
    %cst = arith.constant dense<0.000000e+00> : vector<32x32xf32>
    %2 = tpu.matmul %1, %0, %cst {dimension_numbers = #tpu.dot_dimension_numbers<[1], [0], [0], [1], [0, 0, 1, 1], [], []>} : vector<32x400xf32>, vector<400x32xf32>, vector<32x32xf32> -> vector<32x32xf32>
    %c0_3 = arith.constant 0 : index
    %c0_4 = arith.constant 0 : index
    %3 = vector.load %arg1[%c0_3, %c0_4] : memref<32x400xf32, #tpu.memory_space<vmem>>, vector<32x400xf32>
    %cst_5 = arith.constant dense<0.000000e+00> : vector<32x32xf32>
    %4 = tpu.matmul %3, %0, %cst_5 {dimension_numbers = #tpu.dot_dimension_numbers<[1], [0], [0], [1], [0, 0, 1, 1], [], []>} : vector<32x400xf32>, vector<400x32xf32>, vector<32x32xf32> -> vector<32x32xf32>
    %c0_6 = arith.constant 0 : index
    %c0_7 = arith.constant 0 : index
    %5 = vector.load %arg2[%c0_6, %c0_7] : memref<32x400xf32, #tpu.memory_space<vmem>>, vector<32x400xf32>
    %cst_8 = arith.constant dense<0.000000e+00> : vector<32x32xf32>
    %6 = tpu.matmul %5, %0, %cst_8 {dimension_numbers = #tpu.dot_dimension_numbers<[1], [0], [0], [1], [0, 0, 1, 1], [], []>} : vector<32x400xf32>, vector<400x32xf32>, vector<32x32xf32> -> vector<32x32xf32>
    %c0_9 = arith.constant 0 : index
    %c0_10 = arith.constant 0 : index
    %7 = vector.load %arg3[%c0_9, %c0_10] : memref<32x400xf32, #tpu.memory_space<vmem>>, vector<32x400xf32>
    %cst_11 = arith.constant dense<0.000000e+00> : vector<32x32xf32>
    %8 = tpu.matmul %7, %0, %cst_11 {dimension_numbers = #tpu.dot_dimension_numbers<[1], [0], [0], [1], [0, 0, 1, 1], [], []>} : vector<32x400xf32>, vector<400x32xf32>, vector<32x32xf32> -> vector<32x32xf32>
    %9 = arith.maximumf %2, %4 : vector<32x32xf32>
    %10 = arith.maximumf %6, %8 : vector<32x32xf32>
    %11 = arith.maximumf %9, %10 : vector<32x32xf32>
    %c0_12 = arith.constant 0 : index
    %c0_13 = arith.constant 0 : index
    %12 = vector.load %arg5[%c0_12, %c0_13] : memref<1x32xf32, #tpu.memory_space<vmem>>, vector<1x32xf32>
    %13 = vector.broadcast %12 : vector<1x32xf32> to vector<32x32xf32>
    %14 = arith.addf %11, %13 : vector<32x32xf32>
    %cst_14 = arith.constant 0.000000e+00 : f32
    %15 = vector.broadcast %cst_14 : f32 to vector<32x32xf32>
    %16 = arith.maximumf %14, %15 : vector<32x32xf32>
    %c0_15 = arith.constant 0 : index
    %c0_16 = arith.constant 0 : index
    %17 = vector.load %arg6[%c0_15, %c0_16] : memref<32x32xf32, #tpu.memory_space<vmem>>, vector<32x32xf32>
    tpu.vector_store %arg6[%c0_15, %c0_16], %16 {strides = array<i32>} : memref<32x32xf32, #tpu.memory_space<vmem>>, vector<32x32xf32>,
    return
  }
}

module attributes {stable_mosaic.version = 11 : i64} {
  func.func @lstm_head_kernel(%arg0: memref<8x8xf32, #tpu.memory_space<vmem>>, %arg1: memref<8x128xf32, #tpu.memory_space<vmem>>, %arg2: memref<32x128xf32, #tpu.memory_space<vmem>>, %arg3: memref<1x128xf32, #tpu.memory_space<vmem>>, %arg4: memref<32x128xf32, #tpu.memory_space<vmem>>, %arg5: memref<32x128xf32, #tpu.memory_space<vmem>>, %arg6: memref<1x128xf32, #tpu.memory_space<vmem>>, %arg7: memref<2x512xf32, #tpu.memory_space<vmem>>, %arg8: memref<512x32xf32, #tpu.memory_space<vmem>>, %arg9: memref<1x32xf32, #tpu.memory_space<vmem>>, %arg10: memref<32x32xf32, #tpu.memory_space<vmem>>, %arg11: memref<32x32xf32, #tpu.memory_space<vmem>>, %arg12: memref<1x32xf32, #tpu.memory_space<vmem>>, %arg13: memref<32x1xf32, #tpu.memory_space<vmem>>, %arg14: memref<1x1xf32, #tpu.memory_space<vmem>>, %arg15: memref<2x1xf32, #tpu.memory_space<vmem>>) attributes {dimension_semantics = [], scalar_prefetch = 0 : i64, scratch_operands = 0 : i64, tpu.core_type = #tpu.core_type<tc>} {
    %c0 = arith.constant 0 : index
    %c0_0 = arith.constant 0 : index
    %0 = vector.load %arg0[%c0, %c0_0] : memref<8x8xf32, #tpu.memory_space<vmem>>, vector<8x8xf32>
    %c0_1 = arith.constant 0 : index
    %c0_2 = arith.constant 0 : index
    %1 = vector.load %arg1[%c0_1, %c0_2] : memref<8x128xf32, #tpu.memory_space<vmem>>, vector<8x128xf32>
    %cst = arith.constant dense<0.000000e+00> : vector<8x128xf32>
    %2 = tpu.matmul %0, %1, %cst {dimension_numbers = #tpu.dot_dimension_numbers<[1], [0], [0], [1], [0, 0, 1, 1], [], []>} : vector<8x8xf32>, vector<8x128xf32>, vector<8x128xf32> -> vector<8x128xf32>
    %c0_3 = arith.constant 0 : index
    %c0_4 = arith.constant 0 : index
    %3 = vector.load %arg3[%c0_3, %c0_4] : memref<1x128xf32, #tpu.memory_space<vmem>>, vector<1x128xf32>
    %4 = vector.broadcast %3 : vector<1x128xf32> to vector<8x128xf32>
    %5 = arith.addf %2, %4 : vector<8x128xf32>
    %c0_5 = arith.constant 0 : index
    %c0_6 = arith.constant 0 : index
    %6 = vector.load %arg4[%c0_5, %c0_6] : memref<32x128xf32, #tpu.memory_space<vmem>>, vector<32x128xf32>
    %c0_7 = arith.constant 0 : index
    %c0_8 = arith.constant 0 : index
    %7 = vector.load %arg2[%c0_7, %c0_8] : memref<32x128xf32, #tpu.memory_space<vmem>>, vector<32x128xf32>
    %c0_9 = arith.constant 0 : index
    %c0_10 = arith.constant 0 : index
    %8 = vector.load %arg5[%c0_9, %c0_10] : memref<32x128xf32, #tpu.memory_space<vmem>>, vector<32x128xf32>
    %c0_11 = arith.constant 0 : index
    %c0_12 = arith.constant 0 : index
    %9 = vector.load %arg6[%c0_11, %c0_12] : memref<1x128xf32, #tpu.memory_space<vmem>>, vector<1x128xf32>
    %cst_13 = arith.constant 0.000000e+00 : f32
    %10 = vector.broadcast %cst_13 : f32 to vector<2x32xf32>
    %cst_14 = arith.constant 0.000000e+00 : f32
    %11 = vector.broadcast %cst_14 : f32 to vector<2x32xf32>
    %cst_15 = arith.constant 0.000000e+00 : f32
    %12 = vector.broadcast %cst_15 : f32 to vector<2x32xf32>
    %cst_16 = arith.constant 0.000000e+00 : f32
    %13 = vector.broadcast %cst_16 : f32 to vector<2x32xf32>
    %14 = vector.extract_strided_slice %5 {offsets = [0, 0], sizes = [2, 128], strides = [1, 1]} : vector<8x128xf32> to vector<2x128xf32>
    %cst_17 = arith.constant dense<0.000000e+00> : vector<2x128xf32>
    %15 = tpu.matmul %10, %7, %cst_17 {dimension_numbers = #tpu.dot_dimension_numbers<[1], [0], [0], [1], [0, 0, 1, 1], [], []>} : vector<2x32xf32>, vector<32x128xf32>, vector<2x128xf32> -> vector<2x128xf32>
    %16 = arith.addf %14, %15 : vector<2x128xf32>
    %17 = vector.extract_strided_slice %16 {offsets = [0, 0], sizes = [2, 32], strides = [1, 1]} : vector<2x128xf32> to vector<2x32xf32>
    %18 = arith.negf %17 : vector<2x32xf32>
    %19 = math.exp %18 : vector<2x32xf32>
    %cst_18 = arith.constant 1.000000e+00 : f32
    %20 = vector.broadcast %cst_18 : f32 to vector<2x32xf32>
    %21 = arith.addf %20, %19 : vector<2x32xf32>
    %22 = arith.divf %20, %21 : vector<2x32xf32>
    %23 = vector.extract_strided_slice %16 {offsets = [0, 32], sizes = [2, 32], strides = [1, 1]} : vector<2x128xf32> to vector<2x32xf32>
    %24 = arith.negf %23 : vector<2x32xf32>
    %25 = math.exp %24 : vector<2x32xf32>
    %cst_19 = arith.constant 1.000000e+00 : f32
    %26 = vector.broadcast %cst_19 : f32 to vector<2x32xf32>
    %27 = arith.addf %26, %25 : vector<2x32xf32>
    %28 = arith.divf %26, %27 : vector<2x32xf32>
    %29 = vector.extract_strided_slice %16 {offsets = [0, 64], sizes = [2, 32], strides = [1, 1]} : vector<2x128xf32> to vector<2x32xf32>
    %30 = math.tanh %29 : vector<2x32xf32>
    %31 = vector.extract_strided_slice %16 {offsets = [0, 96], sizes = [2, 32], strides = [1, 1]} : vector<2x128xf32> to vector<2x32xf32>
    %32 = arith.negf %31 : vector<2x32xf32>
    %33 = math.exp %32 : vector<2x32xf32>
    %cst_20 = arith.constant 1.000000e+00 : f32
    %34 = vector.broadcast %cst_20 : f32 to vector<2x32xf32>
    %35 = arith.addf %34, %33 : vector<2x32xf32>
    %36 = arith.divf %34, %35 : vector<2x32xf32>
    %37 = arith.mulf %28, %12 : vector<2x32xf32>
    %38 = arith.mulf %22, %30 : vector<2x32xf32>
    %39 = arith.addf %37, %38 : vector<2x32xf32>
    %40 = math.tanh %39 : vector<2x32xf32>
    %41 = arith.mulf %36, %40 : vector<2x32xf32>
    %cst_21 = arith.constant dense<0.000000e+00> : vector<2x128xf32>
    %42 = tpu.matmul %41, %6, %cst_21 {dimension_numbers = #tpu.dot_dimension_numbers<[1], [0], [0], [1], [0, 0, 1, 1], [], []>} : vector<2x32xf32>, vector<32x128xf32>, vector<2x128xf32> -> vector<2x128xf32>
    %cst_22 = arith.constant dense<0.000000e+00> : vector<2x128xf32>
    %43 = tpu.matmul %11, %8, %cst_22 {dimension_numbers = #tpu.dot_dimension_numbers<[1], [0], [0], [1], [0, 0, 1, 1], [], []>} : vector<2x32xf32>, vector<32x128xf32>, vector<2x128xf32> -> vector<2x128xf32>
    %44 = arith.addf %42, %43 : vector<2x128xf32>
    %45 = vector.broadcast %9 : vector<1x128xf32> to vector<2x128xf32>
    %46 = arith.addf %44, %45 : vector<2x128xf32>
    %47 = vector.extract_strided_slice %46 {offsets = [0, 0], sizes = [2, 32], strides = [1, 1]} : vector<2x128xf32> to vector<2x32xf32>
    %48 = arith.negf %47 : vector<2x32xf32>
    %49 = math.exp %48 : vector<2x32xf32>
    %cst_23 = arith.constant 1.000000e+00 : f32
    %50 = vector.broadcast %cst_23 : f32 to vector<2x32xf32>
    %51 = arith.addf %50, %49 : vector<2x32xf32>
    %52 = arith.divf %50, %51 : vector<2x32xf32>
    %53 = vector.extract_strided_slice %46 {offsets = [0, 32], sizes = [2, 32], strides = [1, 1]} : vector<2x128xf32> to vector<2x32xf32>
    %54 = arith.negf %53 : vector<2x32xf32>
    %55 = math.exp %54 : vector<2x32xf32>
    %cst_24 = arith.constant 1.000000e+00 : f32
    %56 = vector.broadcast %cst_24 : f32 to vector<2x32xf32>
    %57 = arith.addf %56, %55 : vector<2x32xf32>
    %58 = arith.divf %56, %57 : vector<2x32xf32>
    %59 = vector.extract_strided_slice %46 {offsets = [0, 64], sizes = [2, 32], strides = [1, 1]} : vector<2x128xf32> to vector<2x32xf32>
    %60 = math.tanh %59 : vector<2x32xf32>
    %61 = vector.extract_strided_slice %46 {offsets = [0, 96], sizes = [2, 32], strides = [1, 1]} : vector<2x128xf32> to vector<2x32xf32>
    %62 = arith.negf %61 : vector<2x32xf32>
    %63 = math.exp %62 : vector<2x32xf32>
    %cst_25 = arith.constant 1.000000e+00 : f32
    %64 = vector.broadcast %cst_25 : f32 to vector<2x32xf32>
    %65 = arith.addf %64, %63 : vector<2x32xf32>
    %66 = arith.divf %64, %65 : vector<2x32xf32>
    %67 = arith.mulf %58, %13 : vector<2x32xf32>
    %68 = arith.mulf %52, %60 : vector<2x32xf32>
    %69 = arith.addf %67, %68 : vector<2x32xf32>
    %70 = math.tanh %69 : vector<2x32xf32>
    %71 = arith.mulf %66, %70 : vector<2x32xf32>
    %72 = vector.extract_strided_slice %5 {offsets = [2, 0], sizes = [2, 128], strides = [1, 1]} : vector<8x128xf32> to vector<2x128xf32>
    %cst_26 = arith.constant dense<0.000000e+00> : vector<2x128xf32>
    %73 = tpu.matmul %41, %7, %cst_26 {dimension_numbers = #tpu.dot_dimension_numbers<[1], [0], [0], [1], [0, 0, 1, 1], [], []>} : vector<2x32xf32>, vector<32x128xf32>, vector<2x128xf32> -> vector<2x128xf32>
    %74 = arith.addf %72, %73 : vector<2x128xf32>
    %75 = vector.extract_strided_slice %74 {offsets = [0, 0], sizes = [2, 32], strides = [1, 1]} : vector<2x128xf32> to vector<2x32xf32>
    %76 = arith.negf %75 : vector<2x32xf32>
    %77 = math.exp %76 : vector<2x32xf32>
    %cst_27 = arith.constant 1.000000e+00 : f32
    %78 = vector.broadcast %cst_27 : f32 to vector<2x32xf32>
    %79 = arith.addf %78, %77 : vector<2x32xf32>
    %80 = arith.divf %78, %79 : vector<2x32xf32>
    %81 = vector.extract_strided_slice %74 {offsets = [0, 32], sizes = [2, 32], strides = [1, 1]} : vector<2x128xf32> to vector<2x32xf32>
    %82 = arith.negf %81 : vector<2x32xf32>
    %83 = math.exp %82 : vector<2x32xf32>
    %cst_28 = arith.constant 1.000000e+00 : f32
    %84 = vector.broadcast %cst_28 : f32 to vector<2x32xf32>
    %85 = arith.addf %84, %83 : vector<2x32xf32>
    %86 = arith.divf %84, %85 : vector<2x32xf32>
    %87 = vector.extract_strided_slice %74 {offsets = [0, 64], sizes = [2, 32], strides = [1, 1]} : vector<2x128xf32> to vector<2x32xf32>
    %88 = math.tanh %87 : vector<2x32xf32>
    %89 = vector.extract_strided_slice %74 {offsets = [0, 96], sizes = [2, 32], strides = [1, 1]} : vector<2x128xf32> to vector<2x32xf32>
    %90 = arith.negf %89 : vector<2x32xf32>
    %91 = math.exp %90 : vector<2x32xf32>
    %cst_29 = arith.constant 1.000000e+00 : f32
    %92 = vector.broadcast %cst_29 : f32 to vector<2x32xf32>
    %93 = arith.addf %92, %91 : vector<2x32xf32>
    %94 = arith.divf %92, %93 : vector<2x32xf32>
    %95 = arith.mulf %86, %39 : vector<2x32xf32>
    %96 = arith.mulf %80, %88 : vector<2x32xf32>
    %97 = arith.addf %95, %96 : vector<2x32xf32>
    %98 = math.tanh %97 : vector<2x32xf32>
    %99 = arith.mulf %94, %98 : vector<2x32xf32>
    %cst_30 = arith.constant dense<0.000000e+00> : vector<2x128xf32>
    %100 = tpu.matmul %99, %6, %cst_30 {dimension_numbers = #tpu.dot_dimension_numbers<[1], [0], [0], [1], [0, 0, 1, 1], [], []>} : vector<2x32xf32>, vector<32x128xf32>, vector<2x128xf32> -> vector<2x128xf32>
    %cst_31 = arith.constant dense<0.000000e+00> : vector<2x128xf32>
    %101 = tpu.matmul %71, %8, %cst_31 {dimension_numbers = #tpu.dot_dimension_numbers<[1], [0], [0], [1], [0, 0, 1, 1], [], []>} : vector<2x32xf32>, vector<32x128xf32>, vector<2x128xf32> -> vector<2x128xf32>
    %102 = arith.addf %100, %101 : vector<2x128xf32>
    %103 = vector.broadcast %9 : vector<1x128xf32> to vector<2x128xf32>
    %104 = arith.addf %102, %103 : vector<2x128xf32>
    %105 = vector.extract_strided_slice %104 {offsets = [0, 0], sizes = [2, 32], strides = [1, 1]} : vector<2x128xf32> to vector<2x32xf32>
    %106 = arith.negf %105 : vector<2x32xf32>
    %107 = math.exp %106 : vector<2x32xf32>
    %cst_32 = arith.constant 1.000000e+00 : f32
    %108 = vector.broadcast %cst_32 : f32 to vector<2x32xf32>
    %109 = arith.addf %108, %107 : vector<2x32xf32>
    %110 = arith.divf %108, %109 : vector<2x32xf32>
    %111 = vector.extract_strided_slice %104 {offsets = [0, 32], sizes = [2, 32], strides = [1, 1]} : vector<2x128xf32> to vector<2x32xf32>
    %112 = arith.negf %111 : vector<2x32xf32>
    %113 = math.exp %112 : vector<2x32xf32>
    %cst_33 = arith.constant 1.000000e+00 : f32
    %114 = vector.broadcast %cst_33 : f32 to vector<2x32xf32>
    %115 = arith.addf %114, %113 : vector<2x32xf32>
    %116 = arith.divf %114, %115 : vector<2x32xf32>
    %117 = vector.extract_strided_slice %104 {offsets = [0, 64], sizes = [2, 32], strides = [1, 1]} : vector<2x128xf32> to vector<2x32xf32>
    %118 = math.tanh %117 : vector<2x32xf32>
    %119 = vector.extract_strided_slice %104 {offsets = [0, 96], sizes = [2, 32], strides = [1, 1]} : vector<2x128xf32> to vector<2x32xf32>
    %120 = arith.negf %119 : vector<2x32xf32>
    %121 = math.exp %120 : vector<2x32xf32>
    %cst_34 = arith.constant 1.000000e+00 : f32
    %122 = vector.broadcast %cst_34 : f32 to vector<2x32xf32>
    %123 = arith.addf %122, %121 : vector<2x32xf32>
    %124 = arith.divf %122, %123 : vector<2x32xf32>
    %125 = arith.mulf %116, %69 : vector<2x32xf32>
    %126 = arith.mulf %110, %118 : vector<2x32xf32>
    %127 = arith.addf %125, %126 : vector<2x32xf32>
    %128 = math.tanh %127 : vector<2x32xf32>
    %129 = arith.mulf %124, %128 : vector<2x32xf32>
    %130 = vector.extract_strided_slice %5 {offsets = [4, 0], sizes = [2, 128], strides = [1, 1]} : vector<8x128xf32> to vector<2x128xf32>
    %cst_35 = arith.constant dense<0.000000e+00> : vector<2x128xf32>
    %131 = tpu.matmul %99, %7, %cst_35 {dimension_numbers = #tpu.dot_dimension_numbers<[1], [0], [0], [1], [0, 0, 1, 1], [], []>} : vector<2x32xf32>, vector<32x128xf32>, vector<2x128xf32> -> vector<2x128xf32>
    %132 = arith.addf %130, %131 : vector<2x128xf32>
    %133 = vector.extract_strided_slice %132 {offsets = [0, 0], sizes = [2, 32], strides = [1, 1]} : vector<2x128xf32> to vector<2x32xf32>
    %134 = arith.negf %133 : vector<2x32xf32>
    %135 = math.exp %134 : vector<2x32xf32>
    %cst_36 = arith.constant 1.000000e+00 : f32
    %136 = vector.broadcast %cst_36 : f32 to vector<2x32xf32>
    %137 = arith.addf %136, %135 : vector<2x32xf32>
    %138 = arith.divf %136, %137 : vector<2x32xf32>
    %139 = vector.extract_strided_slice %132 {offsets = [0, 32], sizes = [2, 32], strides = [1, 1]} : vector<2x128xf32> to vector<2x32xf32>
    %140 = arith.negf %139 : vector<2x32xf32>
    %141 = math.exp %140 : vector<2x32xf32>
    %cst_37 = arith.constant 1.000000e+00 : f32
    %142 = vector.broadcast %cst_37 : f32 to vector<2x32xf32>
    %143 = arith.addf %142, %141 : vector<2x32xf32>
    %144 = arith.divf %142, %143 : vector<2x32xf32>
    %145 = vector.extract_strided_slice %132 {offsets = [0, 64], sizes = [2, 32], strides = [1, 1]} : vector<2x128xf32> to vector<2x32xf32>
    %146 = math.tanh %145 : vector<2x32xf32>
    %147 = vector.extract_strided_slice %132 {offsets = [0, 96], sizes = [2, 32], strides = [1, 1]} : vector<2x128xf32> to vector<2x32xf32>
    %148 = arith.negf %147 : vector<2x32xf32>
    %149 = math.exp %148 : vector<2x32xf32>
    %cst_38 = arith.constant 1.000000e+00 : f32
    %150 = vector.broadcast %cst_38 : f32 to vector<2x32xf32>
    %151 = arith.addf %150, %149 : vector<2x32xf32>
    %152 = arith.divf %150, %151 : vector<2x32xf32>
    %153 = arith.mulf %144, %97 : vector<2x32xf32>
    %154 = arith.mulf %138, %146 : vector<2x32xf32>
    %155 = arith.addf %153, %154 : vector<2x32xf32>
    %156 = math.tanh %155 : vector<2x32xf32>
    %157 = arith.mulf %152, %156 : vector<2x32xf32>
    %cst_39 = arith.constant dense<0.000000e+00> : vector<2x128xf32>
    %158 = tpu.matmul %157, %6, %cst_39 {dimension_numbers = #tpu.dot_dimension_numbers<[1], [0], [0], [1], [0, 0, 1, 1], [], []>} : vector<2x32xf32>, vector<32x128xf32>, vector<2x128xf32> -> vector<2x128xf32>
    %cst_40 = arith.constant dense<0.000000e+00> : vector<2x128xf32>
    %159 = tpu.matmul %129, %8, %cst_40 {dimension_numbers = #tpu.dot_dimension_numbers<[1], [0], [0], [1], [0, 0, 1, 1], [], []>} : vector<2x32xf32>, vector<32x128xf32>, vector<2x128xf32> -> vector<2x128xf32>
    %160 = arith.addf %158, %159 : vector<2x128xf32>
    %161 = vector.broadcast %9 : vector<1x128xf32> to vector<2x128xf32>
    %162 = arith.addf %160, %161 : vector<2x128xf32>
    %163 = vector.extract_strided_slice %162 {offsets = [0, 0], sizes = [2, 32], strides = [1, 1]} : vector<2x128xf32> to vector<2x32xf32>
    %164 = arith.negf %163 : vector<2x32xf32>
    %165 = math.exp %164 : vector<2x32xf32>
    %cst_41 = arith.constant 1.000000e+00 : f32
    %166 = vector.broadcast %cst_41 : f32 to vector<2x32xf32>
    %167 = arith.addf %166, %165 : vector<2x32xf32>
    %168 = arith.divf %166, %167 : vector<2x32xf32>
    %169 = vector.extract_strided_slice %162 {offsets = [0, 32], sizes = [2, 32], strides = [1, 1]} : vector<2x128xf32> to vector<2x32xf32>
    %170 = arith.negf %169 : vector<2x32xf32>
    %171 = math.exp %170 : vector<2x32xf32>
    %cst_42 = arith.constant 1.000000e+00 : f32
    %172 = vector.broadcast %cst_42 : f32 to vector<2x32xf32>
    %173 = arith.addf %172, %171 : vector<2x32xf32>
    %174 = arith.divf %172, %173 : vector<2x32xf32>
    %175 = vector.extract_strided_slice %162 {offsets = [0, 64], sizes = [2, 32], strides = [1, 1]} : vector<2x128xf32> to vector<2x32xf32>
    %176 = math.tanh %175 : vector<2x32xf32>
    %177 = vector.extract_strided_slice %162 {offsets = [0, 96], sizes = [2, 32], strides = [1, 1]} : vector<2x128xf32> to vector<2x32xf32>
    %178 = arith.negf %177 : vector<2x32xf32>
    %179 = math.exp %178 : vector<2x32xf32>
    %cst_43 = arith.constant 1.000000e+00 : f32
    %180 = vector.broadcast %cst_43 : f32 to vector<2x32xf32>
    %181 = arith.addf %180, %179 : vector<2x32xf32>
    %182 = arith.divf %180, %181 : vector<2x32xf32>
    %183 = arith.mulf %174, %127 : vector<2x32xf32>
    %184 = arith.mulf %168, %176 : vector<2x32xf32>
    %185 = arith.addf %183, %184 : vector<2x32xf32>
    %186 = math.tanh %185 : vector<2x32xf32>
    %187 = arith.mulf %182, %186 : vector<2x32xf32>
    %188 = vector.extract_strided_slice %5 {offsets = [6, 0], sizes = [2, 128], strides = [1, 1]} : vector<8x128xf32> to vector<2x128xf32>
    %cst_44 = arith.constant dense<0.000000e+00> : vector<2x128xf32>
    %189 = tpu.matmul %157, %7, %cst_44 {dimension_numbers = #tpu.dot_dimension_numbers<[1], [0], [0], [1], [0, 0, 1, 1], [], []>} : vector<2x32xf32>, vector<32x128xf32>, vector<2x128xf32> -> vector<2x128xf32>
    %190 = arith.addf %188, %189 : vector<2x128xf32>
    %191 = vector.extract_strided_slice %190 {offsets = [0, 0], sizes = [2, 32], strides = [1, 1]} : vector<2x128xf32> to vector<2x32xf32>
    %192 = arith.negf %191 : vector<2x32xf32>
    %193 = math.exp %192 : vector<2x32xf32>
    %cst_45 = arith.constant 1.000000e+00 : f32
    %194 = vector.broadcast %cst_45 : f32 to vector<2x32xf32>
    %195 = arith.addf %194, %193 : vector<2x32xf32>
    %196 = arith.divf %194, %195 : vector<2x32xf32>
    %197 = vector.extract_strided_slice %190 {offsets = [0, 32], sizes = [2, 32], strides = [1, 1]} : vector<2x128xf32> to vector<2x32xf32>
    %198 = arith.negf %197 : vector<2x32xf32>
    %199 = math.exp %198 : vector<2x32xf32>
    %cst_46 = arith.constant 1.000000e+00 : f32
    %200 = vector.broadcast %cst_46 : f32 to vector<2x32xf32>
    %201 = arith.addf %200, %199 : vector<2x32xf32>
    %202 = arith.divf %200, %201 : vector<2x32xf32>
    %203 = vector.extract_strided_slice %190 {offsets = [0, 64], sizes = [2, 32], strides = [1, 1]} : vector<2x128xf32> to vector<2x32xf32>
    %204 = math.tanh %203 : vector<2x32xf32>
    %205 = vector.extract_strided_slice %190 {offsets = [0, 96], sizes = [2, 32], strides = [1, 1]} : vector<2x128xf32> to vector<2x32xf32>
    %206 = arith.negf %205 : vector<2x32xf32>
    %207 = math.exp %206 : vector<2x32xf32>
    %cst_47 = arith.constant 1.000000e+00 : f32
    %208 = vector.broadcast %cst_47 : f32 to vector<2x32xf32>
    %209 = arith.addf %208, %207 : vector<2x32xf32>
    %210 = arith.divf %208, %209 : vector<2x32xf32>
    %211 = arith.mulf %202, %155 : vector<2x32xf32>
    %212 = arith.mulf %196, %204 : vector<2x32xf32>
    %213 = arith.addf %211, %212 : vector<2x32xf32>
    %214 = math.tanh %213 : vector<2x32xf32>
    %215 = arith.mulf %210, %214 : vector<2x32xf32>
    %cst_48 = arith.constant dense<0.000000e+00> : vector<2x128xf32>
    %216 = tpu.matmul %215, %6, %cst_48 {dimension_numbers = #tpu.dot_dimension_numbers<[1], [0], [0], [1], [0, 0, 1, 1], [], []>} : vector<2x32xf32>, vector<32x128xf32>, vector<2x128xf32> -> vector<2x128xf32>
    %cst_49 = arith.constant dense<0.000000e+00> : vector<2x128xf32>
    %217 = tpu.matmul %187, %8, %cst_49 {dimension_numbers = #tpu.dot_dimension_numbers<[1], [0], [0], [1], [0, 0, 1, 1], [], []>} : vector<2x32xf32>, vector<32x128xf32>, vector<2x128xf32> -> vector<2x128xf32>
    %218 = arith.addf %216, %217 : vector<2x128xf32>
    %219 = vector.broadcast %9 : vector<1x128xf32> to vector<2x128xf32>
    %220 = arith.addf %218, %219 : vector<2x128xf32>
    %221 = vector.extract_strided_slice %220 {offsets = [0, 0], sizes = [2, 32], strides = [1, 1]} : vector<2x128xf32> to vector<2x32xf32>
    %222 = arith.negf %221 : vector<2x32xf32>
    %223 = math.exp %222 : vector<2x32xf32>
    %cst_50 = arith.constant 1.000000e+00 : f32
    %224 = vector.broadcast %cst_50 : f32 to vector<2x32xf32>
    %225 = arith.addf %224, %223 : vector<2x32xf32>
    %226 = arith.divf %224, %225 : vector<2x32xf32>
    %227 = vector.extract_strided_slice %220 {offsets = [0, 32], sizes = [2, 32], strides = [1, 1]} : vector<2x128xf32> to vector<2x32xf32>
    %228 = arith.negf %227 : vector<2x32xf32>
    %229 = math.exp %228 : vector<2x32xf32>
    %cst_51 = arith.constant 1.000000e+00 : f32
    %230 = vector.broadcast %cst_51 : f32 to vector<2x32xf32>
    %231 = arith.addf %230, %229 : vector<2x32xf32>
    %232 = arith.divf %230, %231 : vector<2x32xf32>
    %233 = vector.extract_strided_slice %220 {offsets = [0, 64], sizes = [2, 32], strides = [1, 1]} : vector<2x128xf32> to vector<2x32xf32>
    %234 = math.tanh %233 : vector<2x32xf32>
    %235 = vector.extract_strided_slice %220 {offsets = [0, 96], sizes = [2, 32], strides = [1, 1]} : vector<2x128xf32> to vector<2x32xf32>
    %236 = arith.negf %235 : vector<2x32xf32>
    %237 = math.exp %236 : vector<2x32xf32>
    %cst_52 = arith.constant 1.000000e+00 : f32
    %238 = vector.broadcast %cst_52 : f32 to vector<2x32xf32>
    %239 = arith.addf %238, %237 : vector<2x32xf32>
    %240 = arith.divf %238, %239 : vector<2x32xf32>
    %241 = arith.mulf %232, %185 : vector<2x32xf32>
    %242 = arith.mulf %226, %234 : vector<2x32xf32>
    %243 = arith.addf %241, %242 : vector<2x32xf32>
    %244 = math.tanh %243 : vector<2x32xf32>
    %245 = arith.mulf %240, %244 : vector<2x32xf32>
    %c0_53 = arith.constant 0 : index
    %c0_54 = arith.constant 0 : index
    %246 = vector.load %arg7[%c0_53, %c0_54] : memref<2x512xf32, #tpu.memory_space<vmem>>, vector<2x512xf32>
    %c0_55 = arith.constant 0 : index
    %c0_56 = arith.constant 0 : index
    %247 = vector.load %arg8[%c0_55, %c0_56] : memref<512x32xf32, #tpu.memory_space<vmem>>, vector<512x32xf32>
    %cst_57 = arith.constant dense<0.000000e+00> : vector<2x32xf32>
    %248 = tpu.matmul %246, %247, %cst_57 {dimension_numbers = #tpu.dot_dimension_numbers<[1], [0], [0], [1], [0, 0, 1, 1], [], []>} : vector<2x512xf32>, vector<512x32xf32>, vector<2x32xf32> -> vector<2x32xf32>
    %c0_58 = arith.constant 0 : index
    %c0_59 = arith.constant 0 : index
    %249 = vector.load %arg9[%c0_58, %c0_59] : memref<1x32xf32, #tpu.memory_space<vmem>>, vector<1x32xf32>
    %250 = vector.broadcast %249 : vector<1x32xf32> to vector<2x32xf32>
    %251 = arith.addf %248, %250 : vector<2x32xf32>
    %c0_60 = arith.constant 0 : index
    %c0_61 = arith.constant 0 : index
    %252 = vector.load %arg10[%c0_60, %c0_61] : memref<32x32xf32, #tpu.memory_space<vmem>>, vector<32x32xf32>
    %cst_62 = arith.constant dense<0.000000e+00> : vector<2x32xf32>
    %253 = tpu.matmul %251, %252, %cst_62 {dimension_numbers = #tpu.dot_dimension_numbers<[1], [0], [0], [1], [0, 0, 1, 1], [], []>} : vector<2x32xf32>, vector<32x32xf32>, vector<2x32xf32> -> vector<2x32xf32>
    %c0_63 = arith.constant 0 : index
    %c0_64 = arith.constant 0 : index
    %254 = vector.load %arg11[%c0_63, %c0_64] : memref<32x32xf32, #tpu.memory_space<vmem>>, vector<32x32xf32>
    %cst_65 = arith.constant dense<0.000000e+00> : vector<2x32xf32>
    %255 = tpu.matmul %245, %254, %cst_65 {dimension_numbers = #tpu.dot_dimension_numbers<[1], [0], [0], [1], [0, 0, 1, 1], [], []>} : vector<2x32xf32>, vector<32x32xf32>, vector<2x32xf32> -> vector<2x32xf32>
    %256 = arith.addf %253, %255 : vector<2x32xf32>
    %c0_66 = arith.constant 0 : index
    %c0_67 = arith.constant 0 : index
    %257 = vector.load %arg12[%c0_66, %c0_67] : memref<1x32xf32, #tpu.memory_space<vmem>>, vector<1x32xf32>
    %258 = vector.broadcast %257 : vector<1x32xf32> to vector<2x32xf32>
    %259 = arith.addf %256, %258 : vector<2x32xf32>
    %cst_68 = arith.constant 0.000000e+00 : f32
    %260 = vector.broadcast %cst_68 : f32 to vector<2x32xf32>
    %261 = arith.maximumf %259, %260 : vector<2x32xf32>
    %c0_69 = arith.constant 0 : index
    %c0_70 = arith.constant 0 : index
    %262 = vector.load %arg13[%c0_69, %c0_70] : memref<32x1xf32, #tpu.memory_space<vmem>>, vector<32x1xf32>
    %cst_71 = arith.constant dense<0.000000e+00> : vector<2x1xf32>
    %263 = tpu.matmul %261, %262, %cst_71 {dimension_numbers = #tpu.dot_dimension_numbers<[1], [0], [0], [1], [0, 0, 1, 1], [], []>} : vector<2x32xf32>, vector<32x1xf32>, vector<2x1xf32> -> vector<2x1xf32>
    %c0_72 = arith.constant 0 : index
    %c0_73 = arith.constant 0 : index
    %264 = vector.load %arg14[%c0_72, %c0_73] : memref<1x1xf32, #tpu.memory_space<vmem>>, vector<1x1xf32>
    %265 = vector.broadcast %264 : vector<1x1xf32> to vector<2x1xf32>
    %266 = arith.addf %263, %265 : vector<2x1xf32>
    %c0_74 = arith.constant 0 : index
    %c0_75 = arith.constant 0 : index
    %267 = vector.load %arg15[%c0_74, %c0_75] : memref<2x1xf32, #tpu.memory_space<vmem>>, vector<2x1xf32>
    tpu.vector_store %arg15[%c0_74, %c0_75], %266 {strides = array<i32>} : memref<2x1xf32, #tpu.memory_space<vmem>>, vector<2x1xf32>,
    return
  }
}

</mosaic_0001>

<llo_original>
// kernel: cnnlstm_v3_forward.3
$region0: #{cnnlstm_v3_forward.3}
  #allocation0 [shape = 'u32[]', space=smem, size = 0x4, offset = 0x4, fixed_abs, tag = 'smem constant byte address 0x4 - core index']
  #allocation1 [shape = 'u32[144,128]{1,0:T(1,128)}', space=vmem, size = 0x12000, scoped, tag = 'internal scratch']
  %s0 = inlined_call_operand.vmem [shape: f32[128,25], index: 0, kind: input, shape index: {}]
  %s1 = inlined_call_operand.vmem [shape: f32[128,25], index: 1, kind: input, shape index: {}]
  %s2 = inlined_call_operand.vmem [shape: f32[128,25], index: 2, kind: input, shape index: {}]
  %s3 = inlined_call_operand.vmem [shape: f32[128,25], index: 3, kind: input, shape index: {}]
  %s4 = inlined_call_operand.vmem [shape: f32[25,16], index: 4, kind: input, shape index: {}]
  %s5 = inlined_call_operand.vmem [shape: f32[1,16], index: 5, kind: input, shape index: {}]
  %s6 = inlined_call_operand.vmem [shape: f32[128,16], index: 6, kind: output, shape index: {}]
  %s7 = sld [smem:[#allocation0]]
  $region34: #{cnnlstm_v3_forward.3} parent=0
    _
  %s9 = ssub.s32 1, %s7
  %s10 = scalar_select 0, %s9, %s7
  // Predicated region
  $region2: #{cnnlstm_v3_forward.3} parent=0 // pred_check
    _
  $region3: #{cnnlstm_v3_forward.3} parent=0 // pred_check_branch
    %12 = sbr.rel (0) target = $region5
  $region4: #{cnnlstm_v3_forward.3} parent=0 // pred_region
    _
  $region5: #{cnnlstm_v3_forward.3} parent=0 // pred_fallthru
    _
  // Predicated region
  $region6: #{cnnlstm_v3_forward.3} parent=0 // pred_check
    _
  $region7: #{cnnlstm_v3_forward.3} parent=0 // pred_check_branch
    %14 = sbr.rel (0) target = $region9
  $region8: #{cnnlstm_v3_forward.3} parent=0 // pred_region
    _
  $region9: #{cnnlstm_v3_forward.3} parent=0 // pred_fallthru
    _
  // Predicated region
  $region10: #{cnnlstm_v3_forward.3} parent=0 // pred_check
    _
  $region11: #{cnnlstm_v3_forward.3} parent=0 // pred_check_branch
    %16 = sbr.rel (0) target = $region13
  $region12: #{cnnlstm_v3_forward.3} parent=0 // pred_region
    _
  $region13: #{cnnlstm_v3_forward.3} parent=0 // pred_fallthru
    _
  // Predicated region
  $region14: #{cnnlstm_v3_forward.3} parent=0 // pred_check
    _
  $region15: #{cnnlstm_v3_forward.3} parent=0 // pred_check_branch
    %18 = sbr.rel (0) target = $region17
  $region16: #{cnnlstm_v3_forward.3} parent=0 // pred_region
    _
  $region17: #{cnnlstm_v3_forward.3} parent=0 // pred_fallthru
    _
  // Predicated region
  $region18: #{cnnlstm_v3_forward.3} parent=0 // pred_check
    _
  $region19: #{cnnlstm_v3_forward.3} parent=0 // pred_check_branch
    %20 = sbr.rel (0) target = $region21
  $region20: #{cnnlstm_v3_forward.3} parent=0 // pred_region
    _
  $region21: #{cnnlstm_v3_forward.3} parent=0 // pred_fallthru
    _
  // Predicated region
  $region22: #{cnnlstm_v3_forward.3} parent=0 // pred_check
    _
  $region23: #{cnnlstm_v3_forward.3} parent=0 // pred_check_branch
    %22 = sbr.rel (0) target = $region25
  $region24: #{cnnlstm_v3_forward.3} parent=0 // pred_region
    _
  $region25: #{cnnlstm_v3_forward.3} parent=0 // pred_fallthru
    _
  %v23 = vld [vmem:[%s4] sm:$0xff]
  %v24 = vld [vmem:[%s4 + $0x8] sm:$0xff]
  %v25 = vld [vmem:[%s4 + $0x10] sm:$0xff]
  %v26 = vld [vmem:[%s4 + $0x18] sm:$0x1]
  %v27 = vld [vmem:[%s0] sm:$0xff]
  %v28 = vld [vmem:[%s0 + $0x8] sm:$0xff]
  %v29 = vld [vmem:[%s0 + $0x10] sm:$0xff]
  %v30 = vld [vmem:[%s0 + $0x18] sm:$0xff]
  %v31 = vld [vmem:[%s0 + $0x20] sm:$0xff]
  %v32 = vld [vmem:[%s0 + $0x28] sm:$0xff]
  %v33 = vld [vmem:[%s0 + $0x30] sm:$0xff]
  %v34 = vld [vmem:[%s0 + $0x38] sm:$0xff]
  %v35 = vld [vmem:[%s0 + $0x40] sm:$0xff]
  %v36 = vld [vmem:[%s0 + $0x48] sm:$0xff]
  %v37 = vld [vmem:[%s0 + $0x50] sm:$0xff]
  %v38 = vld [vmem:[%s0 + $0x58] sm:$0xff]
  %v39 = vld [vmem:[%s0 + $0x60] sm:$0xff]
  %v40 = vld [vmem:[%s0 + $0x68] sm:$0xff]
  %v41 = vld [vmem:[%s0 + $0x70] sm:$0xff]
  %v42 = vld [vmem:[%s0 + $0x78] sm:$0xff]
  %vm43 = vcmask 203776
  %v45 = vsel %vm43, %v27, 0
  %v48 = vsel %vm43, %v28, 0
  %v51 = vsel %vm43, %v29, 0
  %v54 = vsel %vm43, %v30, 0
  %v57 = vsel %vm43, %v31, 0
  %v60 = vsel %vm43, %v32, 0
  %v63 = vsel %vm43, %v33, 0
  %v66 = vsel %vm43, %v34, 0
  %v69 = vsel %vm43, %v35, 0
  %v72 = vsel %vm43, %v36, 0
  %v75 = vsel %vm43, %v37, 0
  %v78 = vsel %vm43, %v38, 0
  %v81 = vsel %vm43, %v39, 0
  %v84 = vsel %vm43, %v40, 0
  %v87 = vsel %vm43, %v41, 0
  %v90 = vsel %vm43, %v42, 0
  %vm92 = vcmask 1040384
  %v94 = vsel %vm92, %v26, 0
  %96 = vmatprep.subr.mxu0 0.0
  %97 = vmatpush1.msra.mxu0 %v23
  %98 = vmatprep.subr.mxu0 0.0
  %99 = vmatpush1.msra.mxu0 %v24
  %100 = vmatprep.subr.mxu0 0.0
  %101 = vmatpush1.msra.mxu0 %v25
  %102 = vmatprep.subr.mxu0 0.0
  %103 = vmatpush1.msra.mxu0 %v94
  %104 = vmatprep.subr.mxu0 0.0
  %105 = vmatpush1.msra.mxu0 0.0
  %106 = vmatprep.subr.mxu0 0.0
  %107 = vmatpush1.msra.mxu0 0.0
  %108 = vmatprep.subr.mxu0 0.0
  %109 = vmatpush1.msra.mxu0 0.0
  %110 = vmatprep.subr.mxu0 0.0
  %111 = vmatpush1.msra.mxu0 0.0
  %112 = vmatprep.subr.mxu0 0.0
  %113 = vmatpush1.msra.mxu0 0.0
  %114 = vmatprep.subr.mxu0 0.0
  %115 = vmatpush1.msra.mxu0 0.0
  %116 = vmatprep.subr.mxu0 0.0
  %117 = vmatpush1.msra.mxu0 0.0
  %118 = vmatprep.subr.mxu0 0.0
  %119 = vmatpush1.msra.mxu0 0.0
  %120 = vmatprep.subr.mxu0 0.0
  %121 = vmatpush1.msra.mxu0 0.0
  %122 = vmatprep.subr.mxu0 0.0
  %123 = vmatpush1.msra.mxu0 0.0
  %124 = vmatprep.subr.mxu0 0.0
  %125 = vmatpush1.msra.mxu0 0.0
  %126 = vmatprep.subr.mxu0 0.0
  %127 = vmatpush1.msra.mxu0 0.0
  %128 = vmatprep.subr.mxu0 0.0
  %129 = vmatpush1.msra.mxu0 0.0
  %130 = vmatprep.subr.mxu0 0.0
  %131 = vmatpush1.msra.mxu0 0.0
  %132 = vmatprep.subr.mxu0 0.0
  %133 = vmatpush1.msra.mxu0 0.0
  %134 = vmatprep.subr.mxu0 0.0
  %135 = vmatpush1.msra.mxu0 0.0
  %136 = vmatprep.subr.mxu0 0.0
  %137 = vmatpush1.msra.mxu0 0.0
  %138 = vmatprep.subr.mxu0 0.0
  %139 = vmatpush1.msra.mxu0 0.0
  %140 = vmatprep.subr.mxu0 0.0
  %141 = vmatpush1.msra.mxu0 0.0
  %142 = vmatprep.subr.mxu0 0.0
  %143 = vmatpush1.msra.mxu0 0.0
  %144 = vmatprep.subr.mxu0 0.0
  %145 = vmatpush1.msra.mxu0 0.0
  %146 = vmatprep.subr.mxu0 0.0
  %147 = vmatpush1.msra.mxu0 0.0
  %148 = vmatprep.subr.mxu0 0.0
  %149 = vmatpush1.msra.mxu0 0.0
  %150 = vmatprep.subr.mxu0 0.0
  %151 = vmatpush1.msra.mxu0 0.0
  %152 = vmatprep.subr.mxu0 0.0
  %153 = vmatpush1.msra.mxu0 0.0
  %154 = vmatprep.subr.mxu0 0.0
  %155 = vmatpush1.msra.mxu0 0.0
  %156 = vmatprep.subr.mxu0 0.0
  %157 = vmatpush1.msra.mxu0 0.0
  %158 = vmatprep.subr.mxu0 0.0
  %159 = vmatpush1.msra.mxu0 0.0
  %160 = vmatprep.mubr.f32.mxu0 0.0
  %161 = vmatmul.mubr.f32.gmra.mrb[0].mxu0 %v45
  %v162 = vpop.f32.mrb[0].mxu0
  %v163 = vadd.f32 0.0, %v162
  %v164 = vpop.f32.mrb[0].mxu0
  %165 = vmatprep.mubr.f32.mxu0 0.0
  %166 = vmatmul.mubr.f32.gmra.mrb[0].mxu0 %v48
  %v167 = vpop.f32.mrb[0].mxu0
  %v168 = vadd.f32 0.0, %v167
  %v169 = vpop.f32.mrb[0].mxu0
  %170 = vmatprep.mubr.f32.mxu0 0.0
  %171 = vmatmul.mubr.f32.gmra.mrb[0].mxu0 %v51
  %v172 = vpop.f32.mrb[0].mxu0
  %v173 = vadd.f32 0.0, %v172
  %v174 = vpop.f32.mrb[0].mxu0
  %175 = vmatprep.mubr.f32.mxu0 0.0
  %176 = vmatmul.mubr.f32.gmra.mrb[0].mxu0 %v54
  %v177 = vpop.f32.mrb[0].mxu0
  %v178 = vadd.f32 0.0, %v177
  %v179 = vpop.f32.mrb[0].mxu0
  %180 = vmatprep.mubr.f32.mxu0 0.0
  %181 = vmatmul.mubr.f32.gmra.mrb[0].mxu0 %v57
  %v182 = vpop.f32.mrb[0].mxu0
  %v183 = vadd.f32 0.0, %v182
  %v184 = vpop.f32.mrb[0].mxu0
  %185 = vmatprep.mubr.f32.mxu0 0.0
  %186 = vmatmul.mubr.f32.gmra.mrb[0].mxu0 %v60
  %v187 = vpop.f32.mrb[0].mxu0
  %v188 = vadd.f32 0.0, %v187
  %v189 = vpop.f32.mrb[0].mxu0
  %190 = vmatprep.mubr.f32.mxu0 0.0
  %191 = vmatmul.mubr.f32.gmra.mrb[0].mxu0 %v63
  %v192 = vpop.f32.mrb[0].mxu0
  %v193 = vadd.f32 0.0, %v192
  %v194 = vpop.f32.mrb[0].mxu0
  %195 = vmatprep.mubr.f32.mxu0 0.0
  %196 = vmatmul.mubr.f32.gmra.mrb[0].mxu0 %v66
  %v197 = vpop.f32.mrb[0].mxu0
  %v198 = vadd.f32 0.0, %v197
  %v199 = vpop.f32.mrb[0].mxu0
  %200 = vmatprep.mubr.f32.mxu0 0.0
  %201 = vmatmul.mubr.f32.gmra.mrb[0].mxu0 %v69
  %v202 = vpop.f32.mrb[0].mxu0
  %v203 = vadd.f32 0.0, %v202
  %v204 = vpop.f32.mrb[0].mxu0
  %205 = vmatprep.mubr.f32.mxu0 0.0
  %206 = vmatmul.mubr.f32.gmra.mrb[0].mxu0 %v72
  %v207 = vpop.f32.mrb[0].mxu0
  %v208 = vadd.f32 0.0, %v207
  %v209 = vpop.f32.mrb[0].mxu0
  %210 = vmatprep.mubr.f32.mxu0 0.0
  %211 = vmatmul.mubr.f32.gmra.mrb[0].mxu0 %v75
  %v212 = vpop.f32.mrb[0].mxu0
  %v213 = vadd.f32 0.0, %v212
  %v214 = vpop.f32.mrb[0].mxu0
  %215 = vmatprep.mubr.f32.mxu0 0.0
  %216 = vmatmul.mubr.f32.gmra.mrb[0].mxu0 %v78
  %v217 = vpop.f32.mrb[0].mxu0
  %v218 = vadd.f32 0.0, %v217
  %v219 = vpop.f32.mrb[0].mxu0
  %220 = vmatprep.mubr.f32.mxu0 0.0
  %221 = vmatmul.mubr.f32.gmra.mrb[0].mxu0 %v81
  %v222 = vpop.f32.mrb[0].mxu0
  %v223 = vadd.f32 0.0, %v222
  %v224 = vpop.f32.mrb[0].mxu0
  %225 = vmatprep.mubr.f32.mxu0 0.0
  %226 = vmatmul.mubr.f32.gmra.mrb[0].mxu0 %v84
  %v227 = vpop.f32.mrb[0].mxu0
  %v228 = vadd.f32 0.0, %v227
  %v229 = vpop.f32.mrb[0].mxu0
  %230 = vmatprep.mubr.f32.mxu0 0.0
  %231 = vmatmul.mubr.f32.gmra.mrb[0].mxu0 %v87
  %v232 = vpop.f32.mrb[0].mxu0
  %v233 = vadd.f32 0.0, %v232
  %v234 = vpop.f32.mrb[0].mxu0
  %235 = vmatprep.mubr.f32.mxu0 0.0
  %236 = vmatmul.mubr.f32.gmra.mrb[0].mxu0 %v90
  %v237 = vpop.f32.mrb[0].mxu0
  %v238 = vadd.f32 0.0, %v237
  %v239 = vpop.f32.mrb[0].mxu0
  %240 = vdwg.mxu0
  %v241 = vld [vmem:[%s1] sm:$0xff]
  %v242 = vld [vmem:[%s1 + $0x8] sm:$0xff]
  %v243 = vld [vmem:[%s1 + $0x10] sm:$0xff]
  %v244 = vld [vmem:[%s1 + $0x18] sm:$0xff]
  %v245 = vld [vmem:[%s1 + $0x20] sm:$0xff]
  %v246 = vld [vmem:[%s1 + $0x28] sm:$0xff]
  %v247 = vld [vmem:[%s1 + $0x30] sm:$0xff]
  %v248 = vld [vmem:[%s1 + $0x38] sm:$0xff]
  %v249 = vld [vmem:[%s1 + $0x40] sm:$0xff]
  %v250 = vld [vmem:[%s1 + $0x48] sm:$0xff]
  %v251 = vld [vmem:[%s1 + $0x50] sm:$0xff]
  %v252 = vld [vmem:[%s1 + $0x58] sm:$0xff]
  %v253 = vld [vmem:[%s1 + $0x60] sm:$0xff]
  %v254 = vld [vmem:[%s1 + $0x68] sm:$0xff]
  %v255 = vld [vmem:[%s1 + $0x70] sm:$0xff]
  %v256 = vld [vmem:[%s1 + $0x78] sm:$0xff]
  %v258 = vsel %vm43, %v241, 0
  %v261 = vsel %vm43, %v242, 0
  %v264 = vsel %vm43, %v243, 0
  %v267 = vsel %vm43, %v244, 0
  %v270 = vsel %vm43, %v245, 0
  %v273 = vsel %vm43, %v246, 0
  %v276 = vsel %vm43, %v247, 0
  %v279 = vsel %vm43, %v248, 0
  %v282 = vsel %vm43, %v249, 0
  %v285 = vsel %vm43, %v250, 0
  %v288 = vsel %vm43, %v251, 0
  %v291 = vsel %vm43, %v252, 0
  %v294 = vsel %vm43, %v253, 0
  %v297 = vsel %vm43, %v254, 0
  %v300 = vsel %vm43, %v255, 0
  %v303 = vsel %vm43, %v256, 0
  %305 = vmatprep.subr.mxu0 0.0
  %306 = vmatpush1.msra.mxu0 %v23
  %307 = vmatprep.subr.mxu0 0.0
  %308 = vmatpush1.msra.mxu0 %v24
  %309 = vmatprep.subr.mxu0 0.0
  %310 = vmatpush1.msra.mxu0 %v25
  %311 = vmatprep.subr.mxu0 0.0
  %312 = vmatpush1.msra.mxu0 %v94
  %313 = vmatprep.subr.mxu0 0.0
  %314 = vmatpush1.msra.mxu0 0.0
  %315 = vmatprep.subr.mxu0 0.0
  %316 = vmatpush1.msra.mxu0 0.0
  %317 = vmatprep.subr.mxu0 0.0
  %318 = vmatpush1.msra.mxu0 0.0
  %319 = vmatprep.subr.mxu0 0.0
  %320 = vmatpush1.msra.mxu0 0.0
  %321 = vmatprep.subr.mxu0 0.0
  %322 = vmatpush1.msra.mxu0 0.0
  %323 = vmatprep.subr.mxu0 0.0
  %324 = vmatpush1.msra.mxu0 0.0
  %325 = vmatprep.subr.mxu0 0.0
  %326 = vmatpush1.msra.mxu0 0.0
  %327 = vmatprep.subr.mxu0 0.0
  %328 = vmatpush1.msra.mxu0 0.0
  %329 = vmatprep.subr.mxu0 0.0
  %330 = vmatpush1.msra.mxu0 0.0
  %331 = vmatprep.subr.mxu0 0.0
  %332 = vmatpush1.msra.mxu0 0.0
  %333 = vmatprep.subr.mxu0 0.0
  %334 = vmatpush1.msra.mxu0 0.0
  %335 = vmatprep.subr.mxu0 0.0
  %336 = vmatpush1.msra.mxu0 0.0
  %337 = vmatprep.subr.mxu0 0.0
  %338 = vmatpush1.msra.mxu0 0.0
  %339 = vmatprep.subr.mxu0 0.0
  %340 = vmatpush1.msra.mxu0 0.0
  %341 = vmatprep.subr.mxu0 0.0
  %342 = vmatpush1.msra.mxu0 0.0
  %343 = vmatprep.subr.mxu0 0.0
  %344 = vmatpush1.msra.mxu0 0.0
  %345 = vmatprep.subr.mxu0 0.0
  %346 = vmatpush1.msra.mxu0 0.0
  %347 = vmatprep.subr.mxu0 0.0
  %348 = vmatpush1.msra.mxu0 0.0
  %349 = vmatprep.subr.mxu0 0.0
  %350 = vmatpush1.msra.mxu0 0.0
  %351 = vmatprep.subr.mxu0 0.0
  %352 = vmatpush1.msra.mxu0 0.0
  %353 = vmatprep.subr.mxu0 0.0
  %354 = vmatpush1.msra.mxu0 0.0
  %355 = vmatprep.subr.mxu0 0.0
  %356 = vmatpush1.msra.mxu0 0.0
  %357 = vmatprep.subr.mxu0 0.0
  %358 = vmatpush1.msra.mxu0 0.0
  %359 = vmatprep.subr.mxu0 0.0
  %360 = vmatpush1.msra.mxu0 0.0
  %361 = vmatprep.subr.mxu0 0.0
  %362 = vmatpush1.msra.mxu0 0.0
  %363 = vmatprep.subr.mxu0 0.0
  %364 = vmatpush1.msra.mxu0 0.0
  %365 = vmatprep.subr.mxu0 0.0
  %366 = vmatpush1.msra.mxu0 0.0
  %367 = vmatprep.subr.mxu0 0.0
  %368 = vmatpush1.msra.mxu0 0.0
  %369 = vmatprep.mubr.f32.mxu0 0.0
  %370 = vmatmul.mubr.f32.gmra.mrb[0].mxu0 %v258
  %v371 = vpop.f32.mrb[0].mxu0
  %v372 = vadd.f32 0.0, %v371
  %v373 = vpop.f32.mrb[0].mxu0
  %374 = vmatprep.mubr.f32.mxu0 0.0
  %375 = vmatmul.mubr.f32.gmra.mrb[0].mxu0 %v261
  %v376 = vpop.f32.mrb[0].mxu0
  %v377 = vadd.f32 0.0, %v376
  %v378 = vpop.f32.mrb[0].mxu0
  %379 = vmatprep.mubr.f32.mxu0 0.0
  %380 = vmatmul.mubr.f32.gmra.mrb[0].mxu0 %v264
  %v381 = vpop.f32.mrb[0].mxu0
  %v382 = vadd.f32 0.0, %v381
  %v383 = vpop.f32.mrb[0].mxu0
  %384 = vmatprep.mubr.f32.mxu0 0.0
  %385 = vmatmul.mubr.f32.gmra.mrb[0].mxu0 %v267
  %v386 = vpop.f32.mrb[0].mxu0
  %v387 = vadd.f32 0.0, %v386
  %v388 = vpop.f32.mrb[0].mxu0
  %389 = vmatprep.mubr.f32.mxu0 0.0
  %390 = vmatmul.mubr.f32.gmra.mrb[0].mxu0 %v270
  %v391 = vpop.f32.mrb[0].mxu0
  %v392 = vadd.f32 0.0, %v391
  %v393 = vpop.f32.mrb[0].mxu0
  %394 = vmatprep.mubr.f32.mxu0 0.0
  %395 = vmatmul.mubr.f32.gmra.mrb[0].mxu0 %v273
  %v396 = vpop.f32.mrb[0].mxu0
  %v397 = vadd.f32 0.0, %v396
  %v398 = vpop.f32.mrb[0].mxu0
  %399 = vmatprep.mubr.f32.mxu0 0.0
  %400 = vmatmul.mubr.f32.gmra.mrb[0].mxu0 %v276
  %v401 = vpop.f32.mrb[0].mxu0
  %v402 = vadd.f32 0.0, %v401
  %v403 = vpop.f32.mrb[0].mxu0
  %404 = vmatprep.mubr.f32.mxu0 0.0
  %405 = vmatmul.mubr.f32.gmra.mrb[0].mxu0 %v279
  %v406 = vpop.f32.mrb[0].mxu0
  %v407 = vadd.f32 0.0, %v406
  %v408 = vpop.f32.mrb[0].mxu0
  %409 = vmatprep.mubr.f32.mxu0 0.0
  %410 = vmatmul.mubr.f32.gmra.mrb[0].mxu0 %v282
  %v411 = vpop.f32.mrb[0].mxu0
  %v412 = vadd.f32 0.0, %v411
  %v413 = vpop.f32.mrb[0].mxu0
  %414 = vmatprep.mubr.f32.mxu0 0.0
  %415 = vmatmul.mubr.f32.gmra.mrb[0].mxu0 %v285
  %v416 = vpop.f32.mrb[0].mxu0
  %v417 = vadd.f32 0.0, %v416
  %v418 = vpop.f32.mrb[0].mxu0
  %419 = vmatprep.mubr.f32.mxu0 0.0
  %420 = vmatmul.mubr.f32.gmra.mrb[0].mxu0 %v288
  %v421 = vpop.f32.mrb[0].mxu0
  %v422 = vadd.f32 0.0, %v421
  %v423 = vpop.f32.mrb[0].mxu0
  %424 = vmatprep.mubr.f32.mxu0 0.0
  %425 = vmatmul.mubr.f32.gmra.mrb[0].mxu0 %v291
  %v426 = vpop.f32.mrb[0].mxu0
  %v427 = vadd.f32 0.0, %v426
  %v428 = vpop.f32.mrb[0].mxu0
  %429 = vmatprep.mubr.f32.mxu0 0.0
  %430 = vmatmul.mubr.f32.gmra.mrb[0].mxu0 %v294
  %v431 = vpop.f32.mrb[0].mxu0
  %v432 = vadd.f32 0.0, %v431
  %v433 = vpop.f32.mrb[0].mxu0
  %434 = vmatprep.mubr.f32.mxu0 0.0
  %435 = vmatmul.mubr.f32.gmra.mrb[0].mxu0 %v297
  %v436 = vpop.f32.mrb[0].mxu0
  %v437 = vadd.f32 0.0, %v436
  %v438 = vpop.f32.mrb[0].mxu0
  %439 = vmatprep.mubr.f32.mxu0 0.0
  %440 = vmatmul.mubr.f32.gmra.mrb[0].mxu0 %v300
  %v441 = vpop.f32.mrb[0].mxu0
  %v442 = vadd.f32 0.0, %v441
  %v443 = vpop.f32.mrb[0].mxu0
  %444 = vmatprep.mubr.f32.mxu0 0.0
  %445 = vmatmul.mubr.f32.gmra.mrb[0].mxu0 %v303
  %v446 = vpop.f32.mrb[0].mxu0
  %v447 = vadd.f32 0.0, %v446
  %v448 = vpop.f32.mrb[0].mxu0
  %449 = vdwg.mxu0
  %v450 = vld [vmem:[%s2] sm:$0xff]
  %v451 = vld [vmem:[%s2 + $0x8] sm:$0xff]
  %v452 = vld [vmem:[%s2 + $0x10] sm:$0xff]
  %v453 = vld [vmem:[%s2 + $0x18] sm:$0xff]
  %v454 = vld [vmem:[%s2 + $0x20] sm:$0xff]
  %v455 = vld [vmem:[%s2 + $0x28] sm:$0xff]
  %v456 = vld [vmem:[%s2 + $0x30] sm:$0xff]
  %v457 = vld [vmem:[%s2 + $0x38] sm:$0xff]
  %v458 = vld [vmem:[%s2 + $0x40] sm:$0xff]
  %v459 = vld [vmem:[%s2 + $0x48] sm:$0xff]
  %v460 = vld [vmem:[%s2 + $0x50] sm:$0xff]
  %v461 = vld [vmem:[%s2 + $0x58] sm:$0xff]
  %v462 = vld [vmem:[%s2 + $0x60] sm:$0xff]
  %v463 = vld [vmem:[%s2 + $0x68] sm:$0xff]
  %v464 = vld [vmem:[%s2 + $0x70] sm:$0xff]
  %v465 = vld [vmem:[%s2 + $0x78] sm:$0xff]
  %v467 = vsel %vm43, %v450, 0
  %v470 = vsel %vm43, %v451, 0
  %v473 = vsel %vm43, %v452, 0
  %v476 = vsel %vm43, %v453, 0
  %v479 = vsel %vm43, %v454, 0
  %v482 = vsel %vm43, %v455, 0
  %v485 = vsel %vm43, %v456, 0
  %v488 = vsel %vm43, %v457, 0
  %v491 = vsel %vm43, %v458, 0
  %v494 = vsel %vm43, %v459, 0
  %v497 = vsel %vm43, %v460, 0
  %v500 = vsel %vm43, %v461, 0
  %v503 = vsel %vm43, %v462, 0
  %v506 = vsel %vm43, %v463, 0
  %v509 = vsel %vm43, %v464, 0
  %v512 = vsel %vm43, %v465, 0
  %514 = vmatprep.subr.mxu0 0.0
  %515 = vmatpush1.msra.mxu0 %v23
  %516 = vmatprep.subr.mxu0 0.0
  %517 = vmatpush1.msra.mxu0 %v24
  %518 = vmatprep.subr.mxu0 0.0
  %519 = vmatpush1.msra.mxu0 %v25
  %520 = vmatprep.subr.mxu0 0.0
  %521 = vmatpush1.msra.mxu0 %v94
  %522 = vmatprep.subr.mxu0 0.0
  %523 = vmatpush1.msra.mxu0 0.0
  %524 = vmatprep.subr.mxu0 0.0
  %525 = vmatpush1.msra.mxu0 0.0
  %526 = vmatprep.subr.mxu0 0.0
  %527 = vmatpush1.msra.mxu0 0.0
  %528 = vmatprep.subr.mxu0 0.0
  %529 = vmatpush1.msra.mxu0 0.0
  %530 = vmatprep.subr.mxu0 0.0
  %531 = vmatpush1.msra.mxu0 0.0
  %532 = vmatprep.subr.mxu0 0.0
  %533 = vmatpush1.msra.mxu0 0.0
  %534 = vmatprep.subr.mxu0 0.0
  %535 = vmatpush1.msra.mxu0 0.0
  %536 = vmatprep.subr.mxu0 0.0
  %537 = vmatpush1.msra.mxu0 0.0
  %538 = vmatprep.subr.mxu0 0.0
  %539 = vmatpush1.msra.mxu0 0.0
  %540 = vmatprep.subr.mxu0 0.0
  %541 = vmatpush1.msra.mxu0 0.0
  %542 = vmatprep.subr.mxu0 0.0
  %543 = vmatpush1.msra.mxu0 0.0
  %544 = vmatprep.subr.mxu0 0.0
  %545 = vmatpush1.msra.mxu0 0.0
  %546 = vmatprep.subr.mxu0 0.0
  %547 = vmatpush1.msra.mxu0 0.0
  %548 = vmatprep.subr.mxu0 0.0
  %549 = vmatpush1.msra.mxu0 0.0
  %550 = vmatprep.subr.mxu0 0.0
  %551 = vmatpush1.msra.mxu0 0.0
  %552 = vmatprep.subr.mxu0 0.0
  %553 = vmatpush1.msra.mxu0 0.0
  %554 = vmatprep.subr.mxu0 0.0
  %555 = vmatpush1.msra.mxu0 0.0
  %556 = vmatprep.subr.mxu0 0.0
  %557 = vmatpush1.msra.mxu0 0.0
  %558 = vmatprep.subr.mxu0 0.0
  %559 = vmatpush1.msra.mxu0 0.0
  %560 = vmatprep.subr.mxu0 0.0
  %561 = vmatpush1.msra.mxu0 0.0
  %562 = vmatprep.subr.mxu0 0.0
  %563 = vmatpush1.msra.mxu0 0.0
  %564 = vmatprep.subr.mxu0 0.0
  %565 = vmatpush1.msra.mxu0 0.0
  %566 = vmatprep.subr.mxu0 0.0
  %567 = vmatpush1.msra.mxu0 0.0
  %568 = vmatprep.subr.mxu0 0.0
  %569 = vmatpush1.msra.mxu0 0.0
  %570 = vmatprep.subr.mxu0 0.0
  %571 = vmatpush1.msra.mxu0 0.0
  %572 = vmatprep.subr.mxu0 0.0
  %573 = vmatpush1.msra.mxu0 0.0
  %574 = vmatprep.subr.mxu0 0.0
  %575 = vmatpush1.msra.mxu0 0.0
  %576 = vmatprep.subr.mxu0 0.0
  %577 = vmatpush1.msra.mxu0 0.0
  %578 = vmatprep.mubr.f32.mxu0 0.0
  %579 = vmatmul.mubr.f32.gmra.mrb[0].mxu0 %v467
  %v580 = vpop.f32.mrb[0].mxu0
  %v581 = vadd.f32 0.0, %v580
  %v582 = vpop.f32.mrb[0].mxu0
  %583 = vmatprep.mubr.f32.mxu0 0.0
  %584 = vmatmul.mubr.f32.gmra.mrb[0].mxu0 %v470
  %v585 = vpop.f32.mrb[0].mxu0
  %v586 = vadd.f32 0.0, %v585
  %v587 = vpop.f32.mrb[0].mxu0
  %588 = vmatprep.mubr.f32.mxu0 0.0
  %589 = vmatmul.mubr.f32.gmra.mrb[0].mxu0 %v473
  %v590 = vpop.f32.mrb[0].mxu0
  %v591 = vadd.f32 0.0, %v590
  %v592 = vpop.f32.mrb[0].mxu0
  %593 = vmatprep.mubr.f32.mxu0 0.0
  %594 = vmatmul.mubr.f32.gmra.mrb[0].mxu0 %v476
  %v595 = vpop.f32.mrb[0].mxu0
  %v596 = vadd.f32 0.0, %v595
  %v597 = vpop.f32.mrb[0].mxu0
  %598 = vmatprep.mubr.f32.mxu0 0.0
  %599 = vmatmul.mubr.f32.gmra.mrb[0].mxu0 %v479
  %v600 = vpop.f32.mrb[0].mxu0
  %v601 = vadd.f32 0.0, %v600
  %v602 = vpop.f32.mrb[0].mxu0
  %603 = vmatprep.mubr.f32.mxu0 0.0
  %604 = vmatmul.mubr.f32.gmra.mrb[0].mxu0 %v482
  %v605 = vpop.f32.mrb[0].mxu0
  %v606 = vadd.f32 0.0, %v605
  %v607 = vpop.f32.mrb[0].mxu0
  %608 = vmatprep.mubr.f32.mxu0 0.0
  %609 = vmatmul.mubr.f32.gmra.mrb[0].mxu0 %v485
  %v610 = vpop.f32.mrb[0].mxu0
  %v611 = vadd.f32 0.0, %v610
  %v612 = vpop.f32.mrb[0].mxu0
  %613 = vmatprep.mubr.f32.mxu0 0.0
  %614 = vmatmul.mubr.f32.gmra.mrb[0].mxu0 %v488
  %v615 = vpop.f32.mrb[0].mxu0
  %v616 = vadd.f32 0.0, %v615
  %v617 = vpop.f32.mrb[0].mxu0
  %618 = vmatprep.mubr.f32.mxu0 0.0
  %619 = vmatmul.mubr.f32.gmra.mrb[0].mxu0 %v491
  %v620 = vpop.f32.mrb[0].mxu0
  %v621 = vadd.f32 0.0, %v620
  %v622 = vpop.f32.mrb[0].mxu0
  %623 = vmatprep.mubr.f32.mxu0 0.0
  %624 = vmatmul.mubr.f32.gmra.mrb[0].mxu0 %v494
  %v625 = vpop.f32.mrb[0].mxu0
  %v626 = vadd.f32 0.0, %v625
  %v627 = vpop.f32.mrb[0].mxu0
  %628 = vmatprep.mubr.f32.mxu0 0.0
  %629 = vmatmul.mubr.f32.gmra.mrb[0].mxu0 %v497
  %v630 = vpop.f32.mrb[0].mxu0
  %v631 = vadd.f32 0.0, %v630
  %v632 = vpop.f32.mrb[0].mxu0
  %633 = vmatprep.mubr.f32.mxu0 0.0
  %634 = vmatmul.mubr.f32.gmra.mrb[0].mxu0 %v500
  %v635 = vpop.f32.mrb[0].mxu0
  %v636 = vadd.f32 0.0, %v635
  %v637 = vpop.f32.mrb[0].mxu0
  %638 = vmatprep.mubr.f32.mxu0 0.0
  %639 = vmatmul.mubr.f32.gmra.mrb[0].mxu0 %v503
  %v640 = vpop.f32.mrb[0].mxu0
  %v641 = vadd.f32 0.0, %v640
  %v642 = vpop.f32.mrb[0].mxu0
  %643 = vmatprep.mubr.f32.mxu0 0.0
  %644 = vmatmul.mubr.f32.gmra.mrb[0].mxu0 %v506
  %v645 = vpop.f32.mrb[0].mxu0
  %v646 = vadd.f32 0.0, %v645
  %v647 = vpop.f32.mrb[0].mxu0
  %648 = vmatprep.mubr.f32.mxu0 0.0
  %649 = vmatmul.mubr.f32.gmra.mrb[0].mxu0 %v509
  %v650 = vpop.f32.mrb[0].mxu0
  %v651 = vadd.f32 0.0, %v650
  %v652 = vpop.f32.mrb[0].mxu0
  %653 = vmatprep.mubr.f32.mxu0 0.0
  %654 = vmatmul.mubr.f32.gmra.mrb[0].mxu0 %v512
  %v655 = vpop.f32.mrb[0].mxu0
  %v656 = vadd.f32 0.0, %v655
  %v657 = vpop.f32.mrb[0].mxu0
  %658 = vdwg.mxu0
  %v659 = vld [vmem:[%s3] sm:$0xff]
  %v660 = vld [vmem:[%s3 + $0x8] sm:$0xff]
  %v661 = vld [vmem:[%s3 + $0x10] sm:$0xff]
  %v662 = vld [vmem:[%s3 + $0x18] sm:$0xff]
  %v663 = vld [vmem:[%s3 + $0x20] sm:$0xff]
  %v664 = vld [vmem:[%s3 + $0x28] sm:$0xff]
  %v665 = vld [vmem:[%s3 + $0x30] sm:$0xff]
  %v666 = vld [vmem:[%s3 + $0x38] sm:$0xff]
  %v667 = vld [vmem:[%s3 + $0x40] sm:$0xff]
  %v668 = vld [vmem:[%s3 + $0x48] sm:$0xff]
  %v669 = vld [vmem:[%s3 + $0x50] sm:$0xff]
  %v670 = vld [vmem:[%s3 + $0x58] sm:$0xff]
  %v671 = vld [vmem:[%s3 + $0x60] sm:$0xff]
  %v672 = vld [vmem:[%s3 + $0x68] sm:$0xff]
  %v673 = vld [vmem:[%s3 + $0x70] sm:$0xff]
  %v674 = vld [vmem:[%s3 + $0x78] sm:$0xff]
  %v676 = vsel %vm43, %v659, 0
  %v679 = vsel %vm43, %v660, 0
  %v682 = vsel %vm43, %v661, 0
  %v685 = vsel %vm43, %v662, 0
  %v688 = vsel %vm43, %v663, 0
  %v691 = vsel %vm43, %v664, 0
  %v694 = vsel %vm43, %v665, 0
  %v697 = vsel %vm43, %v666, 0
  %v700 = vsel %vm43, %v667, 0
  %v703 = vsel %vm43, %v668, 0
  %v706 = vsel %vm43, %v669, 0
  %v709 = vsel %vm43, %v670, 0
  %v712 = vsel %vm43, %v671, 0
  %v715 = vsel %vm43, %v672, 0
  %v718 = vsel %vm43, %v673, 0
  %v721 = vsel %vm43, %v674, 0
  %723 = vmatprep.subr.mxu0 0.0
  %724 = vmatpush1.msra.mxu0 %v23
  %725 = vmatprep.subr.mxu0 0.0
  %726 = vmatpush1.msra.mxu0 %v24
  %727 = vmatprep.subr.mxu0 0.0
  %728 = vmatpush1.msra.mxu0 %v25
  %729 = vmatprep.subr.mxu0 0.0
  %730 = vmatpush1.msra.mxu0 %v94
  %731 = vmatprep.subr.mxu0 0.0
  %732 = vmatpush1.msra.mxu0 0.0
  %733 = vmatprep.subr.mxu0 0.0
  %734 = vmatpush1.msra.mxu0 0.0
  %735 = vmatprep.subr.mxu0 0.0
  %736 = vmatpush1.msra.mxu0 0.0
  %737 = vmatprep.subr.mxu0 0.0
  %738 = vmatpush1.msra.mxu0 0.0
  %739 = vmatprep.subr.mxu0 0.0
  %740 = vmatpush1.msra.mxu0 0.0
  %741 = vmatprep.subr.mxu0 0.0
  %742 = vmatpush1.msra.mxu0 0.0
  %743 = vmatprep.subr.mxu0 0.0
  %744 = vmatpush1.msra.mxu0 0.0
  %745 = vmatprep.subr.mxu0 0.0
  %746 = vmatpush1.msra.mxu0 0.0
  %747 = vmatprep.subr.mxu0 0.0
  %748 = vmatpush1.msra.mxu0 0.0
  %749 = vmatprep.subr.mxu0 0.0
  %750 = vmatpush1.msra.mxu0 0.0
  %751 = vmatprep.subr.mxu0 0.0
  %752 = vmatpush1.msra.mxu0 0.0
  %753 = vmatprep.subr.mxu0 0.0
  %754 = vmatpush1.msra.mxu0 0.0
  %755 = vmatprep.subr.mxu0 0.0
  %756 = vmatpush1.msra.mxu0 0.0
  %757 = vmatprep.subr.mxu0 0.0
  %758 = vmatpush1.msra.mxu0 0.0
  %759 = vmatprep.subr.mxu0 0.0
  %760 = vmatpush1.msra.mxu0 0.0
  %761 = vmatprep.subr.mxu0 0.0
  %762 = vmatpush1.msra.mxu0 0.0
  %763 = vmatprep.subr.mxu0 0.0
  %764 = vmatpush1.msra.mxu0 0.0
  %765 = vmatprep.subr.mxu0 0.0
  %766 = vmatpush1.msra.mxu0 0.0
  %767 = vmatprep.subr.mxu0 0.0
  %768 = vmatpush1.msra.mxu0 0.0
  %769 = vmatprep.subr.mxu0 0.0
  %770 = vmatpush1.msra.mxu0 0.0
  %771 = vmatprep.subr.mxu0 0.0
  %772 = vmatpush1.msra.mxu0 0.0
  %773 = vmatprep.subr.mxu0 0.0
  %774 = vmatpush1.msra.mxu0 0.0
  %775 = vmatprep.subr.mxu0 0.0
  %776 = vmatpush1.msra.mxu0 0.0
  %777 = vmatprep.subr.mxu0 0.0
  %778 = vmatpush1.msra.mxu0 0.0
  %779 = vmatprep.subr.mxu0 0.0
  %780 = vmatpush1.msra.mxu0 0.0
  %781 = vmatprep.subr.mxu0 0.0
  %782 = vmatpush1.msra.mxu0 0.0
  %783 = vmatprep.subr.mxu0 0.0
  %784 = vmatpush1.msra.mxu0 0.0
  %785 = vmatprep.subr.mxu0 0.0
  %786 = vmatpush1.msra.mxu0 0.0
  %787 = vmatprep.mubr.f32.mxu0 0.0
  %788 = vmatmul.mubr.f32.gmra.mrb[0].mxu0 %v676
  %v789 = vpop.f32.mrb[0].mxu0
  %v790 = vadd.f32 0.0, %v789
  %v791 = vpop.f32.mrb[0].mxu0
  %792 = vmatprep.mubr.f32.mxu0 0.0
  %793 = vmatmul.mubr.f32.gmra.mrb[0].mxu0 %v679
  %v794 = vpop.f32.mrb[0].mxu0
  %v795 = vadd.f32 0.0, %v794
  %v796 = vpop.f32.mrb[0].mxu0
  %797 = vmatprep.mubr.f32.mxu0 0.0
  %798 = vmatmul.mubr.f32.gmra.mrb[0].mxu0 %v682
  %v799 = vpop.f32.mrb[0].mxu0
  %v800 = vadd.f32 0.0, %v799
  %v801 = vpop.f32.mrb[0].mxu0
  %802 = vmatprep.mubr.f32.mxu0 0.0
  %803 = vmatmul.mubr.f32.gmra.mrb[0].mxu0 %v685
  %v804 = vpop.f32.mrb[0].mxu0
  %v805 = vadd.f32 0.0, %v804
  %v806 = vpop.f32.mrb[0].mxu0
  %807 = vmatprep.mubr.f32.mxu0 0.0
  %808 = vmatmul.mubr.f32.gmra.mrb[0].mxu0 %v688
  %v809 = vpop.f32.mrb[0].mxu0
  %v810 = vadd.f32 0.0, %v809
  %v811 = vpop.f32.mrb[0].mxu0
  %812 = vmatprep.mubr.f32.mxu0 0.0
  %813 = vmatmul.mubr.f32.gmra.mrb[0].mxu0 %v691
  %v814 = vpop.f32.mrb[0].mxu0
  %v815 = vadd.f32 0.0, %v814
  %v816 = vpop.f32.mrb[0].mxu0
  %817 = vmatprep.mubr.f32.mxu0 0.0
  %818 = vmatmul.mubr.f32.gmra.mrb[0].mxu0 %v694
  %v819 = vpop.f32.mrb[0].mxu0
  %v820 = vadd.f32 0.0, %v819
  %v821 = vpop.f32.mrb[0].mxu0
  %822 = vmatprep.mubr.f32.mxu0 0.0
  %823 = vmatmul.mubr.f32.gmra.mrb[0].mxu0 %v697
  %v824 = vpop.f32.mrb[0].mxu0
  %v825 = vadd.f32 0.0, %v824
  %v826 = vpop.f32.mrb[0].mxu0
  %827 = vmatprep.mubr.f32.mxu0 0.0
  %828 = vmatmul.mubr.f32.gmra.mrb[0].mxu0 %v700
  %v829 = vpop.f32.mrb[0].mxu0
  %v830 = vadd.f32 0.0, %v829
  %v831 = vpop.f32.mrb[0].mxu0
  %832 = vmatprep.mubr.f32.mxu0 0.0
  %833 = vmatmul.mubr.f32.gmra.mrb[0].mxu0 %v703
  %v834 = vpop.f32.mrb[0].mxu0
  %v835 = vadd.f32 0.0, %v834
  %v836 = vpop.f32.mrb[0].mxu0
  %837 = vmatprep.mubr.f32.mxu0 0.0
  %838 = vmatmul.mubr.f32.gmra.mrb[0].mxu0 %v706
  %v839 = vpop.f32.mrb[0].mxu0
  %v840 = vadd.f32 0.0, %v839
  %v841 = vpop.f32.mrb[0].mxu0
  %842 = vmatprep.mubr.f32.mxu0 0.0
  %843 = vmatmul.mubr.f32.gmra.mrb[0].mxu0 %v709
  %v844 = vpop.f32.mrb[0].mxu0
  %v845 = vadd.f32 0.0, %v844
  %v846 = vpop.f32.mrb[0].mxu0
  %847 = vmatprep.mubr.f32.mxu0 0.0
  %848 = vmatmul.mubr.f32.gmra.mrb[0].mxu0 %v712
  %v849 = vpop.f32.mrb[0].mxu0
  %v850 = vadd.f32 0.0, %v849
  %v851 = vpop.f32.mrb[0].mxu0
  %852 = vmatprep.mubr.f32.mxu0 0.0
  %853 = vmatmul.mubr.f32.gmra.mrb[0].mxu0 %v715
  %v854 = vpop.f32.mrb[0].mxu0
  %v855 = vadd.f32 0.0, %v854
  %v856 = vpop.f32.mrb[0].mxu0
  %857 = vmatprep.mubr.f32.mxu0 0.0
  %858 = vmatmul.mubr.f32.gmra.mrb[0].mxu0 %v718
  %v859 = vpop.f32.mrb[0].mxu0
  %v860 = vadd.f32 0.0, %v859
  %v861 = vpop.f32.mrb[0].mxu0
  %862 = vmatprep.mubr.f32.mxu0 0.0
  %863 = vmatmul.mubr.f32.gmra.mrb[0].mxu0 %v721
  %v864 = vpop.f32.mrb[0].mxu0
  %v865 = vadd.f32 0.0, %v864
  %v866 = vpop.f32.mrb[0].mxu0
  %867 = vdwg.mxu0
  %v868 = vmax.f32 %v163, %v372
  %v869 = vmax.f32 %v168, %v377
  %v870 = vmax.f32 %v173, %v382
  %v871 = vmax.f32 %v178, %v387
  %v872 = vmax.f32 %v183, %v392
  %v873 = vmax.f32 %v188, %v397
  %v874 = vmax.f32 %v193, %v402
  %v875 = vmax.f32 %v198, %v407
  %v876 = vmax.f32 %v203, %v412
  %v877 = vmax.f32 %v208, %v417
  %v878 = vmax.f32 %v213, %v422
  %v879 = vmax.f32 %v218, %v427
  %v880 = vmax.f32 %v223, %v432
  %v881 = vmax.f32 %v228, %v437
  %v882 = vmax.f32 %v233, %v442
  %v883 = vmax.f32 %v238, %v447
  %v884 = vmax.f32 %v581, %v790
  %v885 = vmax.f32 %v586, %v795
  %v886 = vmax.f32 %v591, %v800
  %v887 = vmax.f32 %v596, %v805
  %v888 = vmax.f32 %v601, %v810
  %v889 = vmax.f32 %v606, %v815
  %v890 = vmax.f32 %v611, %v820
  %v891 = vmax.f32 %v616, %v825
  %v892 = vmax.f32 %v621, %v830
  %v893 = vmax.f32 %v626, %v835
  %v894 = vmax.f32 %v631, %v840
  %v895 = vmax.f32 %v636, %v845
  %v896 = vmax.f32 %v641, %v850
  %v897 = vmax.f32 %v646, %v855
  %v898 = vmax.f32 %v651, %v860
  %v899 = vmax.f32 %v656, %v865
  %v900 = vmax.f32 %v868, %v884
  %v901 = vmax.f32 %v869, %v885
  %v902 = vmax.f32 %v870, %v886
  %v903 = vmax.f32 %v871, %v887
  %v904 = vmax.f32 %v872, %v888
  %v905 = vmax.f32 %v873, %v889
  %v906 = vmax.f32 %v874, %v890
  %v907 = vmax.f32 %v875, %v891
  %v908 = vmax.f32 %v876, %v892
  %v909 = vmax.f32 %v877, %v893
  %v910 = vmax.f32 %v878, %v894
  %v911 = vmax.f32 %v879, %v895
  %v912 = vmax.f32 %v880, %v896
  %v913 = vmax.f32 %v881, %v897
  %v914 = vmax.f32 %v882, %v898
  %v915 = vmax.f32 %v883, %v899
  %v916 = vld [vmem:[%s5] sm:$0x1]
  %v918 = vlaneseq
  %v919 = vshrl.u32 %v918, 7
  %v920 = vsub.s32 0, %v919
  %v921 = vrot.slane %v916, %v920
  %v923 = vadd.f32 %v900, %v921
  %v924 = vadd.f32 %v901, %v921
  %v925 = vadd.f32 %v902, %v921
  %v926 = vadd.f32 %v903, %v921
  %v927 = vadd.f32 %v904, %v921
  %v928 = vadd.f32 %v905, %v921
  %v929 = vadd.f32 %v906, %v921
  %v930 = vadd.f32 %v907, %v921
  %v931 = vadd.f32 %v908, %v921
  %v932 = vadd.f32 %v909, %v921
  %v933 = vadd.f32 %v910, %v921
  %v934 = vadd.f32 %v911, %v921
  %v935 = vadd.f32 %v912, %v921
  %v936 = vadd.f32 %v913, %v921
  %v937 = vadd.f32 %v914, %v921
  %v938 = vadd.f32 %v915, %v921
  %v939 = vmax.f32 %v923, 0.0
  %v940 = vmax.f32 %v924, 0.0
  %v941 = vmax.f32 %v925, 0.0
  %v942 = vmax.f32 %v926, 0.0
  %v943 = vmax.f32 %v927, 0.0
  %v944 = vmax.f32 %v928, 0.0
  %v945 = vmax.f32 %v929, 0.0
  %v946 = vmax.f32 %v930, 0.0
  %v947 = vmax.f32 %v931, 0.0
  %v948 = vmax.f32 %v932, 0.0
  %v949 = vmax.f32 %v933, 0.0
  %v950 = vmax.f32 %v934, 0.0
  %v951 = vmax.f32 %v935, 0.0
  %v952 = vmax.f32 %v936, 0.0
  %v953 = vmax.f32 %v937, 0.0
  %v954 = vmax.f32 %v938, 0.0
  %vm955 = vcmask 130048
  %956 = vst.msk [vmem:[%s6] sm:$0xff] %vm955, %v939
  %957 = vst.msk [vmem:[%s6 + $0x8] sm:$0xff] %vm955, %v940
  %958 = vst.msk [vmem:[%s6 + $0x10] sm:$0xff] %vm955, %v941
  %959 = vst.msk [vmem:[%s6 + $0x18] sm:$0xff] %vm955, %v942
  %960 = vst.msk [vmem:[%s6 + $0x20] sm:$0xff] %vm955, %v943
  %961 = vst.msk [vmem:[%s6 + $0x28] sm:$0xff] %vm955, %v944
  %962 = vst.msk [vmem:[%s6 + $0x30] sm:$0xff] %vm955, %v945
  %963 = vst.msk [vmem:[%s6 + $0x38] sm:$0xff] %vm955, %v946
  %964 = vst.msk [vmem:[%s6 + $0x40] sm:$0xff] %vm955, %v947
  %965 = vst.msk [vmem:[%s6 + $0x48] sm:$0xff] %vm955, %v948
  %966 = vst.msk [vmem:[%s6 + $0x50] sm:$0xff] %vm955, %v949
  %967 = vst.msk [vmem:[%s6 + $0x58] sm:$0xff] %vm955, %v950
  %968 = vst.msk [vmem:[%s6 + $0x60] sm:$0xff] %vm955, %v951
  %969 = vst.msk [vmem:[%s6 + $0x68] sm:$0xff] %vm955, %v952
  %970 = vst.msk [vmem:[%s6 + $0x70] sm:$0xff] %vm955, %v953
  %971 = vst.msk [vmem:[%s6 + $0x78] sm:$0xff] %vm955, %v954
  // Predicated region
  $region26: #{cnnlstm_v3_forward.3} parent=0 // pred_check
    _
  $region27: #{cnnlstm_v3_forward.3} parent=0 // pred_check_branch
    %973 = sbr.rel (0) target = $region29
  $region28: #{cnnlstm_v3_forward.3} parent=0 // pred_region
    _
  $region29: #{cnnlstm_v3_forward.3} parent=0 // pred_fallthru
    _
  // Predicated region
  $region30: #{cnnlstm_v3_forward.3} parent=0 // pred_check
    _
  $region31: #{cnnlstm_v3_forward.3} parent=0 // pred_check_branch
    %975 = sbr.rel (0) target = $region33
  $region32: #{cnnlstm_v3_forward.3} parent=0 // pred_region
    _
  $region33: #{cnnlstm_v3_forward.3} parent=0 // pred_fallthru
    _

// kernel: cnnlstm_v3_forward.4
$region0: #{cnnlstm_v3_forward.4}
  #allocation0 [shape = 'u32[]', space=smem, size = 0x4, offset = 0x4, fixed_abs, tag = 'smem constant byte address 0x4 - core index']
  #allocation1 [shape = 'u32[144,128]{1,0:T(1,128)}', space=vmem, size = 0x12000, scoped, tag = 'internal scratch']
  %s0 = inlined_call_operand.vmem [shape: f32[32,400], index: 0, kind: input, shape index: {}]
  %s1 = inlined_call_operand.vmem [shape: f32[32,400], index: 1, kind: input, shape index: {}]
  %s2 = inlined_call_operand.vmem [shape: f32[32,400], index: 2, kind: input, shape index: {}]
  %s3 = inlined_call_operand.vmem [shape: f32[32,400], index: 3, kind: input, shape index: {}]
  %s4 = inlined_call_operand.vmem [shape: f32[400,32], index: 4, kind: input, shape index: {}]
  %s5 = inlined_call_operand.vmem [shape: f32[1,32], index: 5, kind: input, shape index: {}]
  %s6 = inlined_call_operand.vmem [shape: f32[32,32], index: 6, kind: output, shape index: {}]
  %s7 = sld [smem:[#allocation0]]
  $region34: #{cnnlstm_v3_forward.4} parent=0
    _
  %s9 = ssub.s32 1, %s7
  %s10 = scalar_select 0, %s9, %s7
  // Predicated region
  $region2: #{cnnlstm_v3_forward.4} parent=0 // pred_check
    _
  $region3: #{cnnlstm_v3_forward.4} parent=0 // pred_check_branch
    %12 = sbr.rel (0) target = $region5
  $region4: #{cnnlstm_v3_forward.4} parent=0 // pred_region
    _
  $region5: #{cnnlstm_v3_forward.4} parent=0 // pred_fallthru
    _
  // Predicated region
  $region6: #{cnnlstm_v3_forward.4} parent=0 // pred_check
    _
  $region7: #{cnnlstm_v3_forward.4} parent=0 // pred_check_branch
    %14 = sbr.rel (0) target = $region9
  $region8: #{cnnlstm_v3_forward.4} parent=0 // pred_region
    _
  $region9: #{cnnlstm_v3_forward.4} parent=0 // pred_fallthru
    _
  // Predicated region
  $region10: #{cnnlstm_v3_forward.4} parent=0 // pred_check
    _
  $region11: #{cnnlstm_v3_forward.4} parent=0 // pred_check_branch
    %16 = sbr.rel (0) target = $region13
  $region12: #{cnnlstm_v3_forward.4} parent=0 // pred_region
    _
  $region13: #{cnnlstm_v3_forward.4} parent=0 // pred_fallthru
    _
  // Predicated region
  $region14: #{cnnlstm_v3_forward.4} parent=0 // pred_check
    _
  $region15: #{cnnlstm_v3_forward.4} parent=0 // pred_check_branch
    %18 = sbr.rel (0) target = $region17
  $region16: #{cnnlstm_v3_forward.4} parent=0 // pred_region
    _
  $region17: #{cnnlstm_v3_forward.4} parent=0 // pred_fallthru
    _
  // Predicated region
  $region18: #{cnnlstm_v3_forward.4} parent=0 // pred_check
    _
  $region19: #{cnnlstm_v3_forward.4} parent=0 // pred_check_branch
    %20 = sbr.rel (0) target = $region21
  $region20: #{cnnlstm_v3_forward.4} parent=0 // pred_region
    _
  $region21: #{cnnlstm_v3_forward.4} parent=0 // pred_fallthru
    _
  // Predicated region
  $region22: #{cnnlstm_v3_forward.4} parent=0 // pred_check
    _
  $region23: #{cnnlstm_v3_forward.4} parent=0 // pred_check_branch
    %22 = sbr.rel (0) target = $region25
  $region24: #{cnnlstm_v3_forward.4} parent=0 // pred_region
    _
  $region25: #{cnnlstm_v3_forward.4} parent=0 // pred_fallthru
    _
  %v23 = vld [vmem:[%s4] sm:$0xff]
  %v24 = vld [vmem:[%s4 + $0x8] sm:$0xff]
  %v25 = vld [vmem:[%s4 + $0x10] sm:$0xff]
  %v26 = vld [vmem:[%s4 + $0x18] sm:$0xff]
  %v27 = vld [vmem:[%s4 + $0x20] sm:$0xff]
  %v28 = vld [vmem:[%s4 + $0x28] sm:$0xff]
  %v29 = vld [vmem:[%s4 + $0x30] sm:$0xff]
  %v30 = vld [vmem:[%s4 + $0x38] sm:$0xff]
  %v31 = vld [vmem:[%s4 + $0x40] sm:$0xff]
  %v32 = vld [vmem:[%s4 + $0x48] sm:$0xff]
  %v33 = vld [vmem:[%s4 + $0x50] sm:$0xff]
  %v34 = vld [vmem:[%s4 + $0x58] sm:$0xff]
  %v35 = vld [vmem:[%s4 + $0x60] sm:$0xff]
  %v36 = vld [vmem:[%s4 + $0x68] sm:$0xff]
  %v37 = vld [vmem:[%s4 + $0x70] sm:$0xff]
  %v38 = vld [vmem:[%s4 + $0x78] sm:$0xff]
  %v39 = vld [vmem:[%s4 + $0x80] sm:$0xff]
  %v40 = vld [vmem:[%s4 + $0x88] sm:$0xff]
  %v41 = vld [vmem:[%s4 + $0x90] sm:$0xff]
  %v42 = vld [vmem:[%s4 + $0x98] sm:$0xff]
  %v43 = vld [vmem:[%s4 + $0xa0] sm:$0xff]
  %v44 = vld [vmem:[%s4 + $0xa8] sm:$0xff]
  %v45 = vld [vmem:[%s4 + $0xb0] sm:$0xff]
  %v46 = vld [vmem:[%s4 + $0xb8] sm:$0xff]
  %v47 = vld [vmem:[%s4 + $0xc0] sm:$0xff]
  %v48 = vld [vmem:[%s4 + $0xc8] sm:$0xff]
  %v49 = vld [vmem:[%s4 + $0xd0] sm:$0xff]
  %v50 = vld [vmem:[%s4 + $0xd8] sm:$0xff]
  %v51 = vld [vmem:[%s4 + $0xe0] sm:$0xff]
  %v52 = vld [vmem:[%s4 + $0xe8] sm:$0xff]
  %v53 = vld [vmem:[%s4 + $0xf0] sm:$0xff]
  %v54 = vld [vmem:[%s4 + $0xf8] sm:$0xff]
  %v55 = vld [vmem:[%s4 + $0x100] sm:$0xff]
  %v56 = vld [vmem:[%s4 + $0x108] sm:$0xff]
  %v57 = vld [vmem:[%s4 + $0x110] sm:$0xff]
  %v58 = vld [vmem:[%s4 + $0x118] sm:$0xff]
  %v59 = vld [vmem:[%s4 + $0x120] sm:$0xff]
  %v60 = vld [vmem:[%s4 + $0x128] sm:$0xff]
  %v61 = vld [vmem:[%s4 + $0x130] sm:$0xff]
  %v62 = vld [vmem:[%s4 + $0x138] sm:$0xff]
  %v63 = vld [vmem:[%s4 + $0x140] sm:$0xff]
  %v64 = vld [vmem:[%s4 + $0x148] sm:$0xff]
  %v65 = vld [vmem:[%s4 + $0x150] sm:$0xff]
  %v66 = vld [vmem:[%s4 + $0x158] sm:$0xff]
  %v67 = vld [vmem:[%s4 + $0x160] sm:$0xff]
  %v68 = vld [vmem:[%s4 + $0x168] sm:$0xff]
  %v69 = vld [vmem:[%s4 + $0x170] sm:$0xff]
  %v70 = vld [vmem:[%s4 + $0x178] sm:$0xff]
  %v71 = vld [vmem:[%s4 + $0x180] sm:$0xff]
  %v72 = vld [vmem:[%s4 + $0x188] sm:$0xff]
  %v73 = vld [vmem:[%s0] sm:$0xff]
  %v74 = vld [vmem:[%s0 + $0x8] sm:$0xff]
  %v75 = vld [vmem:[%s0 + $0x10] sm:$0xff]
  %v76 = vld [vmem:[%s0 + $0x18] sm:$0xff]
  %v77 = vld [vmem:[%s0 + $0x20] sm:$0xff]
  %v78 = vld [vmem:[%s0 + $0x28] sm:$0xff]
  %v79 = vld [vmem:[%s0 + $0x30] sm:$0xff]
  %v80 = vld [vmem:[%s0 + $0x38] sm:$0xff]
  %v81 = vld [vmem:[%s0 + $0x40] sm:$0xff]
  %v82 = vld [vmem:[%s0 + $0x48] sm:$0xff]
  %v83 = vld [vmem:[%s0 + $0x50] sm:$0xff]
  %v84 = vld [vmem:[%s0 + $0x58] sm:$0xff]
  %v85 = vld [vmem:[%s0 + $0x60] sm:$0xff]
  %v86 = vld [vmem:[%s0 + $0x68] sm:$0xff]
  %v87 = vld [vmem:[%s0 + $0x70] sm:$0xff]
  %v88 = vld [vmem:[%s0 + $0x78] sm:$0xff]
  %vm89 = vcmask 130048
  %v91 = vsel %vm89, %v76, 0
  %v94 = vsel %vm89, %v80, 0
  %v97 = vsel %vm89, %v84, 0
  %v100 = vsel %vm89, %v88, 0
  %102 = vmatprep.subr.mxu0 0.0
  %103 = vmatpush1.msra.mxu0 %v23
  %104 = vmatprep.subr.mxu0 0.0
  %105 = vmatpush1.msra.mxu0 %v24
  %106 = vmatprep.subr.mxu0 0.0
  %107 = vmatpush1.msra.mxu0 %v25
  %108 = vmatprep.subr.mxu0 0.0
  %109 = vmatpush1.msra.mxu0 %v26
  %110 = vmatprep.subr.mxu0 0.0
  %111 = vmatpush1.msra.mxu0 %v27
  %112 = vmatprep.subr.mxu0 0.0
  %113 = vmatpush1.msra.mxu0 %v28
  %114 = vmatprep.subr.mxu0 0.0
  %115 = vmatpush1.msra.mxu0 %v29
  %116 = vmatprep.subr.mxu0 0.0
  %117 = vmatpush1.msra.mxu0 %v30
  %118 = vmatprep.subr.mxu0 0.0
  %119 = vmatpush1.msra.mxu0 %v31
  %120 = vmatprep.subr.mxu0 0.0
  %121 = vmatpush1.msra.mxu0 %v32
  %122 = vmatprep.subr.mxu0 0.0
  %123 = vmatpush1.msra.mxu0 %v33
  %124 = vmatprep.subr.mxu0 0.0
  %125 = vmatpush1.msra.mxu0 %v34
  %126 = vmatprep.subr.mxu0 0.0
  %127 = vmatpush1.msra.mxu0 %v35
  %128 = vmatprep.subr.mxu0 0.0
  %129 = vmatpush1.msra.mxu0 %v36
  %130 = vmatprep.subr.mxu0 0.0
  %131 = vmatpush1.msra.mxu0 %v37
  %132 = vmatprep.subr.mxu0 0.0
  %133 = vmatpush1.msra.mxu0 %v38
  %134 = vmatprep.subr.mxu0 0.0
  %135 = vmatpush1.msra.mxu0 %v39
  %136 = vmatprep.subr.mxu0 0.0
  %137 = vmatpush1.msra.mxu0 %v40
  %138 = vmatprep.subr.mxu0 0.0
  %139 = vmatpush1.msra.mxu0 %v41
  %140 = vmatprep.subr.mxu0 0.0
  %141 = vmatpush1.msra.mxu0 %v42
  %142 = vmatprep.subr.mxu0 0.0
  %143 = vmatpush1.msra.mxu0 %v43
  %144 = vmatprep.subr.mxu0 0.0
  %145 = vmatpush1.msra.mxu0 %v44
  %146 = vmatprep.subr.mxu0 0.0
  %147 = vmatpush1.msra.mxu0 %v45
  %148 = vmatprep.subr.mxu0 0.0
  %149 = vmatpush1.msra.mxu0 %v46
  %150 = vmatprep.subr.mxu0 0.0
  %151 = vmatpush1.msra.mxu0 %v47
  %152 = vmatprep.subr.mxu0 0.0
  %153 = vmatpush1.msra.mxu0 %v48
  %154 = vmatprep.subr.mxu0 0.0
  %155 = vmatpush1.msra.mxu0 %v49
  %156 = vmatprep.subr.mxu0 0.0
  %157 = vmatpush1.msra.mxu0 %v50
  %158 = vmatprep.subr.mxu0 0.0
  %159 = vmatpush1.msra.mxu0 %v51
  %160 = vmatprep.subr.mxu0 0.0
  %161 = vmatpush1.msra.mxu0 %v52
  %162 = vmatprep.subr.mxu0 0.0
  %163 = vmatpush1.msra.mxu0 %v53
  %164 = vmatprep.subr.mxu0 0.0
  %165 = vmatpush1.msra.mxu0 %v54
  %166 = vmatprep.mubr.f32.mxu0 %v74
  %167 = vmatmul.mubr.f32.gmra.mrb[0].mxu0 %v73
  %v168 = vpop.f32.mrb[0].mxu0
  %v169 = vadd.f32 0.0, %v168
  %v170 = vpop.f32.mrb[0].mxu0
  %171 = vmatprep.mubr.f32.mxu0 %v78
  %172 = vmatmul.mubr.f32.gmra.mrb[0].mxu0 %v77
  %v173 = vpop.f32.mrb[0].mxu0
  %v174 = vadd.f32 0.0, %v173
  %v175 = vpop.f32.mrb[0].mxu0
  %176 = vmatprep.mubr.f32.mxu0 %v82
  %177 = vmatmul.mubr.f32.gmra.mrb[0].mxu0 %v81
  %v178 = vpop.f32.mrb[0].mxu0
  %v179 = vadd.f32 0.0, %v178
  %v180 = vpop.f32.mrb[0].mxu0
  %181 = vmatprep.mubr.f32.mxu0 %v86
  %182 = vmatmul.mubr.f32.gmra.mrb[0].mxu0 %v85
  %v183 = vpop.f32.mrb[0].mxu0
  %v184 = vadd.f32 0.0, %v183
  %v185 = vpop.f32.mrb[0].mxu0
  %186 = vdwg.mxu0
  %187 = vmatprep.subr.mxu0 0.0
  %188 = vmatpush1.msra.mxu0 %v55
  %189 = vmatprep.subr.mxu0 0.0
  %190 = vmatpush1.msra.mxu0 %v56
  %191 = vmatprep.subr.mxu0 0.0
  %192 = vmatpush1.msra.mxu0 %v57
  %193 = vmatprep.subr.mxu0 0.0
  %194 = vmatpush1.msra.mxu0 %v58
  %195 = vmatprep.subr.mxu0 0.0
  %196 = vmatpush1.msra.mxu0 %v59
  %197 = vmatprep.subr.mxu0 0.0
  %198 = vmatpush1.msra.mxu0 %v60
  %199 = vmatprep.subr.mxu0 0.0
  %200 = vmatpush1.msra.mxu0 %v61
  %201 = vmatprep.subr.mxu0 0.0
  %202 = vmatpush1.msra.mxu0 %v62
  %203 = vmatprep.subr.mxu0 0.0
  %204 = vmatpush1.msra.mxu0 %v63
  %205 = vmatprep.subr.mxu0 0.0
  %206 = vmatpush1.msra.mxu0 %v64
  %207 = vmatprep.subr.mxu0 0.0
  %208 = vmatpush1.msra.mxu0 %v65
  %209 = vmatprep.subr.mxu0 0.0
  %210 = vmatpush1.msra.mxu0 %v66
  %211 = vmatprep.subr.mxu0 0.0
  %212 = vmatpush1.msra.mxu0 %v67
  %213 = vmatprep.subr.mxu0 0.0
  %214 = vmatpush1.msra.mxu0 %v68
  %215 = vmatprep.subr.mxu0 0.0
  %216 = vmatpush1.msra.mxu0 %v69
  %217 = vmatprep.subr.mxu0 0.0
  %218 = vmatpush1.msra.mxu0 %v70
  %219 = vmatprep.subr.mxu0 0.0
  %220 = vmatpush1.msra.mxu0 %v71
  %221 = vmatprep.subr.mxu0 0.0
  %222 = vmatpush1.msra.mxu0 %v72
  %223 = vmatprep.subr.mxu0 0.0
  %224 = vmatpush1.msra.mxu0 0.0
  %225 = vmatprep.subr.mxu0 0.0
  %226 = vmatpush1.msra.mxu0 0.0
  %227 = vmatprep.subr.mxu0 0.0
  %228 = vmatpush1.msra.mxu0 0.0
  %229 = vmatprep.subr.mxu0 0.0
  %230 = vmatpush1.msra.mxu0 0.0
  %231 = vmatprep.subr.mxu0 0.0
  %232 = vmatpush1.msra.mxu0 0.0
  %233 = vmatprep.subr.mxu0 0.0
  %234 = vmatpush1.msra.mxu0 0.0
  %235 = vmatprep.subr.mxu0 0.0
  %236 = vmatpush1.msra.mxu0 0.0
  %237 = vmatprep.subr.mxu0 0.0
  %238 = vmatpush1.msra.mxu0 0.0
  %239 = vmatprep.subr.mxu0 0.0
  %240 = vmatpush1.msra.mxu0 0.0
  %241 = vmatprep.subr.mxu0 0.0
  %242 = vmatpush1.msra.mxu0 0.0
  %243 = vmatprep.subr.mxu0 0.0
  %244 = vmatpush1.msra.mxu0 0.0
  %245 = vmatprep.subr.mxu0 0.0
  %246 = vmatpush1.msra.mxu0 0.0
  %247 = vmatprep.subr.mxu0 0.0
  %248 = vmatpush1.msra.mxu0 0.0
  %249 = vmatprep.subr.mxu0 0.0
  %250 = vmatpush1.msra.mxu0 0.0
  %251 = vmatprep.mubr.f32.mxu0 %v91
  %252 = vmatmul.mubr.f32.gmra.mrb[0].mxu0 %v75
  %v253 = vpop.f32.mrb[0].mxu0
  %v254 = vadd.f32 %v169, %v253
  %v255 = vpop.f32.mrb[0].mxu0
  %256 = vmatprep.mubr.f32.mxu0 %v94
  %257 = vmatmul.mubr.f32.gmra.mrb[0].mxu0 %v79
  %v258 = vpop.f32.mrb[0].mxu0
  %v259 = vadd.f32 %v174, %v258
  %v260 = vpop.f32.mrb[0].mxu0
  %261 = vmatprep.mubr.f32.mxu0 %v97
  %262 = vmatmul.mubr.f32.gmra.mrb[0].mxu0 %v83
  %v263 = vpop.f32.mrb[0].mxu0
  %v264 = vadd.f32 %v179, %v263
  %v265 = vpop.f32.mrb[0].mxu0
  %266 = vmatprep.mubr.f32.mxu0 %v100
  %267 = vmatmul.mubr.f32.gmra.mrb[0].mxu0 %v87
  %v268 = vpop.f32.mrb[0].mxu0
  %v269 = vadd.f32 %v184, %v268
  %v270 = vpop.f32.mrb[0].mxu0
  %271 = vdwg.mxu0
  %v272 = vld [vmem:[%s1] sm:$0xff]
  %v273 = vld [vmem:[%s1 + $0x8] sm:$0xff]
  %v274 = vld [vmem:[%s1 + $0x10] sm:$0xff]
  %v275 = vld [vmem:[%s1 + $0x18] sm:$0xff]
  %v276 = vld [vmem:[%s1 + $0x20] sm:$0xff]
  %v277 = vld [vmem:[%s1 + $0x28] sm:$0xff]
  %v278 = vld [vmem:[%s1 + $0x30] sm:$0xff]
  %v279 = vld [vmem:[%s1 + $0x38] sm:$0xff]
  %v280 = vld [vmem:[%s1 + $0x40] sm:$0xff]
  %v281 = vld [vmem:[%s1 + $0x48] sm:$0xff]
  %v282 = vld [vmem:[%s1 + $0x50] sm:$0xff]
  %v283 = vld [vmem:[%s1 + $0x58] sm:$0xff]
  %v284 = vld [vmem:[%s1 + $0x60] sm:$0xff]
  %v285 = vld [vmem:[%s1 + $0x68] sm:$0xff]
  %v286 = vld [vmem:[%s1 + $0x70] sm:$0xff]
  %v287 = vld [vmem:[%s1 + $0x78] sm:$0xff]
  %v289 = vsel %vm89, %v275, 0
  %v292 = vsel %vm89, %v279, 0
  %v295 = vsel %vm89, %v283, 0
  %v298 = vsel %vm89, %v287, 0
  %300 = vmatprep.subr.mxu0 0.0
  %301 = vmatpush1.msra.mxu0 %v23
  %302 = vmatprep.subr.mxu0 0.0
  %303 = vmatpush1.msra.mxu0 %v24
  %304 = vmatprep.subr.mxu0 0.0
  %305 = vmatpush1.msra.mxu0 %v25
  %306 = vmatprep.subr.mxu0 0.0
  %307 = vmatpush1.msra.mxu0 %v26
  %308 = vmatprep.subr.mxu0 0.0
  %309 = vmatpush1.msra.mxu0 %v27
  %310 = vmatprep.subr.mxu0 0.0
  %311 = vmatpush1.msra.mxu0 %v28
  %312 = vmatprep.subr.mxu0 0.0
  %313 = vmatpush1.msra.mxu0 %v29
  %314 = vmatprep.subr.mxu0 0.0
  %315 = vmatpush1.msra.mxu0 %v30
  %316 = vmatprep.subr.mxu0 0.0
  %317 = vmatpush1.msra.mxu0 %v31
  %318 = vmatprep.subr.mxu0 0.0
  %319 = vmatpush1.msra.mxu0 %v32
  %320 = vmatprep.subr.mxu0 0.0
  %321 = vmatpush1.msra.mxu0 %v33
  %322 = vmatprep.subr.mxu0 0.0
  %323 = vmatpush1.msra.mxu0 %v34
  %324 = vmatprep.subr.mxu0 0.0
  %325 = vmatpush1.msra.mxu0 %v35
  %326 = vmatprep.subr.mxu0 0.0
  %327 = vmatpush1.msra.mxu0 %v36
  %328 = vmatprep.subr.mxu0 0.0
  %329 = vmatpush1.msra.mxu0 %v37
  %330 = vmatprep.subr.mxu0 0.0
  %331 = vmatpush1.msra.mxu0 %v38
  %332 = vmatprep.subr.mxu0 0.0
  %333 = vmatpush1.msra.mxu0 %v39
  %334 = vmatprep.subr.mxu0 0.0
  %335 = vmatpush1.msra.mxu0 %v40
  %336 = vmatprep.subr.mxu0 0.0
  %337 = vmatpush1.msra.mxu0 %v41
  %338 = vmatprep.subr.mxu0 0.0
  %339 = vmatpush1.msra.mxu0 %v42
  %340 = vmatprep.subr.mxu0 0.0
  %341 = vmatpush1.msra.mxu0 %v43
  %342 = vmatprep.subr.mxu0 0.0
  %343 = vmatpush1.msra.mxu0 %v44
  %344 = vmatprep.subr.mxu0 0.0
  %345 = vmatpush1.msra.mxu0 %v45
  %346 = vmatprep.subr.mxu0 0.0
  %347 = vmatpush1.msra.mxu0 %v46
  %348 = vmatprep.subr.mxu0 0.0
  %349 = vmatpush1.msra.mxu0 %v47
  %350 = vmatprep.subr.mxu0 0.0
  %351 = vmatpush1.msra.mxu0 %v48
  %352 = vmatprep.subr.mxu0 0.0
  %353 = vmatpush1.msra.mxu0 %v49
  %354 = vmatprep.subr.mxu0 0.0
  %355 = vmatpush1.msra.mxu0 %v50
  %356 = vmatprep.subr.mxu0 0.0
  %357 = vmatpush1.msra.mxu0 %v51
  %358 = vmatprep.subr.mxu0 0.0
  %359 = vmatpush1.msra.mxu0 %v52
  %360 = vmatprep.subr.mxu0 0.0
  %361 = vmatpush1.msra.mxu0 %v53
  %362 = vmatprep.subr.mxu0 0.0
  %363 = vmatpush1.msra.mxu0 %v54
  %364 = vmatprep.mubr.f32.mxu0 %v273
  %365 = vmatmul.mubr.f32.gmra.mrb[0].mxu0 %v272
  %v366 = vpop.f32.mrb[0].mxu0
  %v367 = vadd.f32 0.0, %v366
  %v368 = vpop.f32.mrb[0].mxu0
  %369 = vmatprep.mubr.f32.mxu0 %v277
  %370 = vmatmul.mubr.f32.gmra.mrb[0].mxu0 %v276
  %v371 = vpop.f32.mrb[0].mxu0
  %v372 = vadd.f32 0.0, %v371
  %v373 = vpop.f32.mrb[0].mxu0
  %374 = vmatprep.mubr.f32.mxu0 %v281
  %375 = vmatmul.mubr.f32.gmra.mrb[0].mxu0 %v280
  %v376 = vpop.f32.mrb[0].mxu0
  %v377 = vadd.f32 0.0, %v376
  %v378 = vpop.f32.mrb[0].mxu0
  %379 = vmatprep.mubr.f32.mxu0 %v285
  %380 = vmatmul.mubr.f32.gmra.mrb[0].mxu0 %v284
  %v381 = vpop.f32.mrb[0].mxu0
  %v382 = vadd.f32 0.0, %v381
  %v383 = vpop.f32.mrb[0].mxu0
  %384 = vdwg.mxu0
  %385 = vmatprep.subr.mxu0 0.0
  %386 = vmatpush1.msra.mxu0 %v55
  %387 = vmatprep.subr.mxu0 0.0
  %388 = vmatpush1.msra.mxu0 %v56
  %389 = vmatprep.subr.mxu0 0.0
  %390 = vmatpush1.msra.mxu0 %v57
  %391 = vmatprep.subr.mxu0 0.0
  %392 = vmatpush1.msra.mxu0 %v58
  %393 = vmatprep.subr.mxu0 0.0
  %394 = vmatpush1.msra.mxu0 %v59
  %395 = vmatprep.subr.mxu0 0.0
  %396 = vmatpush1.msra.mxu0 %v60
  %397 = vmatprep.subr.mxu0 0.0
  %398 = vmatpush1.msra.mxu0 %v61
  %399 = vmatprep.subr.mxu0 0.0
  %400 = vmatpush1.msra.mxu0 %v62
  %401 = vmatprep.subr.mxu0 0.0
  %402 = vmatpush1.msra.mxu0 %v63
  %403 = vmatprep.subr.mxu0 0.0
  %404 = vmatpush1.msra.mxu0 %v64
  %405 = vmatprep.subr.mxu0 0.0
  %406 = vmatpush1.msra.mxu0 %v65
  %407 = vmatprep.subr.mxu0 0.0
  %408 = vmatpush1.msra.mxu0 %v66
  %409 = vmatprep.subr.mxu0 0.0
  %410 = vmatpush1.msra.mxu0 %v67
  %411 = vmatprep.subr.mxu0 0.0
  %412 = vmatpush1.msra.mxu0 %v68
  %413 = vmatprep.subr.mxu0 0.0
  %414 = vmatpush1.msra.mxu0 %v69
  %415 = vmatprep.subr.mxu0 0.0
  %416 = vmatpush1.msra.mxu0 %v70
  %417 = vmatprep.subr.mxu0 0.0
  %418 = vmatpush1.msra.mxu0 %v71
  %419 = vmatprep.subr.mxu0 0.0
  %420 = vmatpush1.msra.mxu0 %v72
  %421 = vmatprep.subr.mxu0 0.0
  %422 = vmatpush1.msra.mxu0 0.0
  %423 = vmatprep.subr.mxu0 0.0
  %424 = vmatpush1.msra.mxu0 0.0
  %425 = vmatprep.subr.mxu0 0.0
  %426 = vmatpush1.msra.mxu0 0.0
  %427 = vmatprep.subr.mxu0 0.0
  %428 = vmatpush1.msra.mxu0 0.0
  %429 = vmatprep.subr.mxu0 0.0
  %430 = vmatpush1.msra.mxu0 0.0
  %431 = vmatprep.subr.mxu0 0.0
  %432 = vmatpush1.msra.mxu0 0.0
  %433 = vmatprep.subr.mxu0 0.0
  %434 = vmatpush1.msra.mxu0 0.0
  %435 = vmatprep.subr.mxu0 0.0
  %436 = vmatpush1.msra.mxu0 0.0
  %437 = vmatprep.subr.mxu0 0.0
  %438 = vmatpush1.msra.mxu0 0.0
  %439 = vmatprep.subr.mxu0 0.0
  %440 = vmatpush1.msra.mxu0 0.0
  %441 = vmatprep.subr.mxu0 0.0
  %442 = vmatpush1.msra.mxu0 0.0
  %443 = vmatprep.subr.mxu0 0.0
  %444 = vmatpush1.msra.mxu0 0.0
  %445 = vmatprep.subr.mxu0 0.0
  %446 = vmatpush1.msra.mxu0 0.0
  %447 = vmatprep.subr.mxu0 0.0
  %448 = vmatpush1.msra.mxu0 0.0
  %449 = vmatprep.mubr.f32.mxu0 %v289
  %450 = vmatmul.mubr.f32.gmra.mrb[0].mxu0 %v274
  %v451 = vpop.f32.mrb[0].mxu0
  %v452 = vadd.f32 %v367, %v451
  %v453 = vpop.f32.mrb[0].mxu0
  %454 = vmatprep.mubr.f32.mxu0 %v292
  %455 = vmatmul.mubr.f32.gmra.mrb[0].mxu0 %v278
  %v456 = vpop.f32.mrb[0].mxu0
  %v457 = vadd.f32 %v372, %v456
  %v458 = vpop.f32.mrb[0].mxu0
  %459 = vmatprep.mubr.f32.mxu0 %v295
  %460 = vmatmul.mubr.f32.gmra.mrb[0].mxu0 %v282
  %v461 = vpop.f32.mrb[0].mxu0
  %v462 = vadd.f32 %v377, %v461
  %v463 = vpop.f32.mrb[0].mxu0
  %464 = vmatprep.mubr.f32.mxu0 %v298
  %465 = vmatmul.mubr.f32.gmra.mrb[0].mxu0 %v286
  %v466 = vpop.f32.mrb[0].mxu0
  %v467 = vadd.f32 %v382, %v466
  %v468 = vpop.f32.mrb[0].mxu0
  %469 = vdwg.mxu0
  %v470 = vld [vmem:[%s2] sm:$0xff]
  %v471 = vld [vmem:[%s2 + $0x8] sm:$0xff]
  %v472 = vld [vmem:[%s2 + $0x10] sm:$0xff]
  %v473 = vld [vmem:[%s2 + $0x18] sm:$0xff]
  %v474 = vld [vmem:[%s2 + $0x20] sm:$0xff]
  %v475 = vld [vmem:[%s2 + $0x28] sm:$0xff]
  %v476 = vld [vmem:[%s2 + $0x30] sm:$0xff]
  %v477 = vld [vmem:[%s2 + $0x38] sm:$0xff]
  %v478 = vld [vmem:[%s2 + $0x40] sm:$0xff]
  %v479 = vld [vmem:[%s2 + $0x48] sm:$0xff]
  %v480 = vld [vmem:[%s2 + $0x50] sm:$0xff]
  %v481 = vld [vmem:[%s2 + $0x58] sm:$0xff]
  %v482 = vld [vmem:[%s2 + $0x60] sm:$0xff]
  %v483 = vld [vmem:[%s2 + $0x68] sm:$0xff]
  %v484 = vld [vmem:[%s2 + $0x70] sm:$0xff]
  %v485 = vld [vmem:[%s2 + $0x78] sm:$0xff]
  %v487 = vsel %vm89, %v473, 0
  %v490 = vsel %vm89, %v477, 0
  %v493 = vsel %vm89, %v481, 0
  %v496 = vsel %vm89, %v485, 0
  %498 = vmatprep.subr.mxu0 0.0
  %499 = vmatpush1.msra.mxu0 %v23
  %500 = vmatprep.subr.mxu0 0.0
  %501 = vmatpush1.msra.mxu0 %v24
  %502 = vmatprep.subr.mxu0 0.0
  %503 = vmatpush1.msra.mxu0 %v25
  %504 = vmatprep.subr.mxu0 0.0
  %505 = vmatpush1.msra.mxu0 %v26
  %506 = vmatprep.subr.mxu0 0.0
  %507 = vmatpush1.msra.mxu0 %v27
  %508 = vmatprep.subr.mxu0 0.0
  %509 = vmatpush1.msra.mxu0 %v28
  %510 = vmatprep.subr.mxu0 0.0
  %511 = vmatpush1.msra.mxu0 %v29
  %512 = vmatprep.subr.mxu0 0.0
  %513 = vmatpush1.msra.mxu0 %v30
  %514 = vmatprep.subr.mxu0 0.0
  %515 = vmatpush1.msra.mxu0 %v31
  %516 = vmatprep.subr.mxu0 0.0
  %517 = vmatpush1.msra.mxu0 %v32
  %518 = vmatprep.subr.mxu0 0.0
  %519 = vmatpush1.msra.mxu0 %v33
  %520 = vmatprep.subr.mxu0 0.0
  %521 = vmatpush1.msra.mxu0 %v34
  %522 = vmatprep.subr.mxu0 0.0
  %523 = vmatpush1.msra.mxu0 %v35
  %524 = vmatprep.subr.mxu0 0.0
  %525 = vmatpush1.msra.mxu0 %v36
  %526 = vmatprep.subr.mxu0 0.0
  %527 = vmatpush1.msra.mxu0 %v37
  %528 = vmatprep.subr.mxu0 0.0
  %529 = vmatpush1.msra.mxu0 %v38
  %530 = vmatprep.subr.mxu0 0.0
  %531 = vmatpush1.msra.mxu0 %v39
  %532 = vmatprep.subr.mxu0 0.0
  %533 = vmatpush1.msra.mxu0 %v40
  %534 = vmatprep.subr.mxu0 0.0
  %535 = vmatpush1.msra.mxu0 %v41
  %536 = vmatprep.subr.mxu0 0.0
  %537 = vmatpush1.msra.mxu0 %v42
  %538 = vmatprep.subr.mxu0 0.0
  %539 = vmatpush1.msra.mxu0 %v43
  %540 = vmatprep.subr.mxu0 0.0
  %541 = vmatpush1.msra.mxu0 %v44
  %542 = vmatprep.subr.mxu0 0.0
  %543 = vmatpush1.msra.mxu0 %v45
  %544 = vmatprep.subr.mxu0 0.0
  %545 = vmatpush1.msra.mxu0 %v46
  %546 = vmatprep.subr.mxu0 0.0
  %547 = vmatpush1.msra.mxu0 %v47
  %548 = vmatprep.subr.mxu0 0.0
  %549 = vmatpush1.msra.mxu0 %v48
  %550 = vmatprep.subr.mxu0 0.0
  %551 = vmatpush1.msra.mxu0 %v49
  %552 = vmatprep.subr.mxu0 0.0
  %553 = vmatpush1.msra.mxu0 %v50
  %554 = vmatprep.subr.mxu0 0.0
  %555 = vmatpush1.msra.mxu0 %v51
  %556 = vmatprep.subr.mxu0 0.0
  %557 = vmatpush1.msra.mxu0 %v52
  %558 = vmatprep.subr.mxu0 0.0
  %559 = vmatpush1.msra.mxu0 %v53
  %560 = vmatprep.subr.mxu0 0.0
  %561 = vmatpush1.msra.mxu0 %v54
  %562 = vmatprep.mubr.f32.mxu0 %v471
  %563 = vmatmul.mubr.f32.gmra.mrb[0].mxu0 %v470
  %v564 = vpop.f32.mrb[0].mxu0
  %v565 = vadd.f32 0.0, %v564
  %v566 = vpop.f32.mrb[0].mxu0
  %567 = vmatprep.mubr.f32.mxu0 %v475
  %568 = vmatmul.mubr.f32.gmra.mrb[0].mxu0 %v474
  %v569 = vpop.f32.mrb[0].mxu0
  %v570 = vadd.f32 0.0, %v569
  %v571 = vpop.f32.mrb[0].mxu0
  %572 = vmatprep.mubr.f32.mxu0 %v479
  %573 = vmatmul.mubr.f32.gmra.mrb[0].mxu0 %v478
  %v574 = vpop.f32.mrb[0].mxu0
  %v575 = vadd.f32 0.0, %v574
  %v576 = vpop.f32.mrb[0].mxu0
  %577 = vmatprep.mubr.f32.mxu0 %v483
  %578 = vmatmul.mubr.f32.gmra.mrb[0].mxu0 %v482
  %v579 = vpop.f32.mrb[0].mxu0
  %v580 = vadd.f32 0.0, %v579
  %v581 = vpop.f32.mrb[0].mxu0
  %582 = vdwg.mxu0
  %583 = vmatprep.subr.mxu0 0.0
  %584 = vmatpush1.msra.mxu0 %v55
  %585 = vmatprep.subr.mxu0 0.0
  %586 = vmatpush1.msra.mxu0 %v56
  %587 = vmatprep.subr.mxu0 0.0
  %588 = vmatpush1.msra.mxu0 %v57
  %589 = vmatprep.subr.mxu0 0.0
  %590 = vmatpush1.msra.mxu0 %v58
  %591 = vmatprep.subr.mxu0 0.0
  %592 = vmatpush1.msra.mxu0 %v59
  %593 = vmatprep.subr.mxu0 0.0
  %594 = vmatpush1.msra.mxu0 %v60
  %595 = vmatprep.subr.mxu0 0.0
  %596 = vmatpush1.msra.mxu0 %v61
  %597 = vmatprep.subr.mxu0 0.0
  %598 = vmatpush1.msra.mxu0 %v62
  %599 = vmatprep.subr.mxu0 0.0
  %600 = vmatpush1.msra.mxu0 %v63
  %601 = vmatprep.subr.mxu0 0.0
  %602 = vmatpush1.msra.mxu0 %v64
  %603 = vmatprep.subr.mxu0 0.0
  %604 = vmatpush1.msra.mxu0 %v65
  %605 = vmatprep.subr.mxu0 0.0
  %606 = vmatpush1.msra.mxu0 %v66
  %607 = vmatprep.subr.mxu0 0.0
  %608 = vmatpush1.msra.mxu0 %v67
  %609 = vmatprep.subr.mxu0 0.0
  %610 = vmatpush1.msra.mxu0 %v68
  %611 = vmatprep.subr.mxu0 0.0
  %612 = vmatpush1.msra.mxu0 %v69
  %613 = vmatprep.subr.mxu0 0.0
  %614 = vmatpush1.msra.mxu0 %v70
  %615 = vmatprep.subr.mxu0 0.0
  %616 = vmatpush1.msra.mxu0 %v71
  %617 = vmatprep.subr.mxu0 0.0
  %618 = vmatpush1.msra.mxu0 %v72
  %619 = vmatprep.subr.mxu0 0.0
  %620 = vmatpush1.msra.mxu0 0.0
  %621 = vmatprep.subr.mxu0 0.0
  %622 = vmatpush1.msra.mxu0 0.0
  %623 = vmatprep.subr.mxu0 0.0
  %624 = vmatpush1.msra.mxu0 0.0
  %625 = vmatprep.subr.mxu0 0.0
  %626 = vmatpush1.msra.mxu0 0.0
  %627 = vmatprep.subr.mxu0 0.0
  %628 = vmatpush1.msra.mxu0 0.0
  %629 = vmatprep.subr.mxu0 0.0
  %630 = vmatpush1.msra.mxu0 0.0
  %631 = vmatprep.subr.mxu0 0.0
  %632 = vmatpush1.msra.mxu0 0.0
  %633 = vmatprep.subr.mxu0 0.0
  %634 = vmatpush1.msra.mxu0 0.0
  %635 = vmatprep.subr.mxu0 0.0
  %636 = vmatpush1.msra.mxu0 0.0
  %637 = vmatprep.subr.mxu0 0.0
  %638 = vmatpush1.msra.mxu0 0.0
  %639 = vmatprep.subr.mxu0 0.0
  %640 = vmatpush1.msra.mxu0 0.0
  %641 = vmatprep.subr.mxu0 0.0
  %642 = vmatpush1.msra.mxu0 0.0
  %643 = vmatprep.subr.mxu0 0.0
  %644 = vmatpush1.msra.mxu0 0.0
  %645 = vmatprep.subr.mxu0 0.0
  %646 = vmatpush1.msra.mxu0 0.0
  %647 = vmatprep.mubr.f32.mxu0 %v487
  %648 = vmatmul.mubr.f32.gmra.mrb[0].mxu0 %v472
  %v649 = vpop.f32.mrb[0].mxu0
  %v650 = vadd.f32 %v565, %v649
  %v651 = vpop.f32.mrb[0].mxu0
  %652 = vmatprep.mubr.f32.mxu0 %v490
  %653 = vmatmul.mubr.f32.gmra.mrb[0].mxu0 %v476
  %v654 = vpop.f32.mrb[0].mxu0
  %v655 = vadd.f32 %v570, %v654
  %v656 = vpop.f32.mrb[0].mxu0
  %657 = vmatprep.mubr.f32.mxu0 %v493
  %658 = vmatmul.mubr.f32.gmra.mrb[0].mxu0 %v480
  %v659 = vpop.f32.mrb[0].mxu0
  %v660 = vadd.f32 %v575, %v659
  %v661 = vpop.f32.mrb[0].mxu0
  %662 = vmatprep.mubr.f32.mxu0 %v496
  %663 = vmatmul.mubr.f32.gmra.mrb[0].mxu0 %v484
  %v664 = vpop.f32.mrb[0].mxu0
  %v665 = vadd.f32 %v580, %v664
  %v666 = vpop.f32.mrb[0].mxu0
  %667 = vdwg.mxu0
  %v668 = vld [vmem:[%s3] sm:$0xff]
  %v669 = vld [vmem:[%s3 + $0x8] sm:$0xff]
  %v670 = vld [vmem:[%s3 + $0x10] sm:$0xff]
  %v671 = vld [vmem:[%s3 + $0x18] sm:$0xff]
  %v672 = vld [vmem:[%s3 + $0x20] sm:$0xff]
  %v673 = vld [vmem:[%s3 + $0x28] sm:$0xff]
  %v674 = vld [vmem:[%s3 + $0x30] sm:$0xff]
  %v675 = vld [vmem:[%s3 + $0x38] sm:$0xff]
  %v676 = vld [vmem:[%s3 + $0x40] sm:$0xff]
  %v677 = vld [vmem:[%s3 + $0x48] sm:$0xff]
  %v678 = vld [vmem:[%s3 + $0x50] sm:$0xff]
  %v679 = vld [vmem:[%s3 + $0x58] sm:$0xff]
  %v680 = vld [vmem:[%s3 + $0x60] sm:$0xff]
  %v681 = vld [vmem:[%s3 + $0x68] sm:$0xff]
  %v682 = vld [vmem:[%s3 + $0x70] sm:$0xff]
  %v683 = vld [vmem:[%s3 + $0x78] sm:$0xff]
  %v685 = vsel %vm89, %v671, 0
  %v688 = vsel %vm89, %v675, 0
  %v691 = vsel %vm89, %v679, 0
  %v694 = vsel %vm89, %v683, 0
  %696 = vmatprep.subr.mxu0 0.0
  %697 = vmatpush1.msra.mxu0 %v23
  %698 = vmatprep.subr.mxu0 0.0
  %699 = vmatpush1.msra.mxu0 %v24
  %700 = vmatprep.subr.mxu0 0.0
  %701 = vmatpush1.msra.mxu0 %v25
  %702 = vmatprep.subr.mxu0 0.0
  %703 = vmatpush1.msra.mxu0 %v26
  %704 = vmatprep.subr.mxu0 0.0
  %705 = vmatpush1.msra.mxu0 %v27
  %706 = vmatprep.subr.mxu0 0.0
  %707 = vmatpush1.msra.mxu0 %v28
  %708 = vmatprep.subr.mxu0 0.0
  %709 = vmatpush1.msra.mxu0 %v29
  %710 = vmatprep.subr.mxu0 0.0
  %711 = vmatpush1.msra.mxu0 %v30
  %712 = vmatprep.subr.mxu0 0.0
  %713 = vmatpush1.msra.mxu0 %v31
  %714 = vmatprep.subr.mxu0 0.0
  %715 = vmatpush1.msra.mxu0 %v32
  %716 = vmatprep.subr.mxu0 0.0
  %717 = vmatpush1.msra.mxu0 %v33
  %718 = vmatprep.subr.mxu0 0.0
  %719 = vmatpush1.msra.mxu0 %v34
  %720 = vmatprep.subr.mxu0 0.0
  %721 = vmatpush1.msra.mxu0 %v35
  %722 = vmatprep.subr.mxu0 0.0
  %723 = vmatpush1.msra.mxu0 %v36
  %724 = vmatprep.subr.mxu0 0.0
  %725 = vmatpush1.msra.mxu0 %v37
  %726 = vmatprep.subr.mxu0 0.0
  %727 = vmatpush1.msra.mxu0 %v38
  %728 = vmatprep.subr.mxu0 0.0
  %729 = vmatpush1.msra.mxu0 %v39
  %730 = vmatprep.subr.mxu0 0.0
  %731 = vmatpush1.msra.mxu0 %v40
  %732 = vmatprep.subr.mxu0 0.0
  %733 = vmatpush1.msra.mxu0 %v41
  %734 = vmatprep.subr.mxu0 0.0
  %735 = vmatpush1.msra.mxu0 %v42
  %736 = vmatprep.subr.mxu0 0.0
  %737 = vmatpush1.msra.mxu0 %v43
  %738 = vmatprep.subr.mxu0 0.0
  %739 = vmatpush1.msra.mxu0 %v44
  %740 = vmatprep.subr.mxu0 0.0
  %741 = vmatpush1.msra.mxu0 %v45
  %742 = vmatprep.subr.mxu0 0.0
  %743 = vmatpush1.msra.mxu0 %v46
  %744 = vmatprep.subr.mxu0 0.0
  %745 = vmatpush1.msra.mxu0 %v47
  %746 = vmatprep.subr.mxu0 0.0
  %747 = vmatpush1.msra.mxu0 %v48
  %748 = vmatprep.subr.mxu0 0.0
  %749 = vmatpush1.msra.mxu0 %v49
  %750 = vmatprep.subr.mxu0 0.0
  %751 = vmatpush1.msra.mxu0 %v50
  %752 = vmatprep.subr.mxu0 0.0
  %753 = vmatpush1.msra.mxu0 %v51
  %754 = vmatprep.subr.mxu0 0.0
  %755 = vmatpush1.msra.mxu0 %v52
  %756 = vmatprep.subr.mxu0 0.0
  %757 = vmatpush1.msra.mxu0 %v53
  %758 = vmatprep.subr.mxu0 0.0
  %759 = vmatpush1.msra.mxu0 %v54
  %760 = vmatprep.mubr.f32.mxu0 %v669
  %761 = vmatmul.mubr.f32.gmra.mrb[0].mxu0 %v668
  %v762 = vpop.f32.mrb[0].mxu0
  %v763 = vadd.f32 0.0, %v762
  %v764 = vpop.f32.mrb[0].mxu0
  %765 = vmatprep.mubr.f32.mxu0 %v673
  %766 = vmatmul.mubr.f32.gmra.mrb[0].mxu0 %v672
  %v767 = vpop.f32.mrb[0].mxu0
  %v768 = vadd.f32 0.0, %v767
  %v769 = vpop.f32.mrb[0].mxu0
  %770 = vmatprep.mubr.f32.mxu0 %v677
  %771 = vmatmul.mubr.f32.gmra.mrb[0].mxu0 %v676
  %v772 = vpop.f32.mrb[0].mxu0
  %v773 = vadd.f32 0.0, %v772
  %v774 = vpop.f32.mrb[0].mxu0
  %775 = vmatprep.mubr.f32.mxu0 %v681
  %776 = vmatmul.mubr.f32.gmra.mrb[0].mxu0 %v680
  %v777 = vpop.f32.mrb[0].mxu0
  %v778 = vadd.f32 0.0, %v777
  %v779 = vpop.f32.mrb[0].mxu0
  %780 = vdwg.mxu0
  %781 = vmatprep.subr.mxu0 0.0
  %782 = vmatpush1.msra.mxu0 %v55
  %783 = vmatprep.subr.mxu0 0.0
  %784 = vmatpush1.msra.mxu0 %v56
  %785 = vmatprep.subr.mxu0 0.0
  %786 = vmatpush1.msra.mxu0 %v57
  %787 = vmatprep.subr.mxu0 0.0
  %788 = vmatpush1.msra.mxu0 %v58
  %789 = vmatprep.subr.mxu0 0.0
  %790 = vmatpush1.msra.mxu0 %v59
  %791 = vmatprep.subr.mxu0 0.0
  %792 = vmatpush1.msra.mxu0 %v60
  %793 = vmatprep.subr.mxu0 0.0
  %794 = vmatpush1.msra.mxu0 %v61
  %795 = vmatprep.subr.mxu0 0.0
  %796 = vmatpush1.msra.mxu0 %v62
  %797 = vmatprep.subr.mxu0 0.0
  %798 = vmatpush1.msra.mxu0 %v63
  %799 = vmatprep.subr.mxu0 0.0
  %800 = vmatpush1.msra.mxu0 %v64
  %801 = vmatprep.subr.mxu0 0.0
  %802 = vmatpush1.msra.mxu0 %v65
  %803 = vmatprep.subr.mxu0 0.0
  %804 = vmatpush1.msra.mxu0 %v66
  %805 = vmatprep.subr.mxu0 0.0
  %806 = vmatpush1.msra.mxu0 %v67
  %807 = vmatprep.subr.mxu0 0.0
  %808 = vmatpush1.msra.mxu0 %v68
  %809 = vmatprep.subr.mxu0 0.0
  %810 = vmatpush1.msra.mxu0 %v69
  %811 = vmatprep.subr.mxu0 0.0
  %812 = vmatpush1.msra.mxu0 %v70
  %813 = vmatprep.subr.mxu0 0.0
  %814 = vmatpush1.msra.mxu0 %v71
  %815 = vmatprep.subr.mxu0 0.0
  %816 = vmatpush1.msra.mxu0 %v72
  %817 = vmatprep.subr.mxu0 0.0
  %818 = vmatpush1.msra.mxu0 0.0
  %819 = vmatprep.subr.mxu0 0.0
  %820 = vmatpush1.msra.mxu0 0.0
  %821 = vmatprep.subr.mxu0 0.0
  %822 = vmatpush1.msra.mxu0 0.0
  %823 = vmatprep.subr.mxu0 0.0
  %824 = vmatpush1.msra.mxu0 0.0
  %825 = vmatprep.subr.mxu0 0.0
  %826 = vmatpush1.msra.mxu0 0.0
  %827 = vmatprep.subr.mxu0 0.0
  %828 = vmatpush1.msra.mxu0 0.0
  %829 = vmatprep.subr.mxu0 0.0
  %830 = vmatpush1.msra.mxu0 0.0
  %831 = vmatprep.subr.mxu0 0.0
  %832 = vmatpush1.msra.mxu0 0.0
  %833 = vmatprep.subr.mxu0 0.0
  %834 = vmatpush1.msra.mxu0 0.0
  %835 = vmatprep.subr.mxu0 0.0
  %836 = vmatpush1.msra.mxu0 0.0
  %837 = vmatprep.subr.mxu0 0.0
  %838 = vmatpush1.msra.mxu0 0.0
  %839 = vmatprep.subr.mxu0 0.0
  %840 = vmatpush1.msra.mxu0 0.0
  %841 = vmatprep.subr.mxu0 0.0
  %842 = vmatpush1.msra.mxu0 0.0
  %843 = vmatprep.subr.mxu0 0.0
  %844 = vmatpush1.msra.mxu0 0.0
  %845 = vmatprep.mubr.f32.mxu0 %v685
  %846 = vmatmul.mubr.f32.gmra.mrb[0].mxu0 %v670
  %v847 = vpop.f32.mrb[0].mxu0
  %v848 = vadd.f32 %v763, %v847
  %v849 = vpop.f32.mrb[0].mxu0
  %850 = vmatprep.mubr.f32.mxu0 %v688
  %851 = vmatmul.mubr.f32.gmra.mrb[0].mxu0 %v674
  %v852 = vpop.f32.mrb[0].mxu0
  %v853 = vadd.f32 %v768, %v852
  %v854 = vpop.f32.mrb[0].mxu0
  %855 = vmatprep.mubr.f32.mxu0 %v691
  %856 = vmatmul.mubr.f32.gmra.mrb[0].mxu0 %v678
  %v857 = vpop.f32.mrb[0].mxu0
  %v858 = vadd.f32 %v773, %v857
  %v859 = vpop.f32.mrb[0].mxu0
  %860 = vmatprep.mubr.f32.mxu0 %v694
  %861 = vmatmul.mubr.f32.gmra.mrb[0].mxu0 %v682
  %v862 = vpop.f32.mrb[0].mxu0
  %v863 = vadd.f32 %v778, %v862
  %v864 = vpop.f32.mrb[0].mxu0
  %865 = vdwg.mxu0
  %v866 = vmax.f32 %v254, %v452
  %v867 = vmax.f32 %v259, %v457
  %v868 = vmax.f32 %v264, %v462
  %v869 = vmax.f32 %v269, %v467
  %v870 = vmax.f32 %v650, %v848
  %v871 = vmax.f32 %v655, %v853
  %v872 = vmax.f32 %v660, %v858
  %v873 = vmax.f32 %v665, %v863
  %v874 = vmax.f32 %v866, %v870
  %v875 = vmax.f32 %v867, %v871
  %v876 = vmax.f32 %v868, %v872
  %v877 = vmax.f32 %v869, %v873
  %v878 = vld [vmem:[%s5] sm:$0x1]
  %v880 = vlaneseq
  %v881 = vshrl.u32 %v880, 7
  %v882 = vsub.s32 0, %v881
  %v883 = vrot.slane %v878, %v882
  %v885 = vadd.f32 %v874, %v883
  %v886 = vadd.f32 %v875, %v883
  %v887 = vadd.f32 %v876, %v883
  %v888 = vadd.f32 %v877, %v883
  %v889 = vmax.f32 %v885, 0.0
  %v890 = vmax.f32 %v886, 0.0
  %v891 = vmax.f32 %v887, 0.0
  %v892 = vmax.f32 %v888, 0.0
  %vm893 = vcmask 261120
  %894 = vst.msk [vmem:[%s6] sm:$0xff] %vm893, %v889
  %895 = vst.msk [vmem:[%s6 + $0x8] sm:$0xff] %vm893, %v890
  %896 = vst.msk [vmem:[%s6 + $0x10] sm:$0xff] %vm893, %v891
  %897 = vst.msk [vmem:[%s6 + $0x18] sm:$0xff] %vm893, %v892
  // Predicated region
  $region26: #{cnnlstm_v3_forward.4} parent=0 // pred_check
    _
  $region27: #{cnnlstm_v3_forward.4} parent=0 // pred_check_branch
    %899 = sbr.rel (0) target = $region29
  $region28: #{cnnlstm_v3_forward.4} parent=0 // pred_region
    _
  $region29: #{cnnlstm_v3_forward.4} parent=0 // pred_fallthru
    _
  // Predicated region
  $region30: #{cnnlstm_v3_forward.4} parent=0 // pred_check
    _
  $region31: #{cnnlstm_v3_forward.4} parent=0 // pred_check_branch
    %901 = sbr.rel (0) target = $region33
  $region32: #{cnnlstm_v3_forward.4} parent=0 // pred_region
    _
  $region33: #{cnnlstm_v3_forward.4} parent=0 // pred_fallthru
    _

// kernel: cnnlstm_v3_forward.5
$region0: #{cnnlstm_v3_forward.5}
  #allocation0 [shape = 'u32[]', space=smem, size = 0x4, offset = 0x4, fixed_abs, tag = 'smem constant byte address 0x4 - core index']
  #allocation1 [shape = 'u32[144,128]{1,0:T(1,128)}', space=vmem, size = 0x12000, scoped, tag = 'internal scratch']
  #allocation2 [shape = 'f32[1,1]{1,0:T(1,128)S(1)}', space=vmem, size = 0x200, scoped, tag = 'scoped memory for cnnlstm_v3_forward.5']
  %s0 = inlined_call_operand.vmem [shape: f32[8,8], index: 0, kind: input, shape index: {}]
  %s1 = inlined_call_operand.vmem [shape: f32[8,128], index: 1, kind: input, shape index: {}]
  %s2 = inlined_call_operand.vmem [shape: f32[32,128], index: 2, kind: input, shape index: {}]
  %s3 = inlined_call_operand.vmem [shape: f32[1,128], index: 3, kind: input, shape index: {}]
  %s4 = inlined_call_operand.vmem [shape: f32[32,128], index: 4, kind: input, shape index: {}]
  %s5 = inlined_call_operand.vmem [shape: f32[32,128], index: 5, kind: input, shape index: {}]
  %s6 = inlined_call_operand.vmem [shape: f32[1,128], index: 6, kind: input, shape index: {}]
  %s7 = inlined_call_operand.vmem [shape: f32[2,512], index: 7, kind: input, shape index: {}]
  %s8 = inlined_call_operand.vmem [shape: f32[512,32], index: 8, kind: input, shape index: {}]
  %s9 = inlined_call_operand.vmem [shape: f32[1,32], index: 9, kind: input, shape index: {}]
  %s10 = inlined_call_operand.vmem [shape: f32[32,32], index: 10, kind: input, shape index: {}]
  %s11 = inlined_call_operand.vmem [shape: f32[32,32], index: 11, kind: input, shape index: {}]
  %s12 = inlined_call_operand.vmem [shape: f32[1,32], index: 12, kind: input, shape index: {}]
  %s13 = inlined_call_operand.vmem [shape: f32[32,1], index: 13, kind: input, shape index: {}]
  %s14 = inlined_call_operand.<no memory space> [shape: f32[1,1], index: 14, kind: input, shape index: {}]
  %s15 = inlined_call_operand.vmem [shape: f32[2,1], index: 15, kind: output, shape index: {}]
  %s16 = sld [smem:[#allocation0]]
  $region70: #{cnnlstm_v3_forward.5} parent=0
    _
  %s18 = ssub.s32 1, %s16
  %s19 = scalar_select 0, %s18, %s16
  %v20 = vstv %s14
  %21 = vst [vmem:[#allocation2] sm:$0x1] %v20
  // Predicated region
  $region2: #{cnnlstm_v3_forward.5} parent=0 // pred_check
    _
  $region3: #{cnnlstm_v3_forward.5} parent=0 // pred_check_branch
    %23 = sbr.rel (0) target = $region5
  $region4: #{cnnlstm_v3_forward.5} parent=0 // pred_region
    _
  $region5: #{cnnlstm_v3_forward.5} parent=0 // pred_fallthru
    _
  // Predicated region
  $region6: #{cnnlstm_v3_forward.5} parent=0 // pred_check
    _
  $region7: #{cnnlstm_v3_forward.5} parent=0 // pred_check_branch
    %25 = sbr.rel (0) target = $region9
  $region8: #{cnnlstm_v3_forward.5} parent=0 // pred_region
    _
  $region9: #{cnnlstm_v3_forward.5} parent=0 // pred_fallthru
    _
  // Predicated region
  $region10: #{cnnlstm_v3_forward.5} parent=0 // pred_check
    _
  $region11: #{cnnlstm_v3_forward.5} parent=0 // pred_check_branch
    %27 = sbr.rel (0) target = $region13
  $region12: #{cnnlstm_v3_forward.5} parent=0 // pred_region
    _
  $region13: #{cnnlstm_v3_forward.5} parent=0 // pred_fallthru
    _
  // Predicated region
  $region14: #{cnnlstm_v3_forward.5} parent=0 // pred_check
    _
  $region15: #{cnnlstm_v3_forward.5} parent=0 // pred_check_branch
    %29 = sbr.rel (0) target = $region17
  $region16: #{cnnlstm_v3_forward.5} parent=0 // pred_region
    _
  $region17: #{cnnlstm_v3_forward.5} parent=0 // pred_fallthru
    _
  // Predicated region
  $region18: #{cnnlstm_v3_forward.5} parent=0 // pred_check
    _
  $region19: #{cnnlstm_v3_forward.5} parent=0 // pred_check_branch
    %31 = sbr.rel (0) target = $region21
  $region20: #{cnnlstm_v3_forward.5} parent=0 // pred_region
    _
  $region21: #{cnnlstm_v3_forward.5} parent=0 // pred_fallthru
    _
  // Predicated region
  $region22: #{cnnlstm_v3_forward.5} parent=0 // pred_check
    _
  $region23: #{cnnlstm_v3_forward.5} parent=0 // pred_check_branch
    %33 = sbr.rel (0) target = $region25
  $region24: #{cnnlstm_v3_forward.5} parent=0 // pred_region
    _
  $region25: #{cnnlstm_v3_forward.5} parent=0 // pred_fallthru
    _
  // Predicated region
  $region26: #{cnnlstm_v3_forward.5} parent=0 // pred_check
    _
  $region27: #{cnnlstm_v3_forward.5} parent=0 // pred_check_branch
    %35 = sbr.rel (0) target = $region29
  $region28: #{cnnlstm_v3_forward.5} parent=0 // pred_region
    _
  $region29: #{cnnlstm_v3_forward.5} parent=0 // pred_fallthru
    _
  // Predicated region
  $region30: #{cnnlstm_v3_forward.5} parent=0 // pred_check
    _
  $region31: #{cnnlstm_v3_forward.5} parent=0 // pred_check_branch
    %37 = sbr.rel (0) target = $region33
  $region32: #{cnnlstm_v3_forward.5} parent=0 // pred_region
    _
  $region33: #{cnnlstm_v3_forward.5} parent=0 // pred_fallthru
    _
  // Predicated region
  $region34: #{cnnlstm_v3_forward.5} parent=0 // pred_check
    _
  $region35: #{cnnlstm_v3_forward.5} parent=0 // pred_check_branch
    %39 = sbr.rel (0) target = $region37
  $region36: #{cnnlstm_v3_forward.5} parent=0 // pred_region
    _
  $region37: #{cnnlstm_v3_forward.5} parent=0 // pred_fallthru
    _
  // Predicated region
  $region38: #{cnnlstm_v3_forward.5} parent=0 // pred_check
    _
  $region39: #{cnnlstm_v3_forward.5} parent=0 // pred_check_branch
    %41 = sbr.rel (0) target = $region41
  $region40: #{cnnlstm_v3_forward.5} parent=0 // pred_region
    _
  $region41: #{cnnlstm_v3_forward.5} parent=0 // pred_fallthru
    _
  // Predicated region
  $region42: #{cnnlstm_v3_forward.5} parent=0 // pred_check
    _
  $region43: #{cnnlstm_v3_forward.5} parent=0 // pred_check_branch
    %43 = sbr.rel (0) target = $region45
  $region44: #{cnnlstm_v3_forward.5} parent=0 // pred_region
    _
  $region45: #{cnnlstm_v3_forward.5} parent=0 // pred_fallthru
    _
  // Predicated region
  $region46: #{cnnlstm_v3_forward.5} parent=0 // pred_check
    _
  $region47: #{cnnlstm_v3_forward.5} parent=0 // pred_check_branch
    %45 = sbr.rel (0) target = $region49
  $region48: #{cnnlstm_v3_forward.5} parent=0 // pred_region
    _
  $region49: #{cnnlstm_v3_forward.5} parent=0 // pred_fallthru
    _
  // Predicated region
  $region50: #{cnnlstm_v3_forward.5} parent=0 // pred_check
    _
  $region51: #{cnnlstm_v3_forward.5} parent=0 // pred_check_branch
    %47 = sbr.rel (0) target = $region53
  $region52: #{cnnlstm_v3_forward.5} parent=0 // pred_region
    _
  $region53: #{cnnlstm_v3_forward.5} parent=0 // pred_fallthru
    _
  // Predicated region
  $region54: #{cnnlstm_v3_forward.5} parent=0 // pred_check
    _
  $region55: #{cnnlstm_v3_forward.5} parent=0 // pred_check_branch
    %49 = sbr.rel (0) target = $region57
  $region56: #{cnnlstm_v3_forward.5} parent=0 // pred_region
    _
  $region57: #{cnnlstm_v3_forward.5} parent=0 // pred_fallthru
    _
  // Predicated region
  $region58: #{cnnlstm_v3_forward.5} parent=0 // pred_check
    _
  $region59: #{cnnlstm_v3_forward.5} parent=0 // pred_check_branch
    %51 = sbr.rel (0) target = $region61
  $region60: #{cnnlstm_v3_forward.5} parent=0 // pred_region
    _
  $region61: #{cnnlstm_v3_forward.5} parent=0 // pred_fallthru
    _
  %v52 = vld [vmem:[%s0] sm:$0xff]
  %v53 = vld [vmem:[%s1] sm:$0xff]
  %v54 = vld [vmem:[%s3] sm:$0x1]
  %v56 = vlaneseq
  %v57 = vshrl.u32 %v56, 7
  %v58 = vsub.s32 0, %v57
  %v59 = vrot.slane %v54, %v58
  %vm61 = vcmask 64512
  %v63 = vsel %vm61, %v52, 0
  %65 = vmatprep.subr.mxu0 0.0
  %66 = vmatpush1.msra.mxu0 %v53
  %67 = vmatprep.subr.mxu0 0.0
  %68 = vmatpush1.msra.mxu0 0.0
  %69 = vmatprep.subr.mxu0 0.0
  %70 = vmatpush1.msra.mxu0 0.0
  %71 = vmatprep.subr.mxu0 0.0
  %72 = vmatpush1.msra.mxu0 0.0
  %73 = vmatprep.subr.mxu0 0.0
  %74 = vmatpush1.msra.mxu0 0.0
  %75 = vmatprep.subr.mxu0 0.0
  %76 = vmatpush1.msra.mxu0 0.0
  %77 = vmatprep.subr.mxu0 0.0
  %78 = vmatpush1.msra.mxu0 0.0
  %79 = vmatprep.subr.mxu0 0.0
  %80 = vmatpush1.msra.mxu0 0.0
  %81 = vmatprep.subr.mxu0 0.0
  %82 = vmatpush1.msra.mxu0 0.0
  %83 = vmatprep.subr.mxu0 0.0
  %84 = vmatpush1.msra.mxu0 0.0
  %85 = vmatprep.subr.mxu0 0.0
  %86 = vmatpush1.msra.mxu0 0.0
  %87 = vmatprep.subr.mxu0 0.0
  %88 = vmatpush1.msra.mxu0 0.0
  %89 = vmatprep.subr.mxu0 0.0
  %90 = vmatpush1.msra.mxu0 0.0
  %91 = vmatprep.subr.mxu0 0.0
  %92 = vmatpush1.msra.mxu0 0.0
  %93 = vmatprep.subr.mxu0 0.0
  %94 = vmatpush1.msra.mxu0 0.0
  %95 = vmatprep.subr.mxu0 0.0
  %96 = vmatpush1.msra.mxu0 0.0
  %97 = vmatprep.subr.mxu0 0.0
  %98 = vmatpush1.msra.mxu0 0.0
  %99 = vmatprep.subr.mxu0 0.0
  %100 = vmatpush1.msra.mxu0 0.0
  %101 = vmatprep.subr.mxu0 0.0
  %102 = vmatpush1.msra.mxu0 0.0
  %103 = vmatprep.subr.mxu0 0.0
  %104 = vmatpush1.msra.mxu0 0.0
  %105 = vmatprep.subr.mxu0 0.0
  %106 = vmatpush1.msra.mxu0 0.0
  %107 = vmatprep.subr.mxu0 0.0
  %108 = vmatpush1.msra.mxu0 0.0
  %109 = vmatprep.subr.mxu0 0.0
  %110 = vmatpush1.msra.mxu0 0.0
  %111 = vmatprep.subr.mxu0 0.0
  %112 = vmatpush1.msra.mxu0 0.0
  %113 = vmatprep.subr.mxu0 0.0
  %114 = vmatpush1.msra.mxu0 0.0
  %115 = vmatprep.subr.mxu0 0.0
  %116 = vmatpush1.msra.mxu0 0.0
  %117 = vmatprep.subr.mxu0 0.0
  %118 = vmatpush1.msra.mxu0 0.0
  %119 = vmatprep.subr.mxu0 0.0
  %120 = vmatpush1.msra.mxu0 0.0
  %121 = vmatprep.subr.mxu0 0.0
  %122 = vmatpush1.msra.mxu0 0.0
  %123 = vmatprep.subr.mxu0 0.0
  %124 = vmatpush1.msra.mxu0 0.0
  %125 = vmatprep.subr.mxu0 0.0
  %126 = vmatpush1.msra.mxu0 0.0
  %127 = vmatprep.subr.mxu0 0.0
  %128 = vmatpush1.msra.mxu0 0.0
  %129 = vmatprep.mubr.f32.mxu0 0.0
  %130 = vmatmul.mubr.f32.gmra.mrb[0].mxu0 %v63
  %v131 = vpop.f32.mrb[0].mxu0
  %v132 = vadd.f32 %v59, %v131
  %v133 = vpop.f32.mrb[0].mxu0
  %134 = vdwg.mxu0
  %v135 = vld [vmem:[%s4] sm:$0xff]
  %v136 = vld [vmem:[%s4 + $0x8] sm:$0xff]
  %v137 = vld [vmem:[%s4 + $0x10] sm:$0xff]
  %v138 = vld [vmem:[%s4 + $0x18] sm:$0xff]
  %v139 = vld [vmem:[%s2] sm:$0xff]
  %v140 = vld [vmem:[%s2 + $0x8] sm:$0xff]
  %v141 = vld [vmem:[%s2 + $0x10] sm:$0xff]
  %v142 = vld [vmem:[%s2 + $0x18] sm:$0xff]
  %v143 = vld [vmem:[%s5] sm:$0xff]
  %v144 = vld [vmem:[%s5 + $0x8] sm:$0xff]
  %v145 = vld [vmem:[%s5 + $0x10] sm:$0xff]
  %v146 = vld [vmem:[%s5 + $0x18] sm:$0xff]
  %v147 = vld [vmem:[%s6] sm:$0x1]
  %vm148 = vcmask 261120
  %v150 = vsel %vm148, 0.0, 0
  %152 = vmatprep.subr.mxu0 0.0
  %153 = vmatpush1.msra.mxu0 %v139
  %154 = vmatprep.subr.mxu0 0.0
  %155 = vmatpush1.msra.mxu0 %v140
  %156 = vmatprep.subr.mxu0 0.0
  %157 = vmatpush1.msra.mxu0 %v141
  %158 = vmatprep.subr.mxu0 0.0
  %159 = vmatpush1.msra.mxu0 %v142
  %160 = vmatprep.subr.mxu0 0.0
  %161 = vmatpush1.msra.mxu0 0.0
  %162 = vmatprep.subr.mxu0 0.0
  %163 = vmatpush1.msra.mxu0 0.0
  %164 = vmatprep.subr.mxu0 0.0
  %165 = vmatpush1.msra.mxu0 0.0
  %166 = vmatprep.subr.mxu0 0.0
  %167 = vmatpush1.msra.mxu0 0.0
  %168 = vmatprep.subr.mxu0 0.0
  %169 = vmatpush1.msra.mxu0 0.0
  %170 = vmatprep.subr.mxu0 0.0
  %171 = vmatpush1.msra.mxu0 0.0
  %172 = vmatprep.subr.mxu0 0.0
  %173 = vmatpush1.msra.mxu0 0.0
  %174 = vmatprep.subr.mxu0 0.0
  %175 = vmatpush1.msra.mxu0 0.0
  %176 = vmatprep.subr.mxu0 0.0
  %177 = vmatpush1.msra.mxu0 0.0
  %178 = vmatprep.subr.mxu0 0.0
  %179 = vmatpush1.msra.mxu0 0.0
  %180 = vmatprep.subr.mxu0 0.0
  %181 = vmatpush1.msra.mxu0 0.0
  %182 = vmatprep.subr.mxu0 0.0
  %183 = vmatpush1.msra.mxu0 0.0
  %184 = vmatprep.subr.mxu0 0.0
  %185 = vmatpush1.msra.mxu0 0.0
  %186 = vmatprep.subr.mxu0 0.0
  %187 = vmatpush1.msra.mxu0 0.0
  %188 = vmatprep.subr.mxu0 0.0
  %189 = vmatpush1.msra.mxu0 0.0
  %190 = vmatprep.subr.mxu0 0.0
  %191 = vmatpush1.msra.mxu0 0.0
  %192 = vmatprep.subr.mxu0 0.0
  %193 = vmatpush1.msra.mxu0 0.0
  %194 = vmatprep.subr.mxu0 0.0
  %195 = vmatpush1.msra.mxu0 0.0
  %196 = vmatprep.subr.mxu0 0.0
  %197 = vmatpush1.msra.mxu0 0.0
  %198 = vmatprep.subr.mxu0 0.0
  %199 = vmatpush1.msra.mxu0 0.0
  %200 = vmatprep.subr.mxu0 0.0
  %201 = vmatpush1.msra.mxu0 0.0
  %202 = vmatprep.subr.mxu0 0.0
  %203 = vmatpush1.msra.mxu0 0.0
  %204 = vmatprep.subr.mxu0 0.0
  %205 = vmatpush1.msra.mxu0 0.0
  %206 = vmatprep.subr.mxu0 0.0
  %207 = vmatpush1.msra.mxu0 0.0
  %208 = vmatprep.subr.mxu0 0.0
  %209 = vmatpush1.msra.mxu0 0.0
  %210 = vmatprep.subr.mxu0 0.0
  %211 = vmatpush1.msra.mxu0 0.0
  %212 = vmatprep.subr.mxu0 0.0
  %213 = vmatpush1.msra.mxu0 0.0
  %214 = vmatprep.subr.mxu0 0.0
  %215 = vmatpush1.msra.mxu0 0.0
  %216 = vmatprep.mubr.f32.mxu0 0.0
  %217 = vmatmul.mubr.f32.gmra.mrb[0].mxu0 %v150
  %v218 = vpop.f32.mrb[0].mxu0
  %v219 = vadd.f32 0.0, %v218
  %v220 = vpop.f32.mrb[0].mxu0
  %221 = vdwg.mxu0
  %v222 = vadd.f32 %v132, %v219
  %v223 = vxor.u32 %v222, 2147483648
  %v224 = vmul.f32 %v223, 1.442695
  %v225 = vpow.pop %v224
  %v226 = vadd.f32 %v225, 1.0
  %v227 = vrcp.pop %v226
  %v228 = vmul.f32 1.0, %v227
  %v229 = vtanh.pop %v222
  %v230 = vmul.f32 %v228, 0.0
  %232 = vrot.lane.b32.xlu0 %v229, 64
  %v233 = vpop.permute.xlu0 %232
  %v235 = vmul.f32 %v228, %v233
  %237 = vrot.lane.b32.xlu0 %v235, 32
  %v238 = vpop.permute.xlu0 %237
  %v240 = vadd.f32 %v230, %v238
  %v241 = vtanh.pop %v240
  %243 = vrot.lane.b32.xlu0 %v241, 64
  %v244 = vpop.permute.xlu0 %243
  %v246 = vmul.f32 %v228, %v244
  %247 = vmatprep.subr.mxu0 0.0
  %248 = vmatpush1.msra.mxu0 %v143
  %249 = vmatprep.subr.mxu0 0.0
  %250 = vmatpush1.msra.mxu0 %v144
  %251 = vmatprep.subr.mxu0 0.0
  %252 = vmatpush1.msra.mxu0 %v145
  %253 = vmatprep.subr.mxu0 0.0
  %254 = vmatpush1.msra.mxu0 %v146
  %255 = vmatprep.subr.mxu0 0.0
  %256 = vmatpush1.msra.mxu0 0.0
  %257 = vmatprep.subr.mxu0 0.0
  %258 = vmatpush1.msra.mxu0 0.0
  %259 = vmatprep.subr.mxu0 0.0
  %260 = vmatpush1.msra.mxu0 0.0
  %261 = vmatprep.subr.mxu0 0.0
  %262 = vmatpush1.msra.mxu0 0.0
  %263 = vmatprep.subr.mxu0 0.0
  %264 = vmatpush1.msra.mxu0 0.0
  %265 = vmatprep.subr.mxu0 0.0
  %266 = vmatpush1.msra.mxu0 0.0
  %267 = vmatprep.subr.mxu0 0.0
  %268 = vmatpush1.msra.mxu0 0.0
  %269 = vmatprep.subr.mxu0 0.0
  %270 = vmatpush1.msra.mxu0 0.0
  %271 = vmatprep.subr.mxu0 0.0
  %272 = vmatpush1.msra.mxu0 0.0
  %273 = vmatprep.subr.mxu0 0.0
  %274 = vmatpush1.msra.mxu0 0.0
  %275 = vmatprep.subr.mxu0 0.0
  %276 = vmatpush1.msra.mxu0 0.0
  %277 = vmatprep.subr.mxu0 0.0
  %278 = vmatpush1.msra.mxu0 0.0
  %279 = vmatprep.subr.mxu0 0.0
  %280 = vmatpush1.msra.mxu0 0.0
  %281 = vmatprep.subr.mxu0 0.0
  %282 = vmatpush1.msra.mxu0 0.0
  %283 = vmatprep.subr.mxu0 0.0
  %284 = vmatpush1.msra.mxu0 0.0
  %285 = vmatprep.subr.mxu0 0.0
  %286 = vmatpush1.msra.mxu0 0.0
  %287 = vmatprep.subr.mxu0 0.0
  %288 = vmatpush1.msra.mxu0 0.0
  %289 = vmatprep.subr.mxu0 0.0
  %290 = vmatpush1.msra.mxu0 0.0
  %291 = vmatprep.subr.mxu0 0.0
  %292 = vmatpush1.msra.mxu0 0.0
  %293 = vmatprep.subr.mxu0 0.0
  %294 = vmatpush1.msra.mxu0 0.0
  %295 = vmatprep.subr.mxu0 0.0
  %296 = vmatpush1.msra.mxu0 0.0
  %297 = vmatprep.subr.mxu0 0.0
  %298 = vmatpush1.msra.mxu0 0.0
  %299 = vmatprep.subr.mxu0 0.0
  %300 = vmatpush1.msra.mxu0 0.0
  %301 = vmatprep.subr.mxu0 0.0
  %302 = vmatpush1.msra.mxu0 0.0
  %303 = vmatprep.subr.mxu0 0.0
  %304 = vmatpush1.msra.mxu0 0.0
  %305 = vmatprep.subr.mxu0 0.0
  %306 = vmatpush1.msra.mxu0 0.0
  %307 = vmatprep.subr.mxu0 0.0
  %308 = vmatpush1.msra.mxu0 0.0
  %309 = vmatprep.subr.mxu0 0.0
  %310 = vmatpush1.msra.mxu0 0.0
  %311 = vmatprep.mubr.f32.mxu0 0.0
  %312 = vmatmul.mubr.f32.gmra.mrb[0].mxu0 %v150
  %v313 = vpop.f32.mrb[0].mxu0
  %v314 = vadd.f32 0.0, %v313
  %v315 = vpop.f32.mrb[0].mxu0
  %316 = vdwg.mxu0
  %318 = vrot.lane.b32.xlu0 %v246, 32
  %v319 = vpop.permute.xlu0 %318
  %v320 = vsel %vm148, %v319, 0
  %322 = vmatprep.subr.mxu0 0.0
  %323 = vmatpush1.msra.mxu0 %v135
  %324 = vmatprep.subr.mxu0 0.0
  %325 = vmatpush1.msra.mxu0 %v136
  %326 = vmatprep.subr.mxu0 0.0
  %327 = vmatpush1.msra.mxu0 %v137
  %328 = vmatprep.subr.mxu0 0.0
  %329 = vmatpush1.msra.mxu0 %v138
  %330 = vmatprep.subr.mxu0 0.0
  %331 = vmatpush1.msra.mxu0 0.0
  %332 = vmatprep.subr.mxu0 0.0
  %333 = vmatpush1.msra.mxu0 0.0
  %334 = vmatprep.subr.mxu0 0.0
  %335 = vmatpush1.msra.mxu0 0.0
  %336 = vmatprep.subr.mxu0 0.0
  %337 = vmatpush1.msra.mxu0 0.0
  %338 = vmatprep.subr.mxu0 0.0
  %339 = vmatpush1.msra.mxu0 0.0
  %340 = vmatprep.subr.mxu0 0.0
  %341 = vmatpush1.msra.mxu0 0.0
  %342 = vmatprep.subr.mxu0 0.0
  %343 = vmatpush1.msra.mxu0 0.0
  %344 = vmatprep.subr.mxu0 0.0
  %345 = vmatpush1.msra.mxu0 0.0
  %346 = vmatprep.subr.mxu0 0.0
  %347 = vmatpush1.msra.mxu0 0.0
  %348 = vmatprep.subr.mxu0 0.0
  %349 = vmatpush1.msra.mxu0 0.0
  %350 = vmatprep.subr.mxu0 0.0
  %351 = vmatpush1.msra.mxu0 0.0
  %352 = vmatprep.subr.mxu0 0.0
  %353 = vmatpush1.msra.mxu0 0.0
  %354 = vmatprep.subr.mxu0 0.0
  %355 = vmatpush1.msra.mxu0 0.0
  %356 = vmatprep.subr.mxu0 0.0
  %357 = vmatpush1.msra.mxu0 0.0
  %358 = vmatprep.subr.mxu0 0.0
  %359 = vmatpush1.msra.mxu0 0.0
  %360 = vmatprep.subr.mxu0 0.0
  %361 = vmatpush1.msra.mxu0 0.0
  %362 = vmatprep.subr.mxu0 0.0
  %363 = vmatpush1.msra.mxu0 0.0
  %364 = vmatprep.subr.mxu0 0.0
  %365 = vmatpush1.msra.mxu0 0.0
  %366 = vmatprep.subr.mxu0 0.0
  %367 = vmatpush1.msra.mxu0 0.0
  %368 = vmatprep.subr.mxu0 0.0
  %369 = vmatpush1.msra.mxu0 0.0
  %370 = vmatprep.subr.mxu0 0.0
  %371 = vmatpush1.msra.mxu0 0.0
  %372 = vmatprep.subr.mxu0 0.0
  %373 = vmatpush1.msra.mxu0 0.0
  %374 = vmatprep.subr.mxu0 0.0
  %375 = vmatpush1.msra.mxu0 0.0
  %376 = vmatprep.subr.mxu0 0.0
  %377 = vmatpush1.msra.mxu0 0.0
  %378 = vmatprep.subr.mxu0 0.0
  %379 = vmatpush1.msra.mxu0 0.0
  %380 = vmatprep.subr.mxu0 0.0
  %381 = vmatpush1.msra.mxu0 0.0
  %382 = vmatprep.subr.mxu0 0.0
  %383 = vmatpush1.msra.mxu0 0.0
  %384 = vmatprep.subr.mxu0 0.0
  %385 = vmatpush1.msra.mxu0 0.0
  %386 = vmatprep.mubr.f32.mxu0 0.0
  %387 = vmatmul.mubr.f32.gmra.mrb[0].mxu0 %v320
  %v388 = vpop.f32.mrb[0].mxu0
  %v389 = vadd.f32 %v314, %v388
  %v390 = vpop.f32.mrb[0].mxu0
  %391 = vdwg.mxu0
  %v393 = vlaneseq
  %v394 = vshrl.u32 %v393, 7
  %v395 = vsub.s32 0, %v394
  %v396 = vrot.slane %v147, %v395
  %v398 = vadd.f32 %v389, %v396
  %v399 = vxor.u32 %v398, 2147483648
  %v400 = vmul.f32 %v399, 1.442695
  %v401 = vpow.pop %v400
  %v402 = vadd.f32 %v401, 1.0
  %v403 = vrcp.pop %v402
  %v404 = vmul.f32 1.0, %v403
  %v405 = vtanh.pop %v398
  %v406 = vmul.f32 %v404, 0.0
  %408 = vrot.lane.b32.xlu0 %v405, 64
  %v409 = vpop.permute.xlu0 %408
  %v411 = vmul.f32 %v404, %v409
  %413 = vrot.lane.b32.xlu0 %v411, 32
  %v414 = vpop.permute.xlu0 %413
  %v416 = vadd.f32 %v406, %v414
  %v417 = vtanh.pop %v416
  %419 = vrot.lane.b32.xlu0 %v417, 64
  %v420 = vpop.permute.xlu0 %419
  %v422 = vmul.f32 %v404, %v420
  %423 = vmatprep.subr.mxu0 0.0
  %424 = vmatpush1.msra.mxu0 %v139
  %425 = vmatprep.subr.mxu0 0.0
  %426 = vmatpush1.msra.mxu0 %v140
  %427 = vmatprep.subr.mxu0 0.0
  %428 = vmatpush1.msra.mxu0 %v141
  %429 = vmatprep.subr.mxu0 0.0
  %430 = vmatpush1.msra.mxu0 %v142
  %431 = vmatprep.subr.mxu0 0.0
  %432 = vmatpush1.msra.mxu0 0.0
  %433 = vmatprep.subr.mxu0 0.0
  %434 = vmatpush1.msra.mxu0 0.0
  %435 = vmatprep.subr.mxu0 0.0
  %436 = vmatpush1.msra.mxu0 0.0
  %437 = vmatprep.subr.mxu0 0.0
  %438 = vmatpush1.msra.mxu0 0.0
  %439 = vmatprep.subr.mxu0 0.0
  %440 = vmatpush1.msra.mxu0 0.0
  %441 = vmatprep.subr.mxu0 0.0
  %442 = vmatpush1.msra.mxu0 0.0
  %443 = vmatprep.subr.mxu0 0.0
  %444 = vmatpush1.msra.mxu0 0.0
  %445 = vmatprep.subr.mxu0 0.0
  %446 = vmatpush1.msra.mxu0 0.0
  %447 = vmatprep.subr.mxu0 0.0
  %448 = vmatpush1.msra.mxu0 0.0
  %449 = vmatprep.subr.mxu0 0.0
  %450 = vmatpush1.msra.mxu0 0.0
  %451 = vmatprep.subr.mxu0 0.0
  %452 = vmatpush1.msra.mxu0 0.0
  %453 = vmatprep.subr.mxu0 0.0
  %454 = vmatpush1.msra.mxu0 0.0
  %455 = vmatprep.subr.mxu0 0.0
  %456 = vmatpush1.msra.mxu0 0.0
  %457 = vmatprep.subr.mxu0 0.0
  %458 = vmatpush1.msra.mxu0 0.0
  %459 = vmatprep.subr.mxu0 0.0
  %460 = vmatpush1.msra.mxu0 0.0
  %461 = vmatprep.subr.mxu0 0.0
  %462 = vmatpush1.msra.mxu0 0.0
  %463 = vmatprep.subr.mxu0 0.0
  %464 = vmatpush1.msra.mxu0 0.0
  %465 = vmatprep.subr.mxu0 0.0
  %466 = vmatpush1.msra.mxu0 0.0
  %467 = vmatprep.subr.mxu0 0.0
  %468 = vmatpush1.msra.mxu0 0.0
  %469 = vmatprep.subr.mxu0 0.0
  %470 = vmatpush1.msra.mxu0 0.0
  %471 = vmatprep.subr.mxu0 0.0
  %472 = vmatpush1.msra.mxu0 0.0
  %473 = vmatprep.subr.mxu0 0.0
  %474 = vmatpush1.msra.mxu0 0.0
  %475 = vmatprep.subr.mxu0 0.0
  %476 = vmatpush1.msra.mxu0 0.0
  %477 = vmatprep.subr.mxu0 0.0
  %478 = vmatpush1.msra.mxu0 0.0
  %479 = vmatprep.subr.mxu0 0.0
  %480 = vmatpush1.msra.mxu0 0.0
  %481 = vmatprep.subr.mxu0 0.0
  %482 = vmatpush1.msra.mxu0 0.0
  %483 = vmatprep.subr.mxu0 0.0
  %484 = vmatpush1.msra.mxu0 0.0
  %485 = vmatprep.subr.mxu0 0.0
  %486 = vmatpush1.msra.mxu0 0.0
  %487 = vmatprep.mubr.f32.mxu0 0.0
  %488 = vmatmul.mubr.f32.gmra.mrb[0].mxu0 %v320
  %v489 = vpop.f32.mrb[0].mxu0
  %v490 = vadd.f32 0.0, %v489
  %v491 = vpop.f32.mrb[0].mxu0
  %492 = vdwg.mxu0
  %v494 = vrot.slane %v490, 6
  %v496 = vadd.f32 %v132, %v494
  %v497 = vxor.u32 %v496, 2147483648
  %v498 = vmul.f32 %v497, 1.442695
  %v499 = vpow.pop %v498
  %v500 = vadd.f32 %v499, 1.0
  %v501 = vrcp.pop %v500
  %v502 = vmul.f32 1.0, %v501
  %v503 = vtanh.pop %v496
  %v505 = vrot.slane %v240, 6
  %v507 = vmul.f32 %v502, %v505
  %509 = vrot.lane.b32.xlu0 %v503, 64
  %v510 = vpop.permute.xlu0 %509
  %v512 = vmul.f32 %v502, %v510
  %514 = vrot.lane.b32.xlu0 %v512, 32
  %v515 = vpop.permute.xlu0 %514
  %v517 = vadd.f32 %v507, %v515
  %v518 = vtanh.pop %v517
  %520 = vrot.lane.b32.xlu0 %v518, 64
  %v521 = vpop.permute.xlu0 %520
  %v523 = vmul.f32 %v502, %v521
  %525 = vrot.lane.b32.xlu0 %v422, 32
  %v526 = vpop.permute.xlu0 %525
  %v527 = vsel %vm148, %v526, 0
  %529 = vmatprep.subr.mxu0 0.0
  %530 = vmatpush1.msra.mxu0 %v143
  %531 = vmatprep.subr.mxu0 0.0
  %532 = vmatpush1.msra.mxu0 %v144
  %533 = vmatprep.subr.mxu0 0.0
  %534 = vmatpush1.msra.mxu0 %v145
  %535 = vmatprep.subr.mxu0 0.0
  %536 = vmatpush1.msra.mxu0 %v146
  %537 = vmatprep.subr.mxu0 0.0
  %538 = vmatpush1.msra.mxu0 0.0
  %539 = vmatprep.subr.mxu0 0.0
  %540 = vmatpush1.msra.mxu0 0.0
  %541 = vmatprep.subr.mxu0 0.0
  %542 = vmatpush1.msra.mxu0 0.0
  %543 = vmatprep.subr.mxu0 0.0
  %544 = vmatpush1.msra.mxu0 0.0
  %545 = vmatprep.subr.mxu0 0.0
  %546 = vmatpush1.msra.mxu0 0.0
  %547 = vmatprep.subr.mxu0 0.0
  %548 = vmatpush1.msra.mxu0 0.0
  %549 = vmatprep.subr.mxu0 0.0
  %550 = vmatpush1.msra.mxu0 0.0
  %551 = vmatprep.subr.mxu0 0.0
  %552 = vmatpush1.msra.mxu0 0.0
  %553 = vmatprep.subr.mxu0 0.0
  %554 = vmatpush1.msra.mxu0 0.0
  %555 = vmatprep.subr.mxu0 0.0
  %556 = vmatpush1.msra.mxu0 0.0
  %557 = vmatprep.subr.mxu0 0.0
  %558 = vmatpush1.msra.mxu0 0.0
  %559 = vmatprep.subr.mxu0 0.0
  %560 = vmatpush1.msra.mxu0 0.0
  %561 = vmatprep.subr.mxu0 0.0
  %562 = vmatpush1.msra.mxu0 0.0
  %563 = vmatprep.subr.mxu0 0.0
  %564 = vmatpush1.msra.mxu0 0.0
  %565 = vmatprep.subr.mxu0 0.0
  %566 = vmatpush1.msra.mxu0 0.0
  %567 = vmatprep.subr.mxu0 0.0
  %568 = vmatpush1.msra.mxu0 0.0
  %569 = vmatprep.subr.mxu0 0.0
  %570 = vmatpush1.msra.mxu0 0.0
  %571 = vmatprep.subr.mxu0 0.0
  %572 = vmatpush1.msra.mxu0 0.0
  %573 = vmatprep.subr.mxu0 0.0
  %574 = vmatpush1.msra.mxu0 0.0
  %575 = vmatprep.subr.mxu0 0.0
  %576 = vmatpush1.msra.mxu0 0.0
  %577 = vmatprep.subr.mxu0 0.0
  %578 = vmatpush1.msra.mxu0 0.0
  %579 = vmatprep.subr.mxu0 0.0
  %580 = vmatpush1.msra.mxu0 0.0
  %581 = vmatprep.subr.mxu0 0.0
  %582 = vmatpush1.msra.mxu0 0.0
  %583 = vmatprep.subr.mxu0 0.0
  %584 = vmatpush1.msra.mxu0 0.0
  %585 = vmatprep.subr.mxu0 0.0
  %586 = vmatpush1.msra.mxu0 0.0
  %587 = vmatprep.subr.mxu0 0.0
  %588 = vmatpush1.msra.mxu0 0.0
  %589 = vmatprep.subr.mxu0 0.0
  %590 = vmatpush1.msra.mxu0 0.0
  %591 = vmatprep.subr.mxu0 0.0
  %592 = vmatpush1.msra.mxu0 0.0
  %593 = vmatprep.mubr.f32.mxu0 0.0
  %594 = vmatmul.mubr.f32.gmra.mrb[0].mxu0 %v527
  %v595 = vpop.f32.mrb[0].mxu0
  %v596 = vadd.f32 0.0, %v595
  %v597 = vpop.f32.mrb[0].mxu0
  %598 = vdwg.mxu0
  %v600 = vrot.slane %v523, 2
  %601 = vrot.lane.b32.xlu0 %v600, 32
  %v602 = vpop.permute.xlu0 %601
  %v603 = vsel %vm148, %v602, 0
  %605 = vmatprep.subr.mxu0 0.0
  %606 = vmatpush1.msra.mxu0 %v135
  %607 = vmatprep.subr.mxu0 0.0
  %608 = vmatpush1.msra.mxu0 %v136
  %609 = vmatprep.subr.mxu0 0.0
  %610 = vmatpush1.msra.mxu0 %v137
  %611 = vmatprep.subr.mxu0 0.0
  %612 = vmatpush1.msra.mxu0 %v138
  %613 = vmatprep.subr.mxu0 0.0
  %614 = vmatpush1.msra.mxu0 0.0
  %615 = vmatprep.subr.mxu0 0.0
  %616 = vmatpush1.msra.mxu0 0.0
  %617 = vmatprep.subr.mxu0 0.0
  %618 = vmatpush1.msra.mxu0 0.0
  %619 = vmatprep.subr.mxu0 0.0
  %620 = vmatpush1.msra.mxu0 0.0
  %621 = vmatprep.subr.mxu0 0.0
  %622 = vmatpush1.msra.mxu0 0.0
  %623 = vmatprep.subr.mxu0 0.0
  %624 = vmatpush1.msra.mxu0 0.0
  %625 = vmatprep.subr.mxu0 0.0
  %626 = vmatpush1.msra.mxu0 0.0
  %627 = vmatprep.subr.mxu0 0.0
  %628 = vmatpush1.msra.mxu0 0.0
  %629 = vmatprep.subr.mxu0 0.0
  %630 = vmatpush1.msra.mxu0 0.0
  %631 = vmatprep.subr.mxu0 0.0
  %632 = vmatpush1.msra.mxu0 0.0
  %633 = vmatprep.subr.mxu0 0.0
  %634 = vmatpush1.msra.mxu0 0.0
  %635 = vmatprep.subr.mxu0 0.0
  %636 = vmatpush1.msra.mxu0 0.0
  %637 = vmatprep.subr.mxu0 0.0
  %638 = vmatpush1.msra.mxu0 0.0
  %639 = vmatprep.subr.mxu0 0.0
  %640 = vmatpush1.msra.mxu0 0.0
  %641 = vmatprep.subr.mxu0 0.0
  %642 = vmatpush1.msra.mxu0 0.0
  %643 = vmatprep.subr.mxu0 0.0
  %644 = vmatpush1.msra.mxu0 0.0
  %645 = vmatprep.subr.mxu0 0.0
  %646 = vmatpush1.msra.mxu0 0.0
  %647 = vmatprep.subr.mxu0 0.0
  %648 = vmatpush1.msra.mxu0 0.0
  %649 = vmatprep.subr.mxu0 0.0
  %650 = vmatpush1.msra.mxu0 0.0
  %651 = vmatprep.subr.mxu0 0.0
  %652 = vmatpush1.msra.mxu0 0.0
  %653 = vmatprep.subr.mxu0 0.0
  %654 = vmatpush1.msra.mxu0 0.0
  %655 = vmatprep.subr.mxu0 0.0
  %656 = vmatpush1.msra.mxu0 0.0
  %657 = vmatprep.subr.mxu0 0.0
  %658 = vmatpush1.msra.mxu0 0.0
  %659 = vmatprep.subr.mxu0 0.0
  %660 = vmatpush1.msra.mxu0 0.0
  %661 = vmatprep.subr.mxu0 0.0
  %662 = vmatpush1.msra.mxu0 0.0
  %663 = vmatprep.subr.mxu0 0.0
  %664 = vmatpush1.msra.mxu0 0.0
  %665 = vmatprep.subr.mxu0 0.0
  %666 = vmatpush1.msra.mxu0 0.0
  %667 = vmatprep.subr.mxu0 0.0
  %668 = vmatpush1.msra.mxu0 0.0
  %669 = vmatprep.mubr.f32.mxu0 0.0
  %670 = vmatmul.mubr.f32.gmra.mrb[0].mxu0 %v603
  %v671 = vpop.f32.mrb[0].mxu0
  %v672 = vadd.f32 %v596, %v671
  %v673 = vpop.f32.mrb[0].mxu0
  %674 = vdwg.mxu0
  %v675 = vadd.f32 %v672, %v396
  %v676 = vxor.u32 %v675, 2147483648
  %v677 = vmul.f32 %v676, 1.442695
  %v678 = vpow.pop %v677
  %v679 = vadd.f32 %v678, 1.0
  %v680 = vrcp.pop %v679
  %v681 = vmul.f32 1.0, %v680
  %v682 = vtanh.pop %v675
  %v683 = vmul.f32 %v681, %v416
  %685 = vrot.lane.b32.xlu0 %v682, 64
  %v686 = vpop.permute.xlu0 %685
  %v688 = vmul.f32 %v681, %v686
  %690 = vrot.lane.b32.xlu0 %v688, 32
  %v691 = vpop.permute.xlu0 %690
  %v693 = vadd.f32 %v683, %v691
  %v694 = vtanh.pop %v693
  %696 = vrot.lane.b32.xlu0 %v694, 64
  %v697 = vpop.permute.xlu0 %696
  %v699 = vmul.f32 %v681, %v697
  %700 = vmatprep.subr.mxu0 0.0
  %701 = vmatpush1.msra.mxu0 %v139
  %702 = vmatprep.subr.mxu0 0.0
  %703 = vmatpush1.msra.mxu0 %v140
  %704 = vmatprep.subr.mxu0 0.0
  %705 = vmatpush1.msra.mxu0 %v141
  %706 = vmatprep.subr.mxu0 0.0
  %707 = vmatpush1.msra.mxu0 %v142
  %708 = vmatprep.subr.mxu0 0.0
  %709 = vmatpush1.msra.mxu0 0.0
  %710 = vmatprep.subr.mxu0 0.0
  %711 = vmatpush1.msra.mxu0 0.0
  %712 = vmatprep.subr.mxu0 0.0
  %713 = vmatpush1.msra.mxu0 0.0
  %714 = vmatprep.subr.mxu0 0.0
  %715 = vmatpush1.msra.mxu0 0.0
  %716 = vmatprep.subr.mxu0 0.0
  %717 = vmatpush1.msra.mxu0 0.0
  %718 = vmatprep.subr.mxu0 0.0
  %719 = vmatpush1.msra.mxu0 0.0
  %720 = vmatprep.subr.mxu0 0.0
  %721 = vmatpush1.msra.mxu0 0.0
  %722 = vmatprep.subr.mxu0 0.0
  %723 = vmatpush1.msra.mxu0 0.0
  %724 = vmatprep.subr.mxu0 0.0
  %725 = vmatpush1.msra.mxu0 0.0
  %726 = vmatprep.subr.mxu0 0.0
  %727 = vmatpush1.msra.mxu0 0.0
  %728 = vmatprep.subr.mxu0 0.0
  %729 = vmatpush1.msra.mxu0 0.0
  %730 = vmatprep.subr.mxu0 0.0
  %731 = vmatpush1.msra.mxu0 0.0
  %732 = vmatprep.subr.mxu0 0.0
  %733 = vmatpush1.msra.mxu0 0.0
  %734 = vmatprep.subr.mxu0 0.0
  %735 = vmatpush1.msra.mxu0 0.0
  %736 = vmatprep.subr.mxu0 0.0
  %737 = vmatpush1.msra.mxu0 0.0
  %738 = vmatprep.subr.mxu0 0.0
  %739 = vmatpush1.msra.mxu0 0.0
  %740 = vmatprep.subr.mxu0 0.0
  %741 = vmatpush1.msra.mxu0 0.0
  %742 = vmatprep.subr.mxu0 0.0
  %743 = vmatpush1.msra.mxu0 0.0
  %744 = vmatprep.subr.mxu0 0.0
  %745 = vmatpush1.msra.mxu0 0.0
  %746 = vmatprep.subr.mxu0 0.0
  %747 = vmatpush1.msra.mxu0 0.0
  %748 = vmatprep.subr.mxu0 0.0
  %749 = vmatpush1.msra.mxu0 0.0
  %750 = vmatprep.subr.mxu0 0.0
  %751 = vmatpush1.msra.mxu0 0.0
  %752 = vmatprep.subr.mxu0 0.0
  %753 = vmatpush1.msra.mxu0 0.0
  %754 = vmatprep.subr.mxu0 0.0
  %755 = vmatpush1.msra.mxu0 0.0
  %756 = vmatprep.subr.mxu0 0.0
  %757 = vmatpush1.msra.mxu0 0.0
  %758 = vmatprep.subr.mxu0 0.0
  %759 = vmatpush1.msra.mxu0 0.0
  %760 = vmatprep.subr.mxu0 0.0
  %761 = vmatpush1.msra.mxu0 0.0
  %762 = vmatprep.subr.mxu0 0.0
  %763 = vmatpush1.msra.mxu0 0.0
  %764 = vmatprep.mubr.f32.mxu0 0.0
  %765 = vmatmul.mubr.f32.gmra.mrb[0].mxu0 %v603
  %v766 = vpop.f32.mrb[0].mxu0
  %v767 = vadd.f32 0.0, %v766
  %v768 = vpop.f32.mrb[0].mxu0
  %769 = vdwg.mxu0
  %v771 = vrot.slane %v767, 4
  %v773 = vadd.f32 %v132, %v771
  %v774 = vxor.u32 %v773, 2147483648
  %v775 = vmul.f32 %v774, 1.442695
  %v776 = vpow.pop %v775
  %v777 = vadd.f32 %v776, 1.0
  %v778 = vrcp.pop %v777
  %v779 = vmul.f32 1.0, %v778
  %v780 = vtanh.pop %v773
  %v782 = vrot.slane %v517, 6
  %v784 = vmul.f32 %v779, %v782
  %786 = vrot.lane.b32.xlu0 %v780, 64
  %v787 = vpop.permute.xlu0 %786
  %v789 = vmul.f32 %v779, %v787
  %791 = vrot.lane.b32.xlu0 %v789, 32
  %v792 = vpop.permute.xlu0 %791
  %v794 = vadd.f32 %v784, %v792
  %v795 = vtanh.pop %v794
  %797 = vrot.lane.b32.xlu0 %v795, 64
  %v798 = vpop.permute.xlu0 %797
  %v800 = vmul.f32 %v779, %v798
  %802 = vrot.lane.b32.xlu0 %v699, 32
  %v803 = vpop.permute.xlu0 %802
  %v804 = vsel %vm148, %v803, 0
  %806 = vmatprep.subr.mxu0 0.0
  %807 = vmatpush1.msra.mxu0 %v143
  %808 = vmatprep.subr.mxu0 0.0
  %809 = vmatpush1.msra.mxu0 %v144
  %810 = vmatprep.subr.mxu0 0.0
  %811 = vmatpush1.msra.mxu0 %v145
  %812 = vmatprep.subr.mxu0 0.0
  %813 = vmatpush1.msra.mxu0 %v146
  %814 = vmatprep.subr.mxu0 0.0
  %815 = vmatpush1.msra.mxu0 0.0
  %816 = vmatprep.subr.mxu0 0.0
  %817 = vmatpush1.msra.mxu0 0.0
  %818 = vmatprep.subr.mxu0 0.0
  %819 = vmatpush1.msra.mxu0 0.0
  %820 = vmatprep.subr.mxu0 0.0
  %821 = vmatpush1.msra.mxu0 0.0
  %822 = vmatprep.subr.mxu0 0.0
  %823 = vmatpush1.msra.mxu0 0.0
  %824 = vmatprep.subr.mxu0 0.0
  %825 = vmatpush1.msra.mxu0 0.0
  %826 = vmatprep.subr.mxu0 0.0
  %827 = vmatpush1.msra.mxu0 0.0
  %828 = vmatprep.subr.mxu0 0.0
  %829 = vmatpush1.msra.mxu0 0.0
  %830 = vmatprep.subr.mxu0 0.0
  %831 = vmatpush1.msra.mxu0 0.0
  %832 = vmatprep.subr.mxu0 0.0
  %833 = vmatpush1.msra.mxu0 0.0
  %834 = vmatprep.subr.mxu0 0.0
  %835 = vmatpush1.msra.mxu0 0.0
  %836 = vmatprep.subr.mxu0 0.0
  %837 = vmatpush1.msra.mxu0 0.0
  %838 = vmatprep.subr.mxu0 0.0
  %839 = vmatpush1.msra.mxu0 0.0
  %840 = vmatprep.subr.mxu0 0.0
  %841 = vmatpush1.msra.mxu0 0.0
  %842 = vmatprep.subr.mxu0 0.0
  %843 = vmatpush1.msra.mxu0 0.0
  %844 = vmatprep.subr.mxu0 0.0
  %845 = vmatpush1.msra.mxu0 0.0
  %846 = vmatprep.subr.mxu0 0.0
  %847 = vmatpush1.msra.mxu0 0.0
  %848 = vmatprep.subr.mxu0 0.0
  %849 = vmatpush1.msra.mxu0 0.0
  %850 = vmatprep.subr.mxu0 0.0
  %851 = vmatpush1.msra.mxu0 0.0
  %852 = vmatprep.subr.mxu0 0.0
  %853 = vmatpush1.msra.mxu0 0.0
  %854 = vmatprep.subr.mxu0 0.0
  %855 = vmatpush1.msra.mxu0 0.0
  %856 = vmatprep.subr.mxu0 0.0
  %857 = vmatpush1.msra.mxu0 0.0
  %858 = vmatprep.subr.mxu0 0.0
  %859 = vmatpush1.msra.mxu0 0.0
  %860 = vmatprep.subr.mxu0 0.0
  %861 = vmatpush1.msra.mxu0 0.0
  %862 = vmatprep.subr.mxu0 0.0
  %863 = vmatpush1.msra.mxu0 0.0
  %864 = vmatprep.subr.mxu0 0.0
  %865 = vmatpush1.msra.mxu0 0.0
  %866 = vmatprep.subr.mxu0 0.0
  %867 = vmatpush1.msra.mxu0 0.0
  %868 = vmatprep.subr.mxu0 0.0
  %869 = vmatpush1.msra.mxu0 0.0
  %870 = vmatprep.mubr.f32.mxu0 0.0
  %871 = vmatmul.mubr.f32.gmra.mrb[0].mxu0 %v804
  %v872 = vpop.f32.mrb[0].mxu0
  %v873 = vadd.f32 0.0, %v872
  %v874 = vpop.f32.mrb[0].mxu0
  %875 = vdwg.mxu0
  %v877 = vrot.slane %v800, 4
  %878 = vrot.lane.b32.xlu0 %v877, 32
  %v879 = vpop.permute.xlu0 %878
  %v880 = vsel %vm148, %v879, 0
  %882 = vmatprep.subr.mxu0 0.0
  %883 = vmatpush1.msra.mxu0 %v135
  %884 = vmatprep.subr.mxu0 0.0
  %885 = vmatpush1.msra.mxu0 %v136
  %886 = vmatprep.subr.mxu0 0.0
  %887 = vmatpush1.msra.mxu0 %v137
  %888 = vmatprep.subr.mxu0 0.0
  %889 = vmatpush1.msra.mxu0 %v138
  %890 = vmatprep.subr.mxu0 0.0
  %891 = vmatpush1.msra.mxu0 0.0
  %892 = vmatprep.subr.mxu0 0.0
  %893 = vmatpush1.msra.mxu0 0.0
  %894 = vmatprep.subr.mxu0 0.0
  %895 = vmatpush1.msra.mxu0 0.0
  %896 = vmatprep.subr.mxu0 0.0
  %897 = vmatpush1.msra.mxu0 0.0
  %898 = vmatprep.subr.mxu0 0.0
  %899 = vmatpush1.msra.mxu0 0.0
  %900 = vmatprep.subr.mxu0 0.0
  %901 = vmatpush1.msra.mxu0 0.0
  %902 = vmatprep.subr.mxu0 0.0
  %903 = vmatpush1.msra.mxu0 0.0
  %904 = vmatprep.subr.mxu0 0.0
  %905 = vmatpush1.msra.mxu0 0.0
  %906 = vmatprep.subr.mxu0 0.0
  %907 = vmatpush1.msra.mxu0 0.0
  %908 = vmatprep.subr.mxu0 0.0
  %909 = vmatpush1.msra.mxu0 0.0
  %910 = vmatprep.subr.mxu0 0.0
  %911 = vmatpush1.msra.mxu0 0.0
  %912 = vmatprep.subr.mxu0 0.0
  %913 = vmatpush1.msra.mxu0 0.0
  %914 = vmatprep.subr.mxu0 0.0
  %915 = vmatpush1.msra.mxu0 0.0
  %916 = vmatprep.subr.mxu0 0.0
  %917 = vmatpush1.msra.mxu0 0.0
  %918 = vmatprep.subr.mxu0 0.0
  %919 = vmatpush1.msra.mxu0 0.0
  %920 = vmatprep.subr.mxu0 0.0
  %921 = vmatpush1.msra.mxu0 0.0
  %922 = vmatprep.subr.mxu0 0.0
  %923 = vmatpush1.msra.mxu0 0.0
  %924 = vmatprep.subr.mxu0 0.0
  %925 = vmatpush1.msra.mxu0 0.0
  %926 = vmatprep.subr.mxu0 0.0
  %927 = vmatpush1.msra.mxu0 0.0
  %928 = vmatprep.subr.mxu0 0.0
  %929 = vmatpush1.msra.mxu0 0.0
  %930 = vmatprep.subr.mxu0 0.0
  %931 = vmatpush1.msra.mxu0 0.0
  %932 = vmatprep.subr.mxu0 0.0
  %933 = vmatpush1.msra.mxu0 0.0
  %934 = vmatprep.subr.mxu0 0.0
  %935 = vmatpush1.msra.mxu0 0.0
  %936 = vmatprep.subr.mxu0 0.0
  %937 = vmatpush1.msra.mxu0 0.0
  %938 = vmatprep.subr.mxu0 0.0
  %939 = vmatpush1.msra.mxu0 0.0
  %940 = vmatprep.subr.mxu0 0.0
  %941 = vmatpush1.msra.mxu0 0.0
  %942 = vmatprep.subr.mxu0 0.0
  %943 = vmatpush1.msra.mxu0 0.0
  %944 = vmatprep.subr.mxu0 0.0
  %945 = vmatpush1.msra.mxu0 0.0
  %946 = vmatprep.mubr.f32.mxu0 0.0
  %947 = vmatmul.mubr.f32.gmra.mrb[0].mxu0 %v880
  %v948 = vpop.f32.mrb[0].mxu0
  %v949 = vadd.f32 %v873, %v948
  %v950 = vpop.f32.mrb[0].mxu0
  %951 = vdwg.mxu0
  %v952 = vadd.f32 %v949, %v396
  %v953 = vxor.u32 %v952, 2147483648
  %v954 = vmul.f32 %v953, 1.442695
  %v955 = vpow.pop %v954
  %v956 = vadd.f32 %v955, 1.0
  %v957 = vrcp.pop %v956
  %v958 = vmul.f32 1.0, %v957
  %v959 = vtanh.pop %v952
  %v960 = vmul.f32 %v958, %v693
  %962 = vrot.lane.b32.xlu0 %v959, 64
  %v963 = vpop.permute.xlu0 %962
  %v965 = vmul.f32 %v958, %v963
  %967 = vrot.lane.b32.xlu0 %v965, 32
  %v968 = vpop.permute.xlu0 %967
  %v970 = vadd.f32 %v960, %v968
  %v971 = vtanh.pop %v970
  %973 = vrot.lane.b32.xlu0 %v971, 64
  %v974 = vpop.permute.xlu0 %973
  %v976 = vmul.f32 %v958, %v974
  %977 = vmatprep.subr.mxu0 0.0
  %978 = vmatpush1.msra.mxu0 %v139
  %979 = vmatprep.subr.mxu0 0.0
  %980 = vmatpush1.msra.mxu0 %v140
  %981 = vmatprep.subr.mxu0 0.0
  %982 = vmatpush1.msra.mxu0 %v141
  %983 = vmatprep.subr.mxu0 0.0
  %984 = vmatpush1.msra.mxu0 %v142
  %985 = vmatprep.subr.mxu0 0.0
  %986 = vmatpush1.msra.mxu0 0.0
  %987 = vmatprep.subr.mxu0 0.0
  %988 = vmatpush1.msra.mxu0 0.0
  %989 = vmatprep.subr.mxu0 0.0
  %990 = vmatpush1.msra.mxu0 0.0
  %991 = vmatprep.subr.mxu0 0.0
  %992 = vmatpush1.msra.mxu0 0.0
  %993 = vmatprep.subr.mxu0 0.0
  %994 = vmatpush1.msra.mxu0 0.0
  %995 = vmatprep.subr.mxu0 0.0
  %996 = vmatpush1.msra.mxu0 0.0
  %997 = vmatprep.subr.mxu0 0.0
  %998 = vmatpush1.msra.mxu0 0.0
  %999 = vmatprep.subr.mxu0 0.0
  %1000 = vmatpush1.msra.mxu0 0.0
  %1001 = vmatprep.subr.mxu0 0.0
  %1002 = vmatpush1.msra.mxu0 0.0
  %1003 = vmatprep.subr.mxu0 0.0
  %1004 = vmatpush1.msra.mxu0 0.0
  %1005 = vmatprep.subr.mxu0 0.0
  %1006 = vmatpush1.msra.mxu0 0.0
  %1007 = vmatprep.subr.mxu0 0.0
  %1008 = vmatpush1.msra.mxu0 0.0
  %1009 = vmatprep.subr.mxu0 0.0
  %1010 = vmatpush1.msra.mxu0 0.0
  %1011 = vmatprep.subr.mxu0 0.0
  %1012 = vmatpush1.msra.mxu0 0.0
  %1013 = vmatprep.subr.mxu0 0.0
  %1014 = vmatpush1.msra.mxu0 0.0
  %1015 = vmatprep.subr.mxu0 0.0
  %1016 = vmatpush1.msra.mxu0 0.0
  %1017 = vmatprep.subr.mxu0 0.0
  %1018 = vmatpush1.msra.mxu0 0.0
  %1019 = vmatprep.subr.mxu0 0.0
  %1020 = vmatpush1.msra.mxu0 0.0
  %1021 = vmatprep.subr.mxu0 0.0
  %1022 = vmatpush1.msra.mxu0 0.0
  %1023 = vmatprep.subr.mxu0 0.0
  %1024 = vmatpush1.msra.mxu0 0.0
  %1025 = vmatprep.subr.mxu0 0.0
  %1026 = vmatpush1.msra.mxu0 0.0
  %1027 = vmatprep.subr.mxu0 0.0
  %1028 = vmatpush1.msra.mxu0 0.0
  %1029 = vmatprep.subr.mxu0 0.0
  %1030 = vmatpush1.msra.mxu0 0.0
  %1031 = vmatprep.subr.mxu0 0.0
  %1032 = vmatpush1.msra.mxu0 0.0
  %1033 = vmatprep.subr.mxu0 0.0
  %1034 = vmatpush1.msra.mxu0 0.0
  %1035 = vmatprep.subr.mxu0 0.0
  %1036 = vmatpush1.msra.mxu0 0.0
  %1037 = vmatprep.subr.mxu0 0.0
  %1038 = vmatpush1.msra.mxu0 0.0
  %1039 = vmatprep.subr.mxu0 0.0
  %1040 = vmatpush1.msra.mxu0 0.0
  %1041 = vmatprep.mubr.f32.mxu0 0.0
  %1042 = vmatmul.mubr.f32.gmra.mrb[0].mxu0 %v880
  %v1043 = vpop.f32.mrb[0].mxu0
  %v1044 = vadd.f32 0.0, %v1043
  %v1045 = vpop.f32.mrb[0].mxu0
  %1046 = vdwg.mxu0
  %v1048 = vrot.slane %v1044, 2
  %v1050 = vadd.f32 %v132, %v1048
  %v1051 = vxor.u32 %v1050, 2147483648
  %v1052 = vmul.f32 %v1051, 1.442695
  %v1053 = vpow.pop %v1052
  %v1054 = vadd.f32 %v1053, 1.0
  %v1055 = vrcp.pop %v1054
  %v1056 = vmul.f32 1.0, %v1055
  %v1057 = vtanh.pop %v1050
  %v1059 = vrot.slane %v794, 6
  %v1061 = vmul.f32 %v1056, %v1059
  %1063 = vrot.lane.b32.xlu0 %v1057, 64
  %v1064 = vpop.permute.xlu0 %1063
  %v1066 = vmul.f32 %v1056, %v1064
  %1068 = vrot.lane.b32.xlu0 %v1066, 32
  %v1069 = vpop.permute.xlu0 %1068
  %v1071 = vadd.f32 %v1061, %v1069
  %v1072 = vtanh.pop %v1071
  %1074 = vrot.lane.b32.xlu0 %v1072, 64
  %v1075 = vpop.permute.xlu0 %1074
  %v1077 = vmul.f32 %v1056, %v1075
  %1079 = vrot.lane.b32.xlu0 %v976, 32
  %v1080 = vpop.permute.xlu0 %1079
  %v1081 = vsel %vm148, %v1080, 0
  %1083 = vmatprep.subr.mxu0 0.0
  %1084 = vmatpush1.msra.mxu0 %v143
  %1085 = vmatprep.subr.mxu0 0.0
  %1086 = vmatpush1.msra.mxu0 %v144
  %1087 = vmatprep.subr.mxu0 0.0
  %1088 = vmatpush1.msra.mxu0 %v145
  %1089 = vmatprep.subr.mxu0 0.0
  %1090 = vmatpush1.msra.mxu0 %v146
  %1091 = vmatprep.subr.mxu0 0.0
  %1092 = vmatpush1.msra.mxu0 0.0
  %1093 = vmatprep.subr.mxu0 0.0
  %1094 = vmatpush1.msra.mxu0 0.0
  %1095 = vmatprep.subr.mxu0 0.0
  %1096 = vmatpush1.msra.mxu0 0.0
  %1097 = vmatprep.subr.mxu0 0.0
  %1098 = vmatpush1.msra.mxu0 0.0
  %1099 = vmatprep.subr.mxu0 0.0
  %1100 = vmatpush1.msra.mxu0 0.0
  %1101 = vmatprep.subr.mxu0 0.0
  %1102 = vmatpush1.msra.mxu0 0.0
  %1103 = vmatprep.subr.mxu0 0.0
  %1104 = vmatpush1.msra.mxu0 0.0
  %1105 = vmatprep.subr.mxu0 0.0
  %1106 = vmatpush1.msra.mxu0 0.0
  %1107 = vmatprep.subr.mxu0 0.0
  %1108 = vmatpush1.msra.mxu0 0.0
  %1109 = vmatprep.subr.mxu0 0.0
  %1110 = vmatpush1.msra.mxu0 0.0
  %1111 = vmatprep.subr.mxu0 0.0
  %1112 = vmatpush1.msra.mxu0 0.0
  %1113 = vmatprep.subr.mxu0 0.0
  %1114 = vmatpush1.msra.mxu0 0.0
  %1115 = vmatprep.subr.mxu0 0.0
  %1116 = vmatpush1.msra.mxu0 0.0
  %1117 = vmatprep.subr.mxu0 0.0
  %1118 = vmatpush1.msra.mxu0 0.0
  %1119 = vmatprep.subr.mxu0 0.0
  %1120 = vmatpush1.msra.mxu0 0.0
  %1121 = vmatprep.subr.mxu0 0.0
  %1122 = vmatpush1.msra.mxu0 0.0
  %1123 = vmatprep.subr.mxu0 0.0
  %1124 = vmatpush1.msra.mxu0 0.0
  %1125 = vmatprep.subr.mxu0 0.0
  %1126 = vmatpush1.msra.mxu0 0.0
  %1127 = vmatprep.subr.mxu0 0.0
  %1128 = vmatpush1.msra.mxu0 0.0
  %1129 = vmatprep.subr.mxu0 0.0
  %1130 = vmatpush1.msra.mxu0 0.0
  %1131 = vmatprep.subr.mxu0 0.0
  %1132 = vmatpush1.msra.mxu0 0.0
  %1133 = vmatprep.subr.mxu0 0.0
  %1134 = vmatpush1.msra.mxu0 0.0
  %1135 = vmatprep.subr.mxu0 0.0
  %1136 = vmatpush1.msra.mxu0 0.0
  %1137 = vmatprep.subr.mxu0 0.0
  %1138 = vmatpush1.msra.mxu0 0.0
  %1139 = vmatprep.subr.mxu0 0.0
  %1140 = vmatpush1.msra.mxu0 0.0
  %1141 = vmatprep.subr.mxu0 0.0
  %1142 = vmatpush1.msra.mxu0 0.0
  %1143 = vmatprep.subr.mxu0 0.0
  %1144 = vmatpush1.msra.mxu0 0.0
  %1145 = vmatprep.subr.mxu0 0.0
  %1146 = vmatpush1.msra.mxu0 0.0
  %1147 = vmatprep.mubr.f32.mxu0 0.0
  %1148 = vmatmul.mubr.f32.gmra.mrb[0].mxu0 %v1081
  %v1149 = vpop.f32.mrb[0].mxu0
  %v1150 = vadd.f32 0.0, %v1149
  %v1151 = vpop.f32.mrb[0].mxu0
  %1152 = vdwg.mxu0
  %v1154 = vrot.slane %v1077, 6
  %1155 = vrot.lane.b32.xlu0 %v1154, 32
  %v1156 = vpop.permute.xlu0 %1155
  %v1157 = vsel %vm148, %v1156, 0
  %1159 = vmatprep.subr.mxu0 0.0
  %1160 = vmatpush1.msra.mxu0 %v135
  %1161 = vmatprep.subr.mxu0 0.0
  %1162 = vmatpush1.msra.mxu0 %v136
  %1163 = vmatprep.subr.mxu0 0.0
  %1164 = vmatpush1.msra.mxu0 %v137
  %1165 = vmatprep.subr.mxu0 0.0
  %1166 = vmatpush1.msra.mxu0 %v138
  %1167 = vmatprep.subr.mxu0 0.0
  %1168 = vmatpush1.msra.mxu0 0.0
  %1169 = vmatprep.subr.mxu0 0.0
  %1170 = vmatpush1.msra.mxu0 0.0
  %1171 = vmatprep.subr.mxu0 0.0
  %1172 = vmatpush1.msra.mxu0 0.0
  %1173 = vmatprep.subr.mxu0 0.0
  %1174 = vmatpush1.msra.mxu0 0.0
  %1175 = vmatprep.subr.mxu0 0.0
  %1176 = vmatpush1.msra.mxu0 0.0
  %1177 = vmatprep.subr.mxu0 0.0
  %1178 = vmatpush1.msra.mxu0 0.0
  %1179 = vmatprep.subr.mxu0 0.0
  %1180 = vmatpush1.msra.mxu0 0.0
  %1181 = vmatprep.subr.mxu0 0.0
  %1182 = vmatpush1.msra.mxu0 0.0
  %1183 = vmatprep.subr.mxu0 0.0
  %1184 = vmatpush1.msra.mxu0 0.0
  %1185 = vmatprep.subr.mxu0 0.0
  %1186 = vmatpush1.msra.mxu0 0.0
  %1187 = vmatprep.subr.mxu0 0.0
  %1188 = vmatpush1.msra.mxu0 0.0
  %1189 = vmatprep.subr.mxu0 0.0
  %1190 = vmatpush1.msra.mxu0 0.0
  %1191 = vmatprep.subr.mxu0 0.0
  %1192 = vmatpush1.msra.mxu0 0.0
  %1193 = vmatprep.subr.mxu0 0.0
  %1194 = vmatpush1.msra.mxu0 0.0
  %1195 = vmatprep.subr.mxu0 0.0
  %1196 = vmatpush1.msra.mxu0 0.0
  %1197 = vmatprep.subr.mxu0 0.0
  %1198 = vmatpush1.msra.mxu0 0.0
  %1199 = vmatprep.subr.mxu0 0.0
  %1200 = vmatpush1.msra.mxu0 0.0
  %1201 = vmatprep.subr.mxu0 0.0
  %1202 = vmatpush1.msra.mxu0 0.0
  %1203 = vmatprep.subr.mxu0 0.0
  %1204 = vmatpush1.msra.mxu0 0.0
  %1205 = vmatprep.subr.mxu0 0.0
  %1206 = vmatpush1.msra.mxu0 0.0
  %1207 = vmatprep.subr.mxu0 0.0
  %1208 = vmatpush1.msra.mxu0 0.0
  %1209 = vmatprep.subr.mxu0 0.0
  %1210 = vmatpush1.msra.mxu0 0.0
  %1211 = vmatprep.subr.mxu0 0.0
  %1212 = vmatpush1.msra.mxu0 0.0
  %1213 = vmatprep.subr.mxu0 0.0
  %1214 = vmatpush1.msra.mxu0 0.0
  %1215 = vmatprep.subr.mxu0 0.0
  %1216 = vmatpush1.msra.mxu0 0.0
  %1217 = vmatprep.subr.mxu0 0.0
  %1218 = vmatpush1.msra.mxu0 0.0
  %1219 = vmatprep.subr.mxu0 0.0
  %1220 = vmatpush1.msra.mxu0 0.0
  %1221 = vmatprep.subr.mxu0 0.0
  %1222 = vmatpush1.msra.mxu0 0.0
  %1223 = vmatprep.mubr.f32.mxu0 0.0
  %1224 = vmatmul.mubr.f32.gmra.mrb[0].mxu0 %v1157
  %v1225 = vpop.f32.mrb[0].mxu0
  %v1226 = vadd.f32 %v1150, %v1225
  %v1227 = vpop.f32.mrb[0].mxu0
  %1228 = vdwg.mxu0
  %v1229 = vadd.f32 %v1226, %v396
  %v1230 = vxor.u32 %v1229, 2147483648
  %v1231 = vmul.f32 %v1230, 1.442695
  %v1232 = vpow.pop %v1231
  %v1233 = vadd.f32 %v1232, 1.0
  %v1234 = vrcp.pop %v1233
  %v1235 = vmul.f32 1.0, %v1234
  %v1236 = vtanh.pop %v1229
  %v1237 = vmul.f32 %v1235, %v970
  %1239 = vrot.lane.b32.xlu0 %v1236, 64
  %v1240 = vpop.permute.xlu0 %1239
  %v1242 = vmul.f32 %v1235, %v1240
  %1244 = vrot.lane.b32.xlu0 %v1242, 32
  %v1245 = vpop.permute.xlu0 %1244
  %v1247 = vadd.f32 %v1237, %v1245
  %v1248 = vtanh.pop %v1247
  %1250 = vrot.lane.b32.xlu0 %v1248, 64
  %v1251 = vpop.permute.xlu0 %1250
  %v1253 = vmul.f32 %v1235, %v1251
  %v1254 = vld [vmem:[%s7] sm:$0xff]
  %v1255 = vld [vmem:[%s8] sm:$0xff]
  %v1256 = vld [vmem:[%s8 + $0x8] sm:$0xff]
  %v1257 = vld [vmem:[%s8 + $0x10] sm:$0xff]
  %v1258 = vld [vmem:[%s8 + $0x18] sm:$0xff]
  %v1259 = vld [vmem:[%s8 + $0x20] sm:$0xff]
  %v1260 = vld [vmem:[%s8 + $0x28] sm:$0xff]
  %v1261 = vld [vmem:[%s8 + $0x30] sm:$0xff]
  %v1262 = vld [vmem:[%s8 + $0x38] sm:$0xff]
  %v1263 = vld [vmem:[%s8 + $0x40] sm:$0xff]
  %v1264 = vld [vmem:[%s8 + $0x48] sm:$0xff]
  %v1265 = vld [vmem:[%s8 + $0x50] sm:$0xff]
  %v1266 = vld [vmem:[%s8 + $0x58] sm:$0xff]
  %v1267 = vld [vmem:[%s8 + $0x60] sm:$0xff]
  %v1268 = vld [vmem:[%s8 + $0x68] sm:$0xff]
  %v1269 = vld [vmem:[%s8 + $0x70] sm:$0xff]
  %v1270 = vld [vmem:[%s8 + $0x78] sm:$0xff]
  %v1271 = vld [vmem:[%s8 + $0x80] sm:$0xff]
  %v1272 = vld [vmem:[%s8 + $0x88] sm:$0xff]
  %v1273 = vld [vmem:[%s8 + $0x90] sm:$0xff]
  %v1274 = vld [vmem:[%s8 + $0x98] sm:$0xff]
  %v1275 = vld [vmem:[%s8 + $0xa0] sm:$0xff]
  %v1276 = vld [vmem:[%s8 + $0xa8] sm:$0xff]
  %v1277 = vld [vmem:[%s8 + $0xb0] sm:$0xff]
  %v1278 = vld [vmem:[%s8 + $0xb8] sm:$0xff]
  %v1279 = vld [vmem:[%s8 + $0xc0] sm:$0xff]
  %v1280 = vld [vmem:[%s8 + $0xc8] sm:$0xff]
  %v1281 = vld [vmem:[%s8 + $0xd0] sm:$0xff]
  %v1282 = vld [vmem:[%s8 + $0xd8] sm:$0xff]
  %v1283 = vld [vmem:[%s8 + $0xe0] sm:$0xff]
  %v1284 = vld [vmem:[%s8 + $0xe8] sm:$0xff]
  %v1285 = vld [vmem:[%s8 + $0xf0] sm:$0xff]
  %v1286 = vld [vmem:[%s8 + $0xf8] sm:$0xff]
  %v1287 = vld [vmem:[%s8 + $0x100] sm:$0xff]
  %v1288 = vld [vmem:[%s8 + $0x108] sm:$0xff]
  %v1289 = vld [vmem:[%s8 + $0x110] sm:$0xff]
  %v1290 = vld [vmem:[%s8 + $0x118] sm:$0xff]
  %v1291 = vld [vmem:[%s8 + $0x120] sm:$0xff]
  %v1292 = vld [vmem:[%s8 + $0x128] sm:$0xff]
  %v1293 = vld [vmem:[%s8 + $0x130] sm:$0xff]
  %v1294 = vld [vmem:[%s8 + $0x138] sm:$0xff]
  %v1295 = vld [vmem:[%s8 + $0x140] sm:$0xff]
  %v1296 = vld [vmem:[%s8 + $0x148] sm:$0xff]
  %v1297 = vld [vmem:[%s8 + $0x150] sm:$0xff]
  %v1298 = vld [vmem:[%s8 + $0x158] sm:$0xff]
  %v1299 = vld [vmem:[%s8 + $0x160] sm:$0xff]
  %v1300 = vld [vmem:[%s8 + $0x168] sm:$0xff]
  %v1301 = vld [vmem:[%s8 + $0x170] sm:$0xff]
  %v1302 = vld [vmem:[%s8 + $0x178] sm:$0xff]
  %v1303 = vld [vmem:[%s8 + $0x180] sm:$0xff]
  %v1304 = vld [vmem:[%s8 + $0x188] sm:$0xff]
  %v1305 = vld [vmem:[%s8 + $0x190] sm:$0xff]
  %v1306 = vld [vmem:[%s8 + $0x198] sm:$0xff]
  %v1307 = vld [vmem:[%s8 + $0x1a0] sm:$0xff]
  %v1308 = vld [vmem:[%s8 + $0x1a8] sm:$0xff]
  %v1309 = vld [vmem:[%s8 + $0x1b0] sm:$0xff]
  %v1310 = vld [vmem:[%s8 + $0x1b8] sm:$0xff]
  %v1311 = vld [vmem:[%s8 + $0x1c0] sm:$0xff]
  %v1312 = vld [vmem:[%s8 + $0x1c8] sm:$0xff]
  %v1313 = vld [vmem:[%s8 + $0x1d0] sm:$0xff]
  %v1314 = vld [vmem:[%s8 + $0x1d8] sm:$0xff]
  %v1315 = vld [vmem:[%s8 + $0x1e0] sm:$0xff]
  %v1316 = vld [vmem:[%s8 + $0x1e8] sm:$0xff]
  %v1317 = vld [vmem:[%s8 + $0x1f0] sm:$0xff]
  %v1318 = vld [vmem:[%s8 + $0x1f8] sm:$0xff]
  %v1319 = vld [vmem:[%s9] sm:$0x1]
  %v1321 = vlaneseq
  %v1322 = vshrl.u32 %v1321, 7
  %v1323 = vsub.s32 0, %v1322
  %v1324 = vrot.slane %v1319, %v1323
  %v1327 = vcombine.high %v1254, %v1254
  %v1329 = vunpack.c.l.s4 1983009808
  %v1330 = vunpack.c.0.s8 %v1329
  %v1331 = vlaneseq
  %v1332 = vshrl.u32 %v1331, 7
  %v1333 = vsub.s32 %v1330, %v1332
  %v1334 = vrot.slane %v1254, %v1333
  %v1336 = vunpack.c.l.s4 1983009808
  %v1337 = vunpack.c.0.s8 %v1336
  %v1338 = vlaneseq
  %v1339 = vshrl.u32 %v1338, 7
  %v1340 = vsub.s32 %v1337, %v1339
  %v1341 = vrot.slane %v1327, %v1340
  %v1342 = vcombine.high %v1334, %v1334
  %v1343 = vcombine.high %v1341, %v1341
  %1348 = vmatprep.subr.mxu0 0.0
  %1349 = vmatpush1.msra.mxu0 %v1255
  %1350 = vmatprep.subr.mxu0 0.0
  %1351 = vmatpush1.msra.mxu0 %v1256
  %1352 = vmatprep.subr.mxu0 0.0
  %1353 = vmatpush1.msra.mxu0 %v1257
  %1354 = vmatprep.subr.mxu0 0.0
  %1355 = vmatpush1.msra.mxu0 %v1258
  %1356 = vmatprep.subr.mxu0 0.0
  %1357 = vmatpush1.msra.mxu0 %v1259
  %1358 = vmatprep.subr.mxu0 0.0
  %1359 = vmatpush1.msra.mxu0 %v1260
  %1360 = vmatprep.subr.mxu0 0.0
  %1361 = vmatpush1.msra.mxu0 %v1261
  %1362 = vmatprep.subr.mxu0 0.0
  %1363 = vmatpush1.msra.mxu0 %v1262
  %1364 = vmatprep.subr.mxu0 0.0
  %1365 = vmatpush1.msra.mxu0 %v1263
  %1366 = vmatprep.subr.mxu0 0.0
  %1367 = vmatpush1.msra.mxu0 %v1264
  %1368 = vmatprep.subr.mxu0 0.0
  %1369 = vmatpush1.msra.mxu0 %v1265
  %1370 = vmatprep.subr.mxu0 0.0
  %1371 = vmatpush1.msra.mxu0 %v1266
  %1372 = vmatprep.subr.mxu0 0.0
  %1373 = vmatpush1.msra.mxu0 %v1267
  %1374 = vmatprep.subr.mxu0 0.0
  %1375 = vmatpush1.msra.mxu0 %v1268
  %1376 = vmatprep.subr.mxu0 0.0
  %1377 = vmatpush1.msra.mxu0 %v1269
  %1378 = vmatprep.subr.mxu0 0.0
  %1379 = vmatpush1.msra.mxu0 %v1270
  %1380 = vmatprep.subr.mxu0 0.0
  %1381 = vmatpush1.msra.mxu0 %v1271
  %1382 = vmatprep.subr.mxu0 0.0
  %1383 = vmatpush1.msra.mxu0 %v1272
  %1384 = vmatprep.subr.mxu0 0.0
  %1385 = vmatpush1.msra.mxu0 %v1273
  %1386 = vmatprep.subr.mxu0 0.0
  %1387 = vmatpush1.msra.mxu0 %v1274
  %1388 = vmatprep.subr.mxu0 0.0
  %1389 = vmatpush1.msra.mxu0 %v1275
  %1390 = vmatprep.subr.mxu0 0.0
  %1391 = vmatpush1.msra.mxu0 %v1276
  %1392 = vmatprep.subr.mxu0 0.0
  %1393 = vmatpush1.msra.mxu0 %v1277
  %1394 = vmatprep.subr.mxu0 0.0
  %1395 = vmatpush1.msra.mxu0 %v1278
  %1396 = vmatprep.subr.mxu0 0.0
  %1397 = vmatpush1.msra.mxu0 %v1279
  %1398 = vmatprep.subr.mxu0 0.0
  %1399 = vmatpush1.msra.mxu0 %v1280
  %1400 = vmatprep.subr.mxu0 0.0
  %1401 = vmatpush1.msra.mxu0 %v1281
  %1402 = vmatprep.subr.mxu0 0.0
  %1403 = vmatpush1.msra.mxu0 %v1282
  %1404 = vmatprep.subr.mxu0 0.0
  %1405 = vmatpush1.msra.mxu0 %v1283
  %1406 = vmatprep.subr.mxu0 0.0
  %1407 = vmatpush1.msra.mxu0 %v1284
  %1408 = vmatprep.subr.mxu0 0.0
  %1409 = vmatpush1.msra.mxu0 %v1285
  %1410 = vmatprep.subr.mxu0 0.0
  %1411 = vmatpush1.msra.mxu0 %v1286
  %1412 = vmatprep.mubr.f32.mxu0 %v1342
  %1413 = vmatmul.mubr.f32.gmra.mrb[0].mxu0 %v1334
  %v1414 = vpop.f32.mrb[0].mxu0
  %v1415 = vadd.f32 %v1324, %v1414
  %v1416 = vpop.f32.mrb[0].mxu0
  %1417 = vdwg.mxu0
  %1418 = vmatprep.subr.mxu0 0.0
  %1419 = vmatpush1.msra.mxu0 %v1287
  %1420 = vmatprep.subr.mxu0 0.0
  %1421 = vmatpush1.msra.mxu0 %v1288
  %1422 = vmatprep.subr.mxu0 0.0
  %1423 = vmatpush1.msra.mxu0 %v1289
  %1424 = vmatprep.subr.mxu0 0.0
  %1425 = vmatpush1.msra.mxu0 %v1290
  %1426 = vmatprep.subr.mxu0 0.0
  %1427 = vmatpush1.msra.mxu0 %v1291
  %1428 = vmatprep.subr.mxu0 0.0
  %1429 = vmatpush1.msra.mxu0 %v1292
  %1430 = vmatprep.subr.mxu0 0.0
  %1431 = vmatpush1.msra.mxu0 %v1293
  %1432 = vmatprep.subr.mxu0 0.0
  %1433 = vmatpush1.msra.mxu0 %v1294
  %1434 = vmatprep.subr.mxu0 0.0
  %1435 = vmatpush1.msra.mxu0 %v1295
  %1436 = vmatprep.subr.mxu0 0.0
  %1437 = vmatpush1.msra.mxu0 %v1296
  %1438 = vmatprep.subr.mxu0 0.0
  %1439 = vmatpush1.msra.mxu0 %v1297
  %1440 = vmatprep.subr.mxu0 0.0
  %1441 = vmatpush1.msra.mxu0 %v1298
  %1442 = vmatprep.subr.mxu0 0.0
  %1443 = vmatpush1.msra.mxu0 %v1299
  %1444 = vmatprep.subr.mxu0 0.0
  %1445 = vmatpush1.msra.mxu0 %v1300
  %1446 = vmatprep.subr.mxu0 0.0
  %1447 = vmatpush1.msra.mxu0 %v1301
  %1448 = vmatprep.subr.mxu0 0.0
  %1449 = vmatpush1.msra.mxu0 %v1302
  %1450 = vmatprep.subr.mxu0 0.0
  %1451 = vmatpush1.msra.mxu0 %v1303
  %1452 = vmatprep.subr.mxu0 0.0
  %1453 = vmatpush1.msra.mxu0 %v1304
  %1454 = vmatprep.subr.mxu0 0.0
  %1455 = vmatpush1.msra.mxu0 %v1305
  %1456 = vmatprep.subr.mxu0 0.0
  %1457 = vmatpush1.msra.mxu0 %v1306
  %1458 = vmatprep.subr.mxu0 0.0
  %1459 = vmatpush1.msra.mxu0 %v1307
  %1460 = vmatprep.subr.mxu0 0.0
  %1461 = vmatpush1.msra.mxu0 %v1308
  %1462 = vmatprep.subr.mxu0 0.0
  %1463 = vmatpush1.msra.mxu0 %v1309
  %1464 = vmatprep.subr.mxu0 0.0
  %1465 = vmatpush1.msra.mxu0 %v1310
  %1466 = vmatprep.subr.mxu0 0.0
  %1467 = vmatpush1.msra.mxu0 %v1311
  %1468 = vmatprep.subr.mxu0 0.0
  %1469 = vmatpush1.msra.mxu0 %v1312
  %1470 = vmatprep.subr.mxu0 0.0
  %1471 = vmatpush1.msra.mxu0 %v1313
  %1472 = vmatprep.subr.mxu0 0.0
  %1473 = vmatpush1.msra.mxu0 %v1314
  %1474 = vmatprep.subr.mxu0 0.0
  %1475 = vmatpush1.msra.mxu0 %v1315
  %1476 = vmatprep.subr.mxu0 0.0
  %1477 = vmatpush1.msra.mxu0 %v1316
  %1478 = vmatprep.subr.mxu0 0.0
  %1479 = vmatpush1.msra.mxu0 %v1317
  %1480 = vmatprep.subr.mxu0 0.0
  %1481 = vmatpush1.msra.mxu0 %v1318
  %1482 = vmatprep.mubr.f32.mxu0 %v1343
  %1483 = vmatmul.mubr.f32.gmra.mrb[0].mxu0 %v1341
  %v1484 = vpop.f32.mrb[0].mxu0
  %v1485 = vadd.f32 %v1415, %v1484
  %v1486 = vpop.f32.mrb[0].mxu0
  %1487 = vdwg.mxu0
  %v1488 = vld [vmem:[%s10] sm:$0xff]
  %v1489 = vld [vmem:[%s10 + $0x8] sm:$0xff]
  %v1490 = vld [vmem:[%s10 + $0x10] sm:$0xff]
  %v1491 = vld [vmem:[%s10 + $0x18] sm:$0xff]
  %v1492 = vld [vmem:[%s11] sm:$0xff]
  %v1493 = vld [vmem:[%s11 + $0x8] sm:$0xff]
  %v1494 = vld [vmem:[%s11 + $0x10] sm:$0xff]
  %v1495 = vld [vmem:[%s11 + $0x18] sm:$0xff]
  %1497 = vrot.lane.b32.xlu0 %v1253, 32
  %v1498 = vpop.permute.xlu0 %1497
  %v1499 = vsel %vm148, %v1498, 0
  %1501 = vmatprep.subr.mxu0 0.0
  %1502 = vmatpush1.msra.mxu0 %v1492
  %1503 = vmatprep.subr.mxu0 0.0
  %1504 = vmatpush1.msra.mxu0 %v1493
  %1505 = vmatprep.subr.mxu0 0.0
  %1506 = vmatpush1.msra.mxu0 %v1494
  %1507 = vmatprep.subr.mxu0 0.0
  %1508 = vmatpush1.msra.mxu0 %v1495
  %1509 = vmatprep.subr.mxu0 0.0
  %1510 = vmatpush1.msra.mxu0 0.0
  %1511 = vmatprep.subr.mxu0 0.0
  %1512 = vmatpush1.msra.mxu0 0.0
  %1513 = vmatprep.subr.mxu0 0.0
  %1514 = vmatpush1.msra.mxu0 0.0
  %1515 = vmatprep.subr.mxu0 0.0
  %1516 = vmatpush1.msra.mxu0 0.0
  %1517 = vmatprep.subr.mxu0 0.0
  %1518 = vmatpush1.msra.mxu0 0.0
  %1519 = vmatprep.subr.mxu0 0.0
  %1520 = vmatpush1.msra.mxu0 0.0
  %1521 = vmatprep.subr.mxu0 0.0
  %1522 = vmatpush1.msra.mxu0 0.0
  %1523 = vmatprep.subr.mxu0 0.0
  %1524 = vmatpush1.msra.mxu0 0.0
  %1525 = vmatprep.subr.mxu0 0.0
  %1526 = vmatpush1.msra.mxu0 0.0
  %1527 = vmatprep.subr.mxu0 0.0
  %1528 = vmatpush1.msra.mxu0 0.0
  %1529 = vmatprep.subr.mxu0 0.0
  %1530 = vmatpush1.msra.mxu0 0.0
  %1531 = vmatprep.subr.mxu0 0.0
  %1532 = vmatpush1.msra.mxu0 0.0
  %1533 = vmatprep.subr.mxu0 0.0
  %1534 = vmatpush1.msra.mxu0 0.0
  %1535 = vmatprep.subr.mxu0 0.0
  %1536 = vmatpush1.msra.mxu0 0.0
  %1537 = vmatprep.subr.mxu0 0.0
  %1538 = vmatpush1.msra.mxu0 0.0
  %1539 = vmatprep.subr.mxu0 0.0
  %1540 = vmatpush1.msra.mxu0 0.0
  %1541 = vmatprep.subr.mxu0 0.0
  %1542 = vmatpush1.msra.mxu0 0.0
  %1543 = vmatprep.subr.mxu0 0.0
  %1544 = vmatpush1.msra.mxu0 0.0
  %1545 = vmatprep.subr.mxu0 0.0
  %1546 = vmatpush1.msra.mxu0 0.0
  %1547 = vmatprep.subr.mxu0 0.0
  %1548 = vmatpush1.msra.mxu0 0.0
  %1549 = vmatprep.subr.mxu0 0.0
  %1550 = vmatpush1.msra.mxu0 0.0
  %1551 = vmatprep.subr.mxu0 0.0
  %1552 = vmatpush1.msra.mxu0 0.0
  %1553 = vmatprep.subr.mxu0 0.0
  %1554 = vmatpush1.msra.mxu0 0.0
  %1555 = vmatprep.subr.mxu0 0.0
  %1556 = vmatpush1.msra.mxu0 0.0
  %1557 = vmatprep.subr.mxu0 0.0
  %1558 = vmatpush1.msra.mxu0 0.0
  %1559 = vmatprep.subr.mxu0 0.0
  %1560 = vmatpush1.msra.mxu0 0.0
  %1561 = vmatprep.subr.mxu0 0.0
  %1562 = vmatpush1.msra.mxu0 0.0
  %1563 = vmatprep.subr.mxu0 0.0
  %1564 = vmatpush1.msra.mxu0 0.0
  %1565 = vmatprep.mubr.f32.mxu0 0.0
  %1566 = vmatmul.mubr.f32.gmra.mrb[0].mxu0 %v1499
  %v1567 = vpop.f32.mrb[0].mxu0
  %v1568 = vadd.f32 0.0, %v1567
  %v1569 = vpop.f32.mrb[0].mxu0
  %1570 = vdwg.mxu0
  %v1572 = vsel %vm148, %v1485, 0
  %1574 = vmatprep.subr.mxu0 0.0
  %1575 = vmatpush1.msra.mxu0 %v1488
  %1576 = vmatprep.subr.mxu0 0.0
  %1577 = vmatpush1.msra.mxu0 %v1489
  %1578 = vmatprep.subr.mxu0 0.0
  %1579 = vmatpush1.msra.mxu0 %v1490
  %1580 = vmatprep.subr.mxu0 0.0
  %1581 = vmatpush1.msra.mxu0 %v1491
  %1582 = vmatprep.subr.mxu0 0.0
  %1583 = vmatpush1.msra.mxu0 0.0
  %1584 = vmatprep.subr.mxu0 0.0
  %1585 = vmatpush1.msra.mxu0 0.0
  %1586 = vmatprep.subr.mxu0 0.0
  %1587 = vmatpush1.msra.mxu0 0.0
  %1588 = vmatprep.subr.mxu0 0.0
  %1589 = vmatpush1.msra.mxu0 0.0
  %1590 = vmatprep.subr.mxu0 0.0
  %1591 = vmatpush1.msra.mxu0 0.0
  %1592 = vmatprep.subr.mxu0 0.0
  %1593 = vmatpush1.msra.mxu0 0.0
  %1594 = vmatprep.subr.mxu0 0.0
  %1595 = vmatpush1.msra.mxu0 0.0
  %1596 = vmatprep.subr.mxu0 0.0
  %1597 = vmatpush1.msra.mxu0 0.0
  %1598 = vmatprep.subr.mxu0 0.0
  %1599 = vmatpush1.msra.mxu0 0.0
  %1600 = vmatprep.subr.mxu0 0.0
  %1601 = vmatpush1.msra.mxu0 0.0
  %1602 = vmatprep.subr.mxu0 0.0
  %1603 = vmatpush1.msra.mxu0 0.0
  %1604 = vmatprep.subr.mxu0 0.0
  %1605 = vmatpush1.msra.mxu0 0.0
  %1606 = vmatprep.subr.mxu0 0.0
  %1607 = vmatpush1.msra.mxu0 0.0
  %1608 = vmatprep.subr.mxu0 0.0
  %1609 = vmatpush1.msra.mxu0 0.0
  %1610 = vmatprep.subr.mxu0 0.0
  %1611 = vmatpush1.msra.mxu0 0.0
  %1612 = vmatprep.subr.mxu0 0.0
  %1613 = vmatpush1.msra.mxu0 0.0
  %1614 = vmatprep.subr.mxu0 0.0
  %1615 = vmatpush1.msra.mxu0 0.0
  %1616 = vmatprep.subr.mxu0 0.0
  %1617 = vmatpush1.msra.mxu0 0.0
  %1618 = vmatprep.subr.mxu0 0.0
  %1619 = vmatpush1.msra.mxu0 0.0
  %1620 = vmatprep.subr.mxu0 0.0
  %1621 = vmatpush1.msra.mxu0 0.0
  %1622 = vmatprep.subr.mxu0 0.0
  %1623 = vmatpush1.msra.mxu0 0.0
  %1624 = vmatprep.subr.mxu0 0.0
  %1625 = vmatpush1.msra.mxu0 0.0
  %1626 = vmatprep.subr.mxu0 0.0
  %1627 = vmatpush1.msra.mxu0 0.0
  %1628 = vmatprep.subr.mxu0 0.0
  %1629 = vmatpush1.msra.mxu0 0.0
  %1630 = vmatprep.subr.mxu0 0.0
  %1631 = vmatpush1.msra.mxu0 0.0
  %1632 = vmatprep.subr.mxu0 0.0
  %1633 = vmatpush1.msra.mxu0 0.0
  %1634 = vmatprep.subr.mxu0 0.0
  %1635 = vmatpush1.msra.mxu0 0.0
  %1636 = vmatprep.subr.mxu0 0.0
  %1637 = vmatpush1.msra.mxu0 0.0
  %1638 = vmatprep.mubr.f32.mxu0 0.0
  %1639 = vmatmul.mubr.f32.gmra.mrb[0].mxu0 %v1572
  %v1640 = vpop.f32.mrb[0].mxu0
  %v1641 = vadd.f32 %v1568, %v1640
  %v1642 = vpop.f32.mrb[0].mxu0
  %1643 = vdwg.mxu0
  %v1644 = vld [vmem:[%s12] sm:$0x1]
  %v1646 = vlaneseq
  %v1647 = vshrl.u32 %v1646, 7
  %v1648 = vsub.s32 0, %v1647
  %v1649 = vrot.slane %v1644, %v1648
  %v1651 = vadd.f32 %v1641, %v1649
  %v1652 = vmax.f32 %v1651, 0.0
  %v1653 = vld [vmem:[%s13] sm:$0xff]
  %v1654 = vld [vmem:[%s13 + $0x8] sm:$0xff]
  %v1655 = vld [vmem:[%s13 + $0x10] sm:$0xff]
  %v1656 = vld [vmem:[%s13 + $0x18] sm:$0xff]
  %v1657 = vld [vmem:[#allocation2] sm:$0x1]
  %v1659 = vlaneseq
  %v1660 = vshrl.u32 %v1659, 7
  %v1661 = vsub.s32 0, %v1660
  %v1662 = vrot.slane %v1657, %v1661
  %v1665 = vsel %vm148, %v1652, 0
  %1667 = vmatprep.subr.mxu0 0.0
  %1668 = vmatpush1.msra.mxu0 %v1653
  %1669 = vmatprep.subr.mxu0 0.0
  %1670 = vmatpush1.msra.mxu0 %v1654
  %1671 = vmatprep.subr.mxu0 0.0
  %1672 = vmatpush1.msra.mxu0 %v1655
  %1673 = vmatprep.subr.mxu0 0.0
  %1674 = vmatpush1.msra.mxu0 %v1656
  %1675 = vmatprep.subr.mxu0 0.0
  %1676 = vmatpush1.msra.mxu0 0.0
  %1677 = vmatprep.subr.mxu0 0.0
  %1678 = vmatpush1.msra.mxu0 0.0
  %1679 = vmatprep.subr.mxu0 0.0
  %1680 = vmatpush1.msra.mxu0 0.0
  %1681 = vmatprep.subr.mxu0 0.0
  %1682 = vmatpush1.msra.mxu0 0.0
  %1683 = vmatprep.subr.mxu0 0.0
  %1684 = vmatpush1.msra.mxu0 0.0
  %1685 = vmatprep.subr.mxu0 0.0
  %1686 = vmatpush1.msra.mxu0 0.0
  %1687 = vmatprep.subr.mxu0 0.0
  %1688 = vmatpush1.msra.mxu0 0.0
  %1689 = vmatprep.subr.mxu0 0.0
  %1690 = vmatpush1.msra.mxu0 0.0
  %1691 = vmatprep.subr.mxu0 0.0
  %1692 = vmatpush1.msra.mxu0 0.0
  %1693 = vmatprep.subr.mxu0 0.0
  %1694 = vmatpush1.msra.mxu0 0.0
  %1695 = vmatprep.subr.mxu0 0.0
  %1696 = vmatpush1.msra.mxu0 0.0
  %1697 = vmatprep.subr.mxu0 0.0
  %1698 = vmatpush1.msra.mxu0 0.0
  %1699 = vmatprep.subr.mxu0 0.0
  %1700 = vmatpush1.msra.mxu0 0.0
  %1701 = vmatprep.subr.mxu0 0.0
  %1702 = vmatpush1.msra.mxu0 0.0
  %1703 = vmatprep.subr.mxu0 0.0
  %1704 = vmatpush1.msra.mxu0 0.0
  %1705 = vmatprep.subr.mxu0 0.0
  %1706 = vmatpush1.msra.mxu0 0.0
  %1707 = vmatprep.subr.mxu0 0.0
  %1708 = vmatpush1.msra.mxu0 0.0
  %1709 = vmatprep.subr.mxu0 0.0
  %1710 = vmatpush1.msra.mxu0 0.0
  %1711 = vmatprep.subr.mxu0 0.0
  %1712 = vmatpush1.msra.mxu0 0.0
  %1713 = vmatprep.subr.mxu0 0.0
  %1714 = vmatpush1.msra.mxu0 0.0
  %1715 = vmatprep.subr.mxu0 0.0
  %1716 = vmatpush1.msra.mxu0 0.0
  %1717 = vmatprep.subr.mxu0 0.0
  %1718 = vmatpush1.msra.mxu0 0.0
  %1719 = vmatprep.subr.mxu0 0.0
  %1720 = vmatpush1.msra.mxu0 0.0
  %1721 = vmatprep.subr.mxu0 0.0
  %1722 = vmatpush1.msra.mxu0 0.0
  %1723 = vmatprep.subr.mxu0 0.0
  %1724 = vmatpush1.msra.mxu0 0.0
  %1725 = vmatprep.subr.mxu0 0.0
  %1726 = vmatpush1.msra.mxu0 0.0
  %1727 = vmatprep.subr.mxu0 0.0
  %1728 = vmatpush1.msra.mxu0 0.0
  %1729 = vmatprep.subr.mxu0 0.0
  %1730 = vmatpush1.msra.mxu0 0.0
  %1731 = vmatprep.mubr.f32.mxu0 0.0
  %1732 = vmatmul.mubr.f32.gmra.mrb[0].mxu0 %v1665
  %v1733 = vpop.f32.mrb[0].mxu0
  %v1734 = vadd.f32 %v1662, %v1733
  %v1735 = vpop.f32.mrb[0].mxu0
  %1736 = vdwg.mxu0
  %vm1737 = vcmask 1024
  %1738 = vst.msk [vmem:[%s15] sm:$0x3] %vm1737, %v1734
  // Predicated region
  $region62: #{cnnlstm_v3_forward.5} parent=0 // pred_check
    _
  $region63: #{cnnlstm_v3_forward.5} parent=0 // pred_check_branch
    %1740 = sbr.rel (0) target = $region65
  $region64: #{cnnlstm_v3_forward.5} parent=0 // pred_region
    _
  $region65: #{cnnlstm_v3_forward.5} parent=0 // pred_fallthru
    _
  // Predicated region
  $region66: #{cnnlstm_v3_forward.5} parent=0 // pred_check
    _
  $region67: #{cnnlstm_v3_forward.5} parent=0 // pred_check_branch
    %1742 = sbr.rel (0) target = $region69
  $region68: #{cnnlstm_v3_forward.5} parent=0 // pred_region
    _
  $region69: #{cnnlstm_v3_forward.5} parent=0 // pred_fallthru
    _

</llo_original>
